<compile_context>
chip_gen: v7x
topology: tpu7x:2x2x1
jax: 0.10.0
libtpu: 0.0.40
codegen_flags: <defaults>
</compile_context>

<pallas_src>
import jax
import jax.numpy as jnp
from jax.experimental import pallas as pl
from jax.experimental.pallas import tpu as pltpu

TB_SMALL_MAX = 256   # default batch-tile cap
TB_LARGE_MAX = 512   # used only when it still leaves >= 2 (even) batch tiles


def _round_up(x, m):
    return (x + m - 1) // m * m


def _choose_tb(B):
    """Batch tile size.

    Multiple of 16 (bf16 sublane packing). For non-trivial B we guarantee at least
    two grid steps so the "parallel" batch axis can be sharded across v7x's two
    TensorCores; TB is raised to 512 only when B >= 1024 so the tile count stays
    >= 2 (and even) while amortizing per-grid-step overhead on v6e/v7x.
    """
    if B <= 16:
        return 16
    tb_max = TB_LARGE_MAX if B >= 2 * TB_LARGE_MAX else TB_SMALL_MAX
    return min(tb_max, _round_up(pl.cdiv(B, 2), 16))


def generator_mlp_kernel(x_ref,
                         w1_ref, b1_ref,
                         w2_ref, b2_ref,
                         w3_ref, b3_ref,
                         w4_ref, b4_ref,
                         o_ref):
    """One batch tile of the generator MLP, fully resident in VMEM.

    x_ref already contains [z | one_hot(label) | 0] on 128 lanes and the embedding
    table is folded into w1 rows 100:110, so the whole network is 4 MXU matmuls
    (bf16 inputs, f32 accumulation) + VPU bias/LeakyReLU + EUP tanh.
    """

    def leaky_relu(h):
        # max(h, 0.2*h) == LeakyReLU(0.2): 2 VPU ops instead of 3 for where().
        return jnp.maximum(h, 0.2 * h)

    h = jnp.dot(x_ref[...], w1_ref[...],
                preferred_element_type=jnp.float32) + b1_ref[...]
    h = leaky_relu(h)
    h = jnp.dot(h.astype(jnp.bfloat16), w2_ref[...],
                preferred_element_type=jnp.float32) + b2_ref[...]
    h = leaky_relu(h)
    h = jnp.dot(h.astype(jnp.bfloat16), w3_ref[...],
                preferred_element_type=jnp.float32) + b3_ref[...]
    h = leaky_relu(h)
    h = jnp.dot(h.astype(jnp.bfloat16), w4_ref[...],
                preferred_element_type=jnp.float32) + b4_ref[...]
    o_ref[...] = jnp.tanh(h).astype(o_ref.dtype)


def init_params(key):
    """Deterministic synthetic parameters matching the PyTorch module's shapes (f32)."""
    keys = jax.random.split(key, 9)
    params = {}
    # nn.Embedding(10, 10): N(0, 1) init
    params["label_emb"] = jax.random.normal(keys[0], (10, 10), jnp.float32)

    dims = [(110, 256), (256, 512), (512, 1024), (1024, 784)]
    for i, (fan_in, fan_out) in enumerate(dims):
        bound = float(fan_in) ** -0.5  # PyTorch Linear default: U(-1/sqrt(in), 1/sqrt(in))
        w = jax.random.uniform(keys[1 + 2 * i], (fan_in, fan_out), jnp.float32,
                               minval=-bound, maxval=bound)
        b = jax.random.uniform(keys[2 + 2 * i], (1, fan_out), jnp.float32,
                               minval=-bound, maxval=bound)
        params[f"w{i + 1}"] = w
        params[f"b{i + 1}"] = b
    return params


def prepare_params(params):
    """One-time weight prep: lane padding, embedding folding into layer 1, bf16 cast."""
    w1, b1 = params["w1"], params["b1"]          # (110, 256), (1, 256)
    emb = params["label_emb"]                    # (10, 10)

    # Layer 1, padded K 100 -> 128:
    #   rows   0:100 -> z part of W1
    #   rows 100:110 -> embedding table folded into the label part of W1
    #   rows 110:128 -> zero (matches zero lanes of the padded input)
    w1p = jnp.zeros((128, 256), jnp.float32)
    w1p = w1p.at[:100, :].set(w1[:100, :])
    w1p = w1p.at[100:110, :].set(emb @ w1[100:110, :])

    # Last layer: lane-pad output 784 -> 896 (= 7*128) with zero columns.
    w4 = jnp.zeros((1024, 896), jnp.float32).at[:, :784].set(params["w4"])
    b4 = jnp.zeros((1, 896), jnp.float32).at[:, :784].set(params["b4"])

    return {
        "w1": w1p.astype(jnp.bfloat16), "b1": b1,
        "w2": params["w2"].astype(jnp.bfloat16), "b2": params["b2"],
        "w3": params["w3"].astype(jnp.bfloat16), "b3": params["b3"],
        "w4": w4.astype(jnp.bfloat16), "b4": b4,
    }


@jax.jit
def generator_forward(z, labels, prepared):
    B = z.shape[0]
    z = z.reshape(B, 100).astype(jnp.float32)
    labels = labels.astype(jnp.int32)

    TB = _choose_tb(B)
    B_pad = _round_up(B, TB)
    grid = (B_pad // TB,)

    # Fused, lane-dense input: [ z (100) | one_hot(label) (10) | zeros (18) ] in bf16.
    # Labels outside [0, 10) yield an all-zero one-hot (embedding contribution dropped),
    # same as the previous kernel; the module contract is labels in [0, 10).
    one_hot = jax.nn.one_hot(labels, 10, dtype=jnp.bfloat16)          # (B, 10), exact in bf16
    x = jnp.zeros((B_pad, 128), jnp.bfloat16)
    x = x.at[:B, :100].set(z.astype(jnp.bfloat16))
    x = x.at[:B, 100:110].set(one_hot)

    weight_names = ["w1", "b1", "w2", "b2", "w3", "b3", "w4", "b4"]
    weights = [prepared[n] for n in weight_names]

    def batch_spec(cols):
        return pl.BlockSpec((TB, cols), lambda i: (i, 0))

    def resident_spec(shape):
        # Grid-invariant block index: DMA'd once, stays resident in VMEM across tiles.
        return pl.BlockSpec(shape, lambda i: (0, 0))

    in_specs = [batch_spec(128)] + [resident_spec(w.shape) for w in weights]

    mac = 128 * 256 + 256 * 512 + 512 * 1024 + 1024 * 896
    weight_bytes = sum(int(w.size) * w.dtype.itemsize for w in weights)
    cost = pl.CostEstimate(
        flops=2 * B_pad * mac,
        transcendentals=B_pad * 896,                                  # tanh
        bytes_accessed=B_pad * 128 * 2 + weight_bytes + B_pad * 896 * 2,
    )

    # VMEM budget from actual buffer math (per review, instead of a blanket 48 MiB):
    #   weights x2 (margin in case the grid-invariant blocks get double-buffered),
    #   double-buffered input/output batch tiles, generous f32 activation scratch.
    io_bytes = 2 * TB * 128 * 2 + 2 * TB * 896 * 2
    act_bytes = 4 * TB * 1024 * 4
    vmem_limit = _round_up(2 * weight_bytes + io_bytes + act_bytes + (2 << 20), 1 << 20)

    out = pl.pallas_call(
        generator_mlp_kernel,
        out_shape=jax.ShapeDtypeStruct((B_pad, 896), jnp.bfloat16),   # bf16 writeback: 1/2 HBM traffic
        grid=grid,
        in_specs=in_specs,
        out_specs=batch_spec(896),
        compiler_params=pltpu.CompilerParams(
            dimension_semantics=("parallel",),        # megacore-shard batch tiles (v7x)
            vmem_limit_bytes=int(vmem_limit)),
        cost_estimate=cost,
    )(x, *weights)

    # Slice off batch/lane padding and restore the module's f32 output contract.
    return out[:B, :784].astype(jnp.float32).reshape(B, 28, 28)


def reference_forward(z, labels, params):
    """Pure-JAX f32 reference of the PyTorch forward, for correctness checking."""
    B = z.shape[0]
    z = z.reshape(B, 100)
    c = params["label_emb"][labels]
    x = jnp.concatenate([z, c], axis=1)

    def leaky(h):
        return jnp.where(h > 0, h, 0.2 * h)

    h = leaky(x @ params["w1"] + params["b1"])
    h = leaky(h @ params["w2"] + params["b2"])
    h = leaky(h @ params["w3"] + params["b3"])
    h = jnp.tanh(h @ params["w4"] + params["b4"])
    return h.reshape(B, 28, 28)


if __name__ == "__main__":
    key = jax.random.PRNGKey(0)
    pkey, zkey, lkey = jax.random.split(key, 3)

    params = init_params(pkey)
    prepared = prepare_params(params)

    B = 2
    z = jax.random.normal(zkey, (B, 100), jnp.float32)          # latent noise
    labels = jax.random.randint(lkey, (B,), 0, 10, jnp.int32)   # class labels in [0, 10)

    img = generator_forward(z, labels, prepared)
    jax.block_until_ready(img)

    assert img.shape == (B, 28, 28), img.shape
    assert img.dtype == jnp.float32
    # Tanh output range sanity check
    assert bool(jnp.all(jnp.abs(img) <= 1.0 + 1e-6))
    # Numerical check vs f32 reference (bf16 weights + bf16 output -> loose-but-meaningful tol)
    ref = reference_forward(z, labels, params)
    err = float(jnp.max(jnp.abs(img - ref)))
    assert err < 7.5e-2, f"max abs error vs reference: {err}"

    print("KERNEL_OK")
</pallas_src>

<mosaic_0001>
module attributes {stable_mosaic.version = 11 : i64} {
  func.func @generator_mlp_kernel(%arg0: i32, %arg1: memref<16x128xbf16, #tpu.memory_space<vmem>>, %arg2: memref<128x256xbf16, #tpu.memory_space<vmem>>, %arg3: memref<1x256xf32, #tpu.memory_space<vmem>>, %arg4: memref<256x512xbf16, #tpu.memory_space<vmem>>, %arg5: memref<1x512xf32, #tpu.memory_space<vmem>>, %arg6: memref<512x1024xbf16, #tpu.memory_space<vmem>>, %arg7: memref<1x1024xf32, #tpu.memory_space<vmem>>, %arg8: memref<1024x896xbf16, #tpu.memory_space<vmem>>, %arg9: memref<1x896xf32, #tpu.memory_space<vmem>>, %arg10: memref<16x896xbf16, #tpu.memory_space<vmem>>) attributes {dimension_semantics = [#tpu.dimension_semantics<parallel>], iteration_bounds = array<i64: 1>, scalar_prefetch = 0 : i64, scratch_operands = 0 : i64, tpu.core_type = #tpu.core_type<tc>, window_params = [{transform_indices = @transform_0, window_bounds = array<i64: 16, 128>}, {pipeline_mode = #tpu.pipeline_mode<synchronous>, transform_indices = @transform_1, window_bounds = array<i64: 128, 256>}, {pipeline_mode = #tpu.pipeline_mode<synchronous>, transform_indices = @transform_2, window_bounds = array<i64: 1, 256>}, {pipeline_mode = #tpu.pipeline_mode<synchronous>, transform_indices = @transform_3, window_bounds = array<i64: 256, 512>}, {pipeline_mode = #tpu.pipeline_mode<synchronous>, transform_indices = @transform_4, window_bounds = array<i64: 1, 512>}, {pipeline_mode = #tpu.pipeline_mode<synchronous>, transform_indices = @transform_5, window_bounds = array<i64: 512, 1024>}, {pipeline_mode = #tpu.pipeline_mode<synchronous>, transform_indices = @transform_6, window_bounds = array<i64: 1, 1024>}, {pipeline_mode = #tpu.pipeline_mode<synchronous>, transform_indices = @transform_7, window_bounds = array<i64: 1024, 896>}, {pipeline_mode = #tpu.pipeline_mode<synchronous>, transform_indices = @transform_8, window_bounds = array<i64: 1, 896>}, {transform_indices = @transform_9, window_bounds = array<i64: 16, 896>}]} {
    %c0 = arith.constant 0 : index
    %c0_0 = arith.constant 0 : index
    %0 = vector.load %arg1[%c0, %c0_0] : memref<16x128xbf16, #tpu.memory_space<vmem>>, vector<16x128xbf16>
    %c0_1 = arith.constant 0 : index
    %c0_2 = arith.constant 0 : index
    %1 = vector.load %arg2[%c0_1, %c0_2] : memref<128x256xbf16, #tpu.memory_space<vmem>>, vector<128x256xbf16>
    %cst = arith.constant dense<0.000000e+00> : vector<16x256xf32>
    %2 = tpu.matmul %0, %1, %cst {dimension_numbers = #tpu.dot_dimension_numbers<[1], [0], [0], [1], [0, 0, 1, 1], [], []>} : vector<16x128xbf16>, vector<128x256xbf16>, vector<16x256xf32> -> vector<16x256xf32>
    %c0_3 = arith.constant 0 : index
    %c0_4 = arith.constant 0 : index
    %3 = vector.load %arg3[%c0_3, %c0_4] : memref<1x256xf32, #tpu.memory_space<vmem>>, vector<1x256xf32>
    %4 = vector.broadcast %3 : vector<1x256xf32> to vector<16x256xf32>
    %5 = arith.addf %2, %4 : vector<16x256xf32>
    %cst_5 = arith.constant 2.000000e-01 : f32
    %6 = vector.broadcast %cst_5 : f32 to vector<16x256xf32>
    %7 = arith.mulf %6, %5 : vector<16x256xf32>
    %8 = arith.maximumf %5, %7 : vector<16x256xf32>
    %9 = arith.truncf %8 : vector<16x256xf32> to vector<16x256xbf16>
    %c0_6 = arith.constant 0 : index
    %c0_7 = arith.constant 0 : index
    %10 = vector.load %arg4[%c0_6, %c0_7] : memref<256x512xbf16, #tpu.memory_space<vmem>>, vector<256x512xbf16>
    %cst_8 = arith.constant dense<0.000000e+00> : vector<16x512xf32>
    %11 = tpu.matmul %9, %10, %cst_8 {dimension_numbers = #tpu.dot_dimension_numbers<[1], [0], [0], [1], [0, 0, 1, 1], [], []>} : vector<16x256xbf16>, vector<256x512xbf16>, vector<16x512xf32> -> vector<16x512xf32>
    %c0_9 = arith.constant 0 : index
    %c0_10 = arith.constant 0 : index
    %12 = vector.load %arg5[%c0_9, %c0_10] : memref<1x512xf32, #tpu.memory_space<vmem>>, vector<1x512xf32>
    %13 = vector.broadcast %12 : vector<1x512xf32> to vector<16x512xf32>
    %14 = arith.addf %11, %13 : vector<16x512xf32>
    %cst_11 = arith.constant 2.000000e-01 : f32
    %15 = vector.broadcast %cst_11 : f32 to vector<16x512xf32>
    %16 = arith.mulf %15, %14 : vector<16x512xf32>
    %17 = arith.maximumf %14, %16 : vector<16x512xf32>
    %18 = arith.truncf %17 : vector<16x512xf32> to vector<16x512xbf16>
    %c0_12 = arith.constant 0 : index
    %c0_13 = arith.constant 0 : index
    %19 = vector.load %arg6[%c0_12, %c0_13] : memref<512x1024xbf16, #tpu.memory_space<vmem>>, vector<512x1024xbf16>
    %cst_14 = arith.constant dense<0.000000e+00> : vector<16x1024xf32>
    %20 = tpu.matmul %18, %19, %cst_14 {dimension_numbers = #tpu.dot_dimension_numbers<[1], [0], [0], [1], [0, 0, 1, 1], [], []>} : vector<16x512xbf16>, vector<512x1024xbf16>, vector<16x1024xf32> -> vector<16x1024xf32>
    %c0_15 = arith.constant 0 : index
    %c0_16 = arith.constant 0 : index
    %21 = vector.load %arg7[%c0_15, %c0_16] : memref<1x1024xf32, #tpu.memory_space<vmem>>, vector<1x1024xf32>
    %22 = vector.broadcast %21 : vector<1x1024xf32> to vector<16x1024xf32>
    %23 = arith.addf %20, %22 : vector<16x1024xf32>
    %cst_17 = arith.constant 2.000000e-01 : f32
    %24 = vector.broadcast %cst_17 : f32 to vector<16x1024xf32>
    %25 = arith.mulf %24, %23 : vector<16x1024xf32>
    %26 = arith.maximumf %23, %25 : vector<16x1024xf32>
    %27 = arith.truncf %26 : vector<16x1024xf32> to vector<16x1024xbf16>
    %c0_18 = arith.constant 0 : index
    %c0_19 = arith.constant 0 : index
    %28 = vector.load %arg8[%c0_18, %c0_19] : memref<1024x896xbf16, #tpu.memory_space<vmem>>, vector<1024x896xbf16>
    %cst_20 = arith.constant dense<0.000000e+00> : vector<16x896xf32>
    %29 = tpu.matmul %27, %28, %cst_20 {dimension_numbers = #tpu.dot_dimension_numbers<[1], [0], [0], [1], [0, 0, 1, 1], [], []>} : vector<16x1024xbf16>, vector<1024x896xbf16>, vector<16x896xf32> -> vector<16x896xf32>
    %c0_21 = arith.constant 0 : index
    %c0_22 = arith.constant 0 : index
    %30 = vector.load %arg9[%c0_21, %c0_22] : memref<1x896xf32, #tpu.memory_space<vmem>>, vector<1x896xf32>
    %31 = vector.broadcast %30 : vector<1x896xf32> to vector<16x896xf32>
    %32 = arith.addf %29, %31 : vector<16x896xf32>
    %33 = math.tanh %32 : vector<16x896xf32>
    %34 = arith.truncf %33 : vector<16x896xf32> to vector<16x896xbf16>
    %c0_23 = arith.constant 0 : index
    %c0_24 = arith.constant 0 : index
    %35 = vector.load %arg10[%c0_23, %c0_24] : memref<16x896xbf16, #tpu.memory_space<vmem>>, vector<16x896xbf16>
    tpu.vector_store %arg10[%c0_23, %c0_24], %34 {strides = array<i32>} : memref<16x896xbf16, #tpu.memory_space<vmem>>, vector<16x896xbf16>,
    return
  }
  func.func @transform_0(%arg0: i32) -> (i32, i32) {
    %c0_i32 = arith.constant 0 : i32
    %c0_i32_0 = arith.constant 0 : i32
    return %arg0, %c0_i32 : i32, i32
  }
  func.func @transform_1(%arg0: i32) -> (i32, i32) {
    %c0_i32 = arith.constant 0 : i32
    %c0_i32_0 = arith.constant 0 : i32
    %c0_i32_1 = arith.constant 0 : i32
    return %c0_i32, %c0_i32_0 : i32, i32
  }
  func.func @transform_2(%arg0: i32) -> (i32, i32) {
    %c0_i32 = arith.constant 0 : i32
    %c0_i32_0 = arith.constant 0 : i32
    %c0_i32_1 = arith.constant 0 : i32
    return %c0_i32, %c0_i32_0 : i32, i32
  }
  func.func @transform_3(%arg0: i32) -> (i32, i32) {
    %c0_i32 = arith.constant 0 : i32
    %c0_i32_0 = arith.constant 0 : i32
    %c0_i32_1 = arith.constant 0 : i32
    return %c0_i32, %c0_i32_0 : i32, i32
  }
  func.func @transform_4(%arg0: i32) -> (i32, i32) {
    %c0_i32 = arith.constant 0 : i32
    %c0_i32_0 = arith.constant 0 : i32
    %c0_i32_1 = arith.constant 0 : i32
    return %c0_i32, %c0_i32_0 : i32, i32
  }
  func.func @transform_5(%arg0: i32) -> (i32, i32) {
    %c0_i32 = arith.constant 0 : i32
    %c0_i32_0 = arith.constant 0 : i32
    %c0_i32_1 = arith.constant 0 : i32
    return %c0_i32, %c0_i32_0 : i32, i32
  }
  func.func @transform_6(%arg0: i32) -> (i32, i32) {
    %c0_i32 = arith.constant 0 : i32
    %c0_i32_0 = arith.constant 0 : i32
    %c0_i32_1 = arith.constant 0 : i32
    return %c0_i32, %c0_i32_0 : i32, i32
  }
  func.func @transform_7(%arg0: i32) -> (i32, i32) {
    %c0_i32 = arith.constant 0 : i32
    %c0_i32_0 = arith.constant 0 : i32
    %c0_i32_1 = arith.constant 0 : i32
    return %c0_i32, %c0_i32_0 : i32, i32
  }
  func.func @transform_8(%arg0: i32) -> (i32, i32) {
    %c0_i32 = arith.constant 0 : i32
    %c0_i32_0 = arith.constant 0 : i32
    %c0_i32_1 = arith.constant 0 : i32
    return %c0_i32, %c0_i32_0 : i32, i32
  }
  func.func @transform_9(%arg0: i32) -> (i32, i32) {
    %c0_i32 = arith.constant 0 : i32
    %c0_i32_0 = arith.constant 0 : i32
    return %arg0, %c0_i32 : i32, i32
  }
}

</mosaic_0001>

<llo_original>
// kernel: generator_forward.1
$region0: #{generator_forward.1}
  #allocation0 [shape = 'u32[]', space=smem, size = 0x4, offset = 0x4, fixed_abs, tag = 'smem constant byte address 0x4 - core index']
  #allocation1 [shape = 'u32[144,128]{1,0:T(1,128)}', space=vmem, size = 0x12000, scoped, tag = 'internal scratch']
  %s0 = inlined_call_operand.vmem [shape: bf16[16,128], index: 0, kind: input, shape index: {}]
  %s1 = inlined_call_operand.hbm [shape: bf16[128,256], index: 1, kind: input, shape index: {}]
  %s2 = inlined_call_operand.hbm [shape: f32[1,256], index: 2, kind: input, shape index: {}]
  %s3 = inlined_call_operand.hbm [shape: bf16[256,512], index: 3, kind: input, shape index: {}]
  %s4 = inlined_call_operand.hbm [shape: f32[1,512], index: 4, kind: input, shape index: {}]
  %s5 = inlined_call_operand.hbm [shape: bf16[512,1024], index: 5, kind: input, shape index: {}]
  %s6 = inlined_call_operand.hbm [shape: f32[1,1024], index: 6, kind: input, shape index: {}]
  %s7 = inlined_call_operand.hbm [shape: bf16[1024,896], index: 7, kind: input, shape index: {}]
  %s8 = inlined_call_operand.hbm [shape: f32[1,896], index: 8, kind: input, shape index: {}]
  %s9 = inlined_call_operand.vmem [shape: bf16[16,896], index: 9, kind: output, shape index: {}]
  %s10 = sld [smem:[#allocation0]]
  $region78: #{generator_forward.1} parent=0
    _
  %s12 = ssub.s32 1, %s10
  %s13 = scalar_select 0, %s12, %s10
  $region1: #{generator_forward.1} parent=0
    #allocation2 [shape = 'u8[65536]{0}', space=vmem, size = 0x10000, scoped, tag = 'input window, operand 1, single buffered']
    #allocation3 [shape = 's32[1]{0}', space=sflag, size = 0x4, scoped, tag = 'scoped memory for generator_forward.1']
    #allocation4 [shape = 'u8[1024]{0}', space=vmem, size = 0x400, scoped, tag = 'input window, operand 2, single buffered']
    #allocation5 [shape = 's32[1]{0}', space=sflag, size = 0x4, scoped, tag = 'scoped memory for generator_forward.1']
    #allocation6 [shape = 'u8[262144]{0}', space=vmem, size = 0x40000, scoped, tag = 'input window, operand 3, single buffered']
    #allocation7 [shape = 'u8[2048]{0}', space=vmem, size = 0x800, scoped, tag = 'input window, operand 4, single buffered']
    #allocation8 [shape = 's32[1]{0}', space=sflag, size = 0x4, scoped, tag = 'scoped memory for generator_forward.1']
    #allocation9 [shape = 'u8[1048576]{0}', space=vmem, size = 0x100000, scoped, tag = 'input window, operand 5, single buffered']
    #allocation10 [shape = 'u8[4096]{0}', space=vmem, size = 0x1000, scoped, tag = 'input window, operand 6, single buffered']
    #allocation11 [shape = 's32[1]{0}', space=sflag, size = 0x4, scoped, tag = 'scoped memory for generator_forward.1']
    #allocation12 [shape = 'u8[1835008]{0}', space=vmem, size = 0x1c0000, scoped, tag = 'input window, operand 7, single buffered']
    #allocation13 [shape = 'u8[3584]{0}', space=vmem, size = 0x1000, scoped, tag = 'input window, operand 8, single buffered']
    #allocation14 [shape = 's32[1]{0}', space=sflag, size = 0x4, scoped, tag = 'scoped memory for generator_forward.1']
    %14 = vsyncpa [#allocation3], 0
    %15 = vsyncpa [#allocation5], 0
    %16 = vsyncpa [#allocation8], 0
    %17 = vsyncpa [#allocation11], 0
    %18 = vsyncpa [#allocation14], 0
    // Predicated region
    $region2: #{generator_forward.1} parent=1 // pred_check
      _
    $region3: #{generator_forward.1} parent=1 // pred_check_branch
      %20 = sbr.rel (0) target = $region5
    $region4: #{generator_forward.1} parent=1 // pred_region
      _
    $region5: #{generator_forward.1} parent=1 // pred_fallthru
      _
    // Predicated region
    $region6: #{generator_forward.1} parent=1 // pred_check
      _
    $region7: #{generator_forward.1} parent=1 // pred_check_branch
      %22 = sbr.rel (0) target = $region9
    $region8: #{generator_forward.1} parent=1 // pred_region
      %s24 = ssub.s32 2048, 2048
      %25 = vsyncadd [#allocation3], %s24
      %s26 = sshll.u32 [#allocation2], 4
      %s27 = int_to_ptr.vmem [resolvable:$true] %s26
      %32 = dma.hbm_to_vmem [thread:$0]  %s1, 2048, %s27, [#allocation3], 128, 128, 8
    $region9: #{generator_forward.1} parent=1 // pred_fallthru
      _
    // Predicated region
    $region10: #{generator_forward.1} parent=1 // pred_check
      _
    $region11: #{generator_forward.1} parent=1 // pred_check_branch
      %34 = sbr.rel (0) target = $region13
    $region12: #{generator_forward.1} parent=1 // pred_region
      %s36 = ssub.s32 32, 32
      %37 = vsyncadd [#allocation5], %s36
      %s39 = sshll.u32 [#allocation4], 4
      %s40 = int_to_ptr.vmem [resolvable:$true] %s39
      %42 = dma.hbm_to_vmem [thread:$0]  %s2, 32, %s40, [#allocation5]
    $region13: #{generator_forward.1} parent=1 // pred_fallthru
      _
    // Predicated region
    $region14: #{generator_forward.1} parent=1 // pred_check
      _
    $region15: #{generator_forward.1} parent=1 // pred_check_branch
      %44 = sbr.rel (0) target = $region17
    $region16: #{generator_forward.1} parent=1 // pred_region
      %s46 = ssub.s32 8192, 8192
      %47 = vsyncadd [#allocation5], %s46
      %s48 = sshll.u32 [#allocation6], 4
      %s49 = int_to_ptr.vmem [resolvable:$true] %s48
      %54 = dma.hbm_to_vmem [thread:$0]  %s3, 8192, %s49, [#allocation5], 256, 256, 16
    $region17: #{generator_forward.1} parent=1 // pred_fallthru
      _
    // Predicated region
    $region18: #{generator_forward.1} parent=1 // pred_check
      _
    $region19: #{generator_forward.1} parent=1 // pred_check_branch
      %56 = sbr.rel (0) target = $region21
    $region20: #{generator_forward.1} parent=1 // pred_region
      %s58 = ssub.s32 64, 64
      %59 = vsyncadd [#allocation8], %s58
      %s61 = sshll.u32 [#allocation7], 4
      %s62 = int_to_ptr.vmem [resolvable:$true] %s61
      %64 = dma.hbm_to_vmem [thread:$0]  %s4, 64, %s62, [#allocation8]
    $region21: #{generator_forward.1} parent=1 // pred_fallthru
      _
    // Predicated region
    $region22: #{generator_forward.1} parent=1 // pred_check
      _
    $region23: #{generator_forward.1} parent=1 // pred_check_branch
      %66 = sbr.rel (0) target = $region25
    $region24: #{generator_forward.1} parent=1 // pred_region
      %s68 = ssub.s32 32768, 32768
      %69 = vsyncadd [#allocation8], %s68
      %s70 = sshll.u32 [#allocation9], 4
      %s71 = int_to_ptr.vmem [resolvable:$true] %s70
      %76 = dma.hbm_to_vmem [thread:$0]  %s5, 32768, %s71, [#allocation8], 512, 512, 32
    $region25: #{generator_forward.1} parent=1 // pred_fallthru
      _
    // Predicated region
    $region26: #{generator_forward.1} parent=1 // pred_check
      _
    $region27: #{generator_forward.1} parent=1 // pred_check_branch
      %78 = sbr.rel (0) target = $region29
    $region28: #{generator_forward.1} parent=1 // pred_region
      %s80 = ssub.s32 128, 128
      %81 = vsyncadd [#allocation11], %s80
      %s83 = sshll.u32 [#allocation10], 4
      %s84 = int_to_ptr.vmem [resolvable:$true] %s83
      %86 = dma.hbm_to_vmem [thread:$0]  %s6, 128, %s84, [#allocation11]
    $region29: #{generator_forward.1} parent=1 // pred_fallthru
      _
    // Predicated region
    $region30: #{generator_forward.1} parent=1 // pred_check
      _
    $region31: #{generator_forward.1} parent=1 // pred_check_branch
      %88 = sbr.rel (0) target = $region33
    $region32: #{generator_forward.1} parent=1 // pred_region
      %s90 = ssub.s32 57344, 57344
      %91 = vsyncadd [#allocation11], %s90
      %s92 = sshll.u32 [#allocation12], 4
      %s93 = int_to_ptr.vmem [resolvable:$true] %s92
      %98 = dma.hbm_to_vmem [thread:$0]  %s7, 57344, %s93, [#allocation11], 448, 448, 28
    $region33: #{generator_forward.1} parent=1 // pred_fallthru
      _
    // Predicated region
    $region34: #{generator_forward.1} parent=1 // pred_check
      _
    $region35: #{generator_forward.1} parent=1 // pred_check_branch
      %100 = sbr.rel (0) target = $region37
    $region36: #{generator_forward.1} parent=1 // pred_region
      %s102 = ssub.s32 112, 112
      %103 = vsyncadd [#allocation14], %s102
      %s105 = sshll.u32 [#allocation13], 4
      %s106 = int_to_ptr.vmem [resolvable:$true] %s105
      %108 = dma.hbm_to_vmem [thread:$0]  %s8, 112, %s106, [#allocation14]
    $region37: #{generator_forward.1} parent=1 // pred_fallthru
      _
    // Predicated region
    $region38: #{generator_forward.1} parent=1 // pred_check
      _
    $region39: #{generator_forward.1} parent=1 // pred_check_branch
      %110 = sbr.rel (0) target = $region41
    $region40: #{generator_forward.1} parent=1 // pred_region
      %111 = dma.done [#allocation3], 2048
    $region41: #{generator_forward.1} parent=1 // pred_fallthru
      _
    // Predicated region
    $region42: #{generator_forward.1} parent=1 // pred_check
      _
    $region43: #{generator_forward.1} parent=1 // pred_check_branch
      %113 = sbr.rel (0) target = $region45
    $region44: #{generator_forward.1} parent=1 // pred_region
      %114 = dma.done [#allocation5], 32
    $region45: #{generator_forward.1} parent=1 // pred_fallthru
      _
    // Predicated region
    $region46: #{generator_forward.1} parent=1 // pred_check
      _
    $region47: #{generator_forward.1} parent=1 // pred_check_branch
      %116 = sbr.rel (0) target = $region49
    $region48: #{generator_forward.1} parent=1 // pred_region
      %117 = dma.done [#allocation5], 8192
    $region49: #{generator_forward.1} parent=1 // pred_fallthru
      _
    // Predicated region
    $region50: #{generator_forward.1} parent=1 // pred_check
      _
    $region51: #{generator_forward.1} parent=1 // pred_check_branch
      %119 = sbr.rel (0) target = $region53
    $region52: #{generator_forward.1} parent=1 // pred_region
      %120 = dma.done [#allocation8], 64
    $region53: #{generator_forward.1} parent=1 // pred_fallthru
      _
    // Predicated region
    $region54: #{generator_forward.1} parent=1 // pred_check
      _
    $region55: #{generator_forward.1} parent=1 // pred_check_branch
      %122 = sbr.rel (0) target = $region57
    $region56: #{generator_forward.1} parent=1 // pred_region
      %123 = dma.done [#allocation8], 32768
    $region57: #{generator_forward.1} parent=1 // pred_fallthru
      _
    // Predicated region
    $region58: #{generator_forward.1} parent=1 // pred_check
      _
    $region59: #{generator_forward.1} parent=1 // pred_check_branch
      %125 = sbr.rel (0) target = $region61
    $region60: #{generator_forward.1} parent=1 // pred_region
      %126 = dma.done [#allocation11], 128
    $region61: #{generator_forward.1} parent=1 // pred_fallthru
      _
    // Predicated region
    $region62: #{generator_forward.1} parent=1 // pred_check
      _
    $region63: #{generator_forward.1} parent=1 // pred_check_branch
      %128 = sbr.rel (0) target = $region65
    $region64: #{generator_forward.1} parent=1 // pred_region
      %129 = dma.done [#allocation11], 57344
    $region65: #{generator_forward.1} parent=1 // pred_fallthru
      _
    // Predicated region
    $region66: #{generator_forward.1} parent=1 // pred_check
      _
    $region67: #{generator_forward.1} parent=1 // pred_check_branch
      %131 = sbr.rel (0) target = $region69
    $region68: #{generator_forward.1} parent=1 // pred_region
      %132 = dma.done [#allocation14], 112
    $region69: #{generator_forward.1} parent=1 // pred_fallthru
      _
    %v134 = vld [vmem:[%s0] sm:$0xf]
    %v135 = vld [vmem:[%s0 + $0x4] sm:$0xf]
    %v136 = vld [vmem:[#allocation2] sm:$0xff]
    %v137 = vld [vmem:[#allocation2 + $0x8] sm:$0xff]
    %v138 = vld [vmem:[#allocation2 + $0x10] sm:$0xff]
    %v139 = vld [vmem:[#allocation2 + $0x18] sm:$0xff]
    %v140 = vld [vmem:[#allocation2 + $0x20] sm:$0xff]
    %v141 = vld [vmem:[#allocation2 + $0x28] sm:$0xff]
    %v142 = vld [vmem:[#allocation2 + $0x30] sm:$0xff]
    %v143 = vld [vmem:[#allocation2 + $0x38] sm:$0xff]
    %v144 = vld [vmem:[#allocation2 + $0x40] sm:$0xff]
    %v145 = vld [vmem:[#allocation2 + $0x48] sm:$0xff]
    %v146 = vld [vmem:[#allocation2 + $0x50] sm:$0xff]
    %v147 = vld [vmem:[#allocation2 + $0x58] sm:$0xff]
    %v148 = vld [vmem:[#allocation2 + $0x60] sm:$0xff]
    %v149 = vld [vmem:[#allocation2 + $0x68] sm:$0xff]
    %v150 = vld [vmem:[#allocation2 + $0x70] sm:$0xff]
    %v151 = vld [vmem:[#allocation2 + $0x78] sm:$0xff]
    %v152 = vld [vmem:[#allocation4] sm:$0x3]
    %v154 = vlaneseq
    %v155 = vshrl.u32 %v154, 7
    %v156 = vsub.s32 0, %v155
    %v157 = vrot.slane %v152, %v156
    %v158 = vlaneseq
    %v159 = vshrl.u32 %v158, 7
    %v160 = vsub.s32 1, %v159
    %v161 = vrot.slane %v152, %v160
    %v166 = vunpack.c.l.b16 %v134
    %v167 = vunpack.c.l.b16 %v135
    %v168 = vpack.c.b16 %v167, %v166
    %v186 = vunpack.c.l.b16 %v136
    %v187 = vunpack.c.h.b16 %v136
    %v188 = vunpack.c.l.b16 %v137
    %v189 = vunpack.c.h.b16 %v137
    %v190 = vunpack.c.l.b16 %v138
    %v191 = vunpack.c.h.b16 %v138
    %v192 = vunpack.c.l.b16 %v139
    %v193 = vunpack.c.h.b16 %v139
    %v194 = vunpack.c.l.b16 %v140
    %v195 = vunpack.c.h.b16 %v140
    %v196 = vunpack.c.l.b16 %v141
    %v197 = vunpack.c.h.b16 %v141
    %v198 = vunpack.c.l.b16 %v142
    %v199 = vunpack.c.h.b16 %v142
    %v200 = vunpack.c.l.b16 %v143
    %v201 = vunpack.c.h.b16 %v143
    %v202 = vunpack.c.l.b16 %v144
    %v203 = vunpack.c.h.b16 %v144
    %v204 = vunpack.c.l.b16 %v145
    %v205 = vunpack.c.h.b16 %v145
    %v206 = vunpack.c.l.b16 %v146
    %v207 = vunpack.c.h.b16 %v146
    %v208 = vunpack.c.l.b16 %v147
    %v209 = vunpack.c.h.b16 %v147
    %v210 = vunpack.c.l.b16 %v148
    %v211 = vunpack.c.h.b16 %v148
    %v212 = vunpack.c.l.b16 %v149
    %v213 = vunpack.c.h.b16 %v149
    %v214 = vunpack.c.l.b16 %v150
    %v215 = vunpack.c.h.b16 %v150
    %v216 = vunpack.c.l.b16 %v151
    %v217 = vunpack.c.h.b16 %v151
    %v218 = vpack.c.b16 %v188, %v186
    %v219 = vpack.c.b16 %v189, %v187
    %v220 = vpack.c.b16 %v192, %v190
    %v221 = vpack.c.b16 %v193, %v191
    %v222 = vpack.c.b16 %v196, %v194
    %v223 = vpack.c.b16 %v197, %v195
    %v224 = vpack.c.b16 %v200, %v198
    %v225 = vpack.c.b16 %v201, %v199
    %v226 = vpack.c.b16 %v204, %v202
    %v227 = vpack.c.b16 %v205, %v203
    %v228 = vpack.c.b16 %v208, %v206
    %v229 = vpack.c.b16 %v209, %v207
    %v230 = vpack.c.b16 %v212, %v210
    %v231 = vpack.c.b16 %v213, %v211
    %v232 = vpack.c.b16 %v216, %v214
    %v233 = vpack.c.b16 %v217, %v215
    %250 = vmatprep.subr.bf16.mxu0 %v219
    %251 = vmatpush1.bf16.msra.mxu0 %v218
    %252 = vmatprep.subr.bf16.mxu0 %v221
    %253 = vmatpush1.bf16.msra.mxu0 %v220
    %254 = vmatprep.subr.bf16.mxu0 %v223
    %255 = vmatpush1.bf16.msra.mxu0 %v222
    %256 = vmatprep.subr.bf16.mxu0 %v225
    %257 = vmatpush1.bf16.msra.mxu0 %v224
    %258 = vmatprep.subr.bf16.mxu0 %v227
    %259 = vmatpush1.bf16.msra.mxu0 %v226
    %260 = vmatprep.subr.bf16.mxu0 %v229
    %261 = vmatpush1.bf16.msra.mxu0 %v228
    %262 = vmatprep.subr.bf16.mxu0 %v231
    %263 = vmatpush1.bf16.msra.mxu0 %v230
    %264 = vmatprep.subr.bf16.mxu0 %v233
    %265 = vmatpush1.bf16.msra.mxu0 %v232
    %266 = vmatprep.subr.bf16.mxu0 0
    %267 = vmatpush1.bf16.msra.mxu0 0
    %268 = vmatprep.subr.bf16.mxu0 0
    %269 = vmatpush1.bf16.msra.mxu0 0
    %270 = vmatprep.subr.bf16.mxu0 0
    %271 = vmatpush1.bf16.msra.mxu0 0
    %272 = vmatprep.subr.bf16.mxu0 0
    %273 = vmatpush1.bf16.msra.mxu0 0
    %274 = vmatprep.subr.bf16.mxu0 0
    %275 = vmatpush1.bf16.msra.mxu0 0
    %276 = vmatprep.subr.bf16.mxu0 0
    %277 = vmatpush1.bf16.msra.mxu0 0
    %278 = vmatprep.subr.bf16.mxu0 0
    %279 = vmatpush1.bf16.msra.mxu0 0
    %280 = vmatprep.subr.bf16.mxu0 0
    %281 = vmatpush1.bf16.msra.mxu0 0
    %282 = vmatprep.mubr.bf16.mxu0 0
    %283 = vmatmul.mubr.bf16.gmra.mrb[0].mxu0 %v168
    %v284 = vpop.f32.mrb[0].mxu0
    %v285 = vadd.f32 %v157, %v284
    %v286 = vpop.f32.mrb[0].mxu0
    %v287 = vadd.f32 %v161, %v286
    %v288 = vpop.f32.mrb[0].mxu0
    %v289 = vadd.f32 %v157, %v288
    %v290 = vpop.f32.mrb[0].mxu0
    %v291 = vadd.f32 %v161, %v290
    %292 = vdwg.mxu0
    %v293 = vmul.f32 %v285, 0.2
    %v294 = vmul.f32 %v287, 0.2
    %v295 = vmul.f32 %v289, 0.2
    %v296 = vmul.f32 %v291, 0.2
    %v297 = vmax.f32 %v285, %v293
    %v298 = vmax.f32 %v287, %v294
    %v299 = vmax.f32 %v289, %v295
    %v300 = vmax.f32 %v291, %v296
    %v301 = vpack.c.bf16 %v299, %v297
    %v302 = vpack.c.bf16 %v300, %v298
    %v303 = vld [vmem:[#allocation6] sm:$0xff]
    %v304 = vld [vmem:[#allocation6 + $0x8] sm:$0xff]
    %v305 = vld [vmem:[#allocation6 + $0x10] sm:$0xff]
    %v306 = vld [vmem:[#allocation6 + $0x18] sm:$0xff]
    %v307 = vld [vmem:[#allocation6 + $0x20] sm:$0xff]
    %v308 = vld [vmem:[#allocation6 + $0x28] sm:$0xff]
    %v309 = vld [vmem:[#allocation6 + $0x30] sm:$0xff]
    %v310 = vld [vmem:[#allocation6 + $0x38] sm:$0xff]
    %v311 = vld [vmem:[#allocation6 + $0x40] sm:$0xff]
    %v312 = vld [vmem:[#allocation6 + $0x48] sm:$0xff]
    %v313 = vld [vmem:[#allocation6 + $0x50] sm:$0xff]
    %v314 = vld [vmem:[#allocation6 + $0x58] sm:$0xff]
    %v315 = vld [vmem:[#allocation6 + $0x60] sm:$0xff]
    %v316 = vld [vmem:[#allocation6 + $0x68] sm:$0xff]
    %v317 = vld [vmem:[#allocation6 + $0x70] sm:$0xff]
    %v318 = vld [vmem:[#allocation6 + $0x78] sm:$0xff]
    %v319 = vld [vmem:[#allocation6 + $0x80] sm:$0xff]
    %v320 = vld [vmem:[#allocation6 + $0x88] sm:$0xff]
    %v321 = vld [vmem:[#allocation6 + $0x90] sm:$0xff]
    %v322 = vld [vmem:[#allocation6 + $0x98] sm:$0xff]
    %v323 = vld [vmem:[#allocation6 + $0xa0] sm:$0xff]
    %v324 = vld [vmem:[#allocation6 + $0xa8] sm:$0xff]
    %v325 = vld [vmem:[#allocation6 + $0xb0] sm:$0xff]
    %v326 = vld [vmem:[#allocation6 + $0xb8] sm:$0xff]
    %v327 = vld [vmem:[#allocation6 + $0xc0] sm:$0xff]
    %v328 = vld [vmem:[#allocation6 + $0xc8] sm:$0xff]
    %v329 = vld [vmem:[#allocation6 + $0xd0] sm:$0xff]
    %v330 = vld [vmem:[#allocation6 + $0xd8] sm:$0xff]
    %v331 = vld [vmem:[#allocation6 + $0xe0] sm:$0xff]
    %v332 = vld [vmem:[#allocation6 + $0xe8] sm:$0xff]
    %v333 = vld [vmem:[#allocation6 + $0xf0] sm:$0xff]
    %v334 = vld [vmem:[#allocation6 + $0xf8] sm:$0xff]
    %v335 = vld [vmem:[#allocation6 + $0x100] sm:$0xff]
    %v336 = vld [vmem:[#allocation6 + $0x108] sm:$0xff]
    %v337 = vld [vmem:[#allocation6 + $0x110] sm:$0xff]
    %v338 = vld [vmem:[#allocation6 + $0x118] sm:$0xff]
    %v339 = vld [vmem:[#allocation6 + $0x120] sm:$0xff]
    %v340 = vld [vmem:[#allocation6 + $0x128] sm:$0xff]
    %v341 = vld [vmem:[#allocation6 + $0x130] sm:$0xff]
    %v342 = vld [vmem:[#allocation6 + $0x138] sm:$0xff]
    %v343 = vld [vmem:[#allocation6 + $0x140] sm:$0xff]
    %v344 = vld [vmem:[#allocation6 + $0x148] sm:$0xff]
    %v345 = vld [vmem:[#allocation6 + $0x150] sm:$0xff]
    %v346 = vld [vmem:[#allocation6 + $0x158] sm:$0xff]
    %v347 = vld [vmem:[#allocation6 + $0x160] sm:$0xff]
    %v348 = vld [vmem:[#allocation6 + $0x168] sm:$0xff]
    %v349 = vld [vmem:[#allocation6 + $0x170] sm:$0xff]
    %v350 = vld [vmem:[#allocation6 + $0x178] sm:$0xff]
    %v351 = vld [vmem:[#allocation6 + $0x180] sm:$0xff]
    %v352 = vld [vmem:[#allocation6 + $0x188] sm:$0xff]
    %v353 = vld [vmem:[#allocation6 + $0x190] sm:$0xff]
    %v354 = vld [vmem:[#allocation6 + $0x198] sm:$0xff]
    %v355 = vld [vmem:[#allocation6 + $0x1a0] sm:$0xff]
    %v356 = vld [vmem:[#allocation6 + $0x1a8] sm:$0xff]
    %v357 = vld [vmem:[#allocation6 + $0x1b0] sm:$0xff]
    %v358 = vld [vmem:[#allocation6 + $0x1b8] sm:$0xff]
    %v359 = vld [vmem:[#allocation6 + $0x1c0] sm:$0xff]
    %v360 = vld [vmem:[#allocation6 + $0x1c8] sm:$0xff]
    %v361 = vld [vmem:[#allocation6 + $0x1d0] sm:$0xff]
    %v362 = vld [vmem:[#allocation6 + $0x1d8] sm:$0xff]
    %v363 = vld [vmem:[#allocation6 + $0x1e0] sm:$0xff]
    %v364 = vld [vmem:[#allocation6 + $0x1e8] sm:$0xff]
    %v365 = vld [vmem:[#allocation6 + $0x1f0] sm:$0xff]
    %v366 = vld [vmem:[#allocation6 + $0x1f8] sm:$0xff]
    %v367 = vld [vmem:[#allocation7] sm:$0xf]
    %v369 = vlaneseq
    %v370 = vshrl.u32 %v369, 7
    %v371 = vsub.s32 0, %v370
    %v372 = vrot.slane %v367, %v371
    %v373 = vlaneseq
    %v374 = vshrl.u32 %v373, 7
    %v375 = vsub.s32 1, %v374
    %v376 = vrot.slane %v367, %v375
    %v377 = vlaneseq
    %v378 = vshrl.u32 %v377, 7
    %v379 = vsub.s32 2, %v378
    %v380 = vrot.slane %v367, %v379
    %v381 = vlaneseq
    %v382 = vshrl.u32 %v381, 7
    %v383 = vsub.s32 3, %v382
    %v384 = vrot.slane %v367, %v383
    %v453 = vunpack.c.l.b16 %v303
    %v454 = vunpack.c.h.b16 %v303
    %v455 = vunpack.c.l.b16 %v304
    %v456 = vunpack.c.h.b16 %v304
    %v457 = vunpack.c.l.b16 %v305
    %v458 = vunpack.c.h.b16 %v305
    %v459 = vunpack.c.l.b16 %v306
    %v460 = vunpack.c.h.b16 %v306
    %v461 = vunpack.c.l.b16 %v307
    %v462 = vunpack.c.h.b16 %v307
    %v463 = vunpack.c.l.b16 %v308
    %v464 = vunpack.c.h.b16 %v308
    %v465 = vunpack.c.l.b16 %v309
    %v466 = vunpack.c.h.b16 %v309
    %v467 = vunpack.c.l.b16 %v310
    %v468 = vunpack.c.h.b16 %v310
    %v469 = vunpack.c.l.b16 %v311
    %v470 = vunpack.c.h.b16 %v311
    %v471 = vunpack.c.l.b16 %v312
    %v472 = vunpack.c.h.b16 %v312
    %v473 = vunpack.c.l.b16 %v313
    %v474 = vunpack.c.h.b16 %v313
    %v475 = vunpack.c.l.b16 %v314
    %v476 = vunpack.c.h.b16 %v314
    %v477 = vunpack.c.l.b16 %v315
    %v478 = vunpack.c.h.b16 %v315
    %v479 = vunpack.c.l.b16 %v316
    %v480 = vunpack.c.h.b16 %v316
    %v481 = vunpack.c.l.b16 %v317
    %v482 = vunpack.c.h.b16 %v317
    %v483 = vunpack.c.l.b16 %v318
    %v484 = vunpack.c.h.b16 %v318
    %v485 = vunpack.c.l.b16 %v319
    %v486 = vunpack.c.h.b16 %v319
    %v487 = vunpack.c.l.b16 %v320
    %v488 = vunpack.c.h.b16 %v320
    %v489 = vunpack.c.l.b16 %v321
    %v490 = vunpack.c.h.b16 %v321
    %v491 = vunpack.c.l.b16 %v322
    %v492 = vunpack.c.h.b16 %v322
    %v493 = vunpack.c.l.b16 %v323
    %v494 = vunpack.c.h.b16 %v323
    %v495 = vunpack.c.l.b16 %v324
    %v496 = vunpack.c.h.b16 %v324
    %v497 = vunpack.c.l.b16 %v325
    %v498 = vunpack.c.h.b16 %v325
    %v499 = vunpack.c.l.b16 %v326
    %v500 = vunpack.c.h.b16 %v326
    %v501 = vunpack.c.l.b16 %v327
    %v502 = vunpack.c.h.b16 %v327
    %v503 = vunpack.c.l.b16 %v328
    %v504 = vunpack.c.h.b16 %v328
    %v505 = vunpack.c.l.b16 %v329
    %v506 = vunpack.c.h.b16 %v329
    %v507 = vunpack.c.l.b16 %v330
    %v508 = vunpack.c.h.b16 %v330
    %v509 = vunpack.c.l.b16 %v331
    %v510 = vunpack.c.h.b16 %v331
    %v511 = vunpack.c.l.b16 %v332
    %v512 = vunpack.c.h.b16 %v332
    %v513 = vunpack.c.l.b16 %v333
    %v514 = vunpack.c.h.b16 %v333
    %v515 = vunpack.c.l.b16 %v334
    %v516 = vunpack.c.h.b16 %v334
    %v517 = vunpack.c.l.b16 %v335
    %v518 = vunpack.c.h.b16 %v335
    %v519 = vunpack.c.l.b16 %v336
    %v520 = vunpack.c.h.b16 %v336
    %v521 = vunpack.c.l.b16 %v337
    %v522 = vunpack.c.h.b16 %v337
    %v523 = vunpack.c.l.b16 %v338
    %v524 = vunpack.c.h.b16 %v338
    %v525 = vunpack.c.l.b16 %v339
    %v526 = vunpack.c.h.b16 %v339
    %v527 = vunpack.c.l.b16 %v340
    %v528 = vunpack.c.h.b16 %v340
    %v529 = vunpack.c.l.b16 %v341
    %v530 = vunpack.c.h.b16 %v341
    %v531 = vunpack.c.l.b16 %v342
    %v532 = vunpack.c.h.b16 %v342
    %v533 = vunpack.c.l.b16 %v343
    %v534 = vunpack.c.h.b16 %v343
    %v535 = vunpack.c.l.b16 %v344
    %v536 = vunpack.c.h.b16 %v344
    %v537 = vunpack.c.l.b16 %v345
    %v538 = vunpack.c.h.b16 %v345
    %v539 = vunpack.c.l.b16 %v346
    %v540 = vunpack.c.h.b16 %v346
    %v541 = vunpack.c.l.b16 %v347
    %v542 = vunpack.c.h.b16 %v347
    %v543 = vunpack.c.l.b16 %v348
    %v544 = vunpack.c.h.b16 %v348
    %v545 = vunpack.c.l.b16 %v349
    %v546 = vunpack.c.h.b16 %v349
    %v547 = vunpack.c.l.b16 %v350
    %v548 = vunpack.c.h.b16 %v350
    %v549 = vunpack.c.l.b16 %v351
    %v550 = vunpack.c.h.b16 %v351
    %v551 = vunpack.c.l.b16 %v352
    %v552 = vunpack.c.h.b16 %v352
    %v553 = vunpack.c.l.b16 %v353
    %v554 = vunpack.c.h.b16 %v353
    %v555 = vunpack.c.l.b16 %v354
    %v556 = vunpack.c.h.b16 %v354
    %v557 = vunpack.c.l.b16 %v355
    %v558 = vunpack.c.h.b16 %v355
    %v559 = vunpack.c.l.b16 %v356
    %v560 = vunpack.c.h.b16 %v356
    %v561 = vunpack.c.l.b16 %v357
    %v562 = vunpack.c.h.b16 %v357
    %v563 = vunpack.c.l.b16 %v358
    %v564 = vunpack.c.h.b16 %v358
    %v565 = vunpack.c.l.b16 %v359
    %v566 = vunpack.c.h.b16 %v359
    %v567 = vunpack.c.l.b16 %v360
    %v568 = vunpack.c.h.b16 %v360
    %v569 = vunpack.c.l.b16 %v361
    %v570 = vunpack.c.h.b16 %v361
    %v571 = vunpack.c.l.b16 %v362
    %v572 = vunpack.c.h.b16 %v362
    %v573 = vunpack.c.l.b16 %v363
    %v574 = vunpack.c.h.b16 %v363
    %v575 = vunpack.c.l.b16 %v364
    %v576 = vunpack.c.h.b16 %v364
    %v577 = vunpack.c.l.b16 %v365
    %v578 = vunpack.c.h.b16 %v365
    %v579 = vunpack.c.l.b16 %v366
    %v580 = vunpack.c.h.b16 %v366
    %v581 = vpack.c.b16 %v457, %v453
    %v582 = vpack.c.b16 %v458, %v454
    %v583 = vpack.c.b16 %v459, %v455
    %v584 = vpack.c.b16 %v460, %v456
    %v585 = vpack.c.b16 %v465, %v461
    %v586 = vpack.c.b16 %v466, %v462
    %v587 = vpack.c.b16 %v467, %v463
    %v588 = vpack.c.b16 %v468, %v464
    %v589 = vpack.c.b16 %v473, %v469
    %v590 = vpack.c.b16 %v474, %v470
    %v591 = vpack.c.b16 %v475, %v471
    %v592 = vpack.c.b16 %v476, %v472
    %v593 = vpack.c.b16 %v481, %v477
    %v594 = vpack.c.b16 %v482, %v478
    %v595 = vpack.c.b16 %v483, %v479
    %v596 = vpack.c.b16 %v484, %v480
    %v597 = vpack.c.b16 %v489, %v485
    %v598 = vpack.c.b16 %v490, %v486
    %v599 = vpack.c.b16 %v491, %v487
    %v600 = vpack.c.b16 %v492, %v488
    %v601 = vpack.c.b16 %v497, %v493
    %v602 = vpack.c.b16 %v498, %v494
    %v603 = vpack.c.b16 %v499, %v495
    %v604 = vpack.c.b16 %v500, %v496
    %v605 = vpack.c.b16 %v505, %v501
    %v606 = vpack.c.b16 %v506, %v502
    %v607 = vpack.c.b16 %v507, %v503
    %v608 = vpack.c.b16 %v508, %v504
    %v609 = vpack.c.b16 %v513, %v509
    %v610 = vpack.c.b16 %v514, %v510
    %v611 = vpack.c.b16 %v515, %v511
    %v612 = vpack.c.b16 %v516, %v512
    %v613 = vpack.c.b16 %v521, %v517
    %v614 = vpack.c.b16 %v522, %v518
    %v615 = vpack.c.b16 %v523, %v519
    %v616 = vpack.c.b16 %v524, %v520
    %v617 = vpack.c.b16 %v529, %v525
    %v618 = vpack.c.b16 %v530, %v526
    %v619 = vpack.c.b16 %v531, %v527
    %v620 = vpack.c.b16 %v532, %v528
    %v621 = vpack.c.b16 %v537, %v533
    %v622 = vpack.c.b16 %v538, %v534
    %v623 = vpack.c.b16 %v539, %v535
    %v624 = vpack.c.b16 %v540, %v536
    %v625 = vpack.c.b16 %v545, %v541
    %v626 = vpack.c.b16 %v546, %v542
    %v627 = vpack.c.b16 %v547, %v543
    %v628 = vpack.c.b16 %v548, %v544
    %v629 = vpack.c.b16 %v553, %v549
    %v630 = vpack.c.b16 %v554, %v550
    %v631 = vpack.c.b16 %v555, %v551
    %v632 = vpack.c.b16 %v556, %v552
    %v633 = vpack.c.b16 %v561, %v557
    %v634 = vpack.c.b16 %v562, %v558
    %v635 = vpack.c.b16 %v563, %v559
    %v636 = vpack.c.b16 %v564, %v560
    %v637 = vpack.c.b16 %v569, %v565
    %v638 = vpack.c.b16 %v570, %v566
    %v639 = vpack.c.b16 %v571, %v567
    %v640 = vpack.c.b16 %v572, %v568
    %v641 = vpack.c.b16 %v577, %v573
    %v642 = vpack.c.b16 %v578, %v574
    %v643 = vpack.c.b16 %v579, %v575
    %v644 = vpack.c.b16 %v580, %v576
    %709 = vmatprep.subr.bf16.mxu0 %v582
    %710 = vmatpush1.bf16.msra.mxu0 %v581
    %711 = vmatprep.subr.bf16.mxu0 %v586
    %712 = vmatpush1.bf16.msra.mxu0 %v585
    %713 = vmatprep.subr.bf16.mxu0 %v590
    %714 = vmatpush1.bf16.msra.mxu0 %v589
    %715 = vmatprep.subr.bf16.mxu0 %v594
    %716 = vmatpush1.bf16.msra.mxu0 %v593
    %717 = vmatprep.subr.bf16.mxu0 %v598
    %718 = vmatpush1.bf16.msra.mxu0 %v597
    %719 = vmatprep.subr.bf16.mxu0 %v602
    %720 = vmatpush1.bf16.msra.mxu0 %v601
    %721 = vmatprep.subr.bf16.mxu0 %v606
    %722 = vmatpush1.bf16.msra.mxu0 %v605
    %723 = vmatprep.subr.bf16.mxu0 %v610
    %724 = vmatpush1.bf16.msra.mxu0 %v609
    %725 = vmatprep.subr.bf16.mxu0 %v614
    %726 = vmatpush1.bf16.msra.mxu0 %v613
    %727 = vmatprep.subr.bf16.mxu0 %v618
    %728 = vmatpush1.bf16.msra.mxu0 %v617
    %729 = vmatprep.subr.bf16.mxu0 %v622
    %730 = vmatpush1.bf16.msra.mxu0 %v621
    %731 = vmatprep.subr.bf16.mxu0 %v626
    %732 = vmatpush1.bf16.msra.mxu0 %v625
    %733 = vmatprep.subr.bf16.mxu0 %v630
    %734 = vmatpush1.bf16.msra.mxu0 %v629
    %735 = vmatprep.subr.bf16.mxu0 %v634
    %736 = vmatpush1.bf16.msra.mxu0 %v633
    %737 = vmatprep.subr.bf16.mxu0 %v638
    %738 = vmatpush1.bf16.msra.mxu0 %v637
    %739 = vmatprep.subr.bf16.mxu0 %v642
    %740 = vmatpush1.bf16.msra.mxu0 %v641
    %741 = vmatprep.mubr.bf16.mxu0 %v302
    %742 = vmatmul.mubr.bf16.gmra.mrb[0].mxu0 %v301
    %v743 = vpop.f32.mrb[0].mxu0
    %v744 = vadd.f32 %v372, %v743
    %v745 = vpop.f32.mrb[0].mxu0
    %v746 = vadd.f32 %v376, %v745
    %v747 = vpop.f32.mrb[0].mxu0
    %v748 = vadd.f32 %v372, %v747
    %v749 = vpop.f32.mrb[0].mxu0
    %v750 = vadd.f32 %v376, %v749
    %751 = vdwg.mxu0
    %752 = vmatprep.subr.bf16.mxu0 %v584
    %753 = vmatpush1.bf16.msra.mxu0 %v583
    %754 = vmatprep.subr.bf16.mxu0 %v588
    %755 = vmatpush1.bf16.msra.mxu0 %v587
    %756 = vmatprep.subr.bf16.mxu0 %v592
    %757 = vmatpush1.bf16.msra.mxu0 %v591
    %758 = vmatprep.subr.bf16.mxu0 %v596
    %759 = vmatpush1.bf16.msra.mxu0 %v595
    %760 = vmatprep.subr.bf16.mxu0 %v600
    %761 = vmatpush1.bf16.msra.mxu0 %v599
    %762 = vmatprep.subr.bf16.mxu0 %v604
    %763 = vmatpush1.bf16.msra.mxu0 %v603
    %764 = vmatprep.subr.bf16.mxu0 %v608
    %765 = vmatpush1.bf16.msra.mxu0 %v607
    %766 = vmatprep.subr.bf16.mxu0 %v612
    %767 = vmatpush1.bf16.msra.mxu0 %v611
    %768 = vmatprep.subr.bf16.mxu0 %v616
    %769 = vmatpush1.bf16.msra.mxu0 %v615
    %770 = vmatprep.subr.bf16.mxu0 %v620
    %771 = vmatpush1.bf16.msra.mxu0 %v619
    %772 = vmatprep.subr.bf16.mxu0 %v624
    %773 = vmatpush1.bf16.msra.mxu0 %v623
    %774 = vmatprep.subr.bf16.mxu0 %v628
    %775 = vmatpush1.bf16.msra.mxu0 %v627
    %776 = vmatprep.subr.bf16.mxu0 %v632
    %777 = vmatpush1.bf16.msra.mxu0 %v631
    %778 = vmatprep.subr.bf16.mxu0 %v636
    %779 = vmatpush1.bf16.msra.mxu0 %v635
    %780 = vmatprep.subr.bf16.mxu0 %v640
    %781 = vmatpush1.bf16.msra.mxu0 %v639
    %782 = vmatprep.subr.bf16.mxu0 %v644
    %783 = vmatpush1.bf16.msra.mxu0 %v643
    %784 = vmatprep.mubr.bf16.mxu0 %v302
    %785 = vmatmul.mubr.bf16.gmra.mrb[0].mxu0 %v301
    %v786 = vpop.f32.mrb[0].mxu0
    %v787 = vadd.f32 %v380, %v786
    %v788 = vpop.f32.mrb[0].mxu0
    %v789 = vadd.f32 %v384, %v788
    %v790 = vpop.f32.mrb[0].mxu0
    %v791 = vadd.f32 %v380, %v790
    %v792 = vpop.f32.mrb[0].mxu0
    %v793 = vadd.f32 %v384, %v792
    %794 = vdwg.mxu0
    %v795 = vmul.f32 %v744, 0.2
    %v796 = vmul.f32 %v746, 0.2
    %v797 = vmul.f32 %v787, 0.2
    %v798 = vmul.f32 %v789, 0.2
    %v799 = vmul.f32 %v748, 0.2
    %v800 = vmul.f32 %v750, 0.2
    %v801 = vmul.f32 %v791, 0.2
    %v802 = vmul.f32 %v793, 0.2
    %v803 = vmax.f32 %v744, %v795
    %v804 = vmax.f32 %v746, %v796
    %v805 = vmax.f32 %v787, %v797
    %v806 = vmax.f32 %v789, %v798
    %v807 = vmax.f32 %v748, %v799
    %v808 = vmax.f32 %v750, %v800
    %v809 = vmax.f32 %v791, %v801
    %v810 = vmax.f32 %v793, %v802
    %v811 = vpack.c.bf16 %v807, %v803
    %v812 = vpack.c.bf16 %v808, %v804
    %v813 = vpack.c.bf16 %v809, %v805
    %v814 = vpack.c.bf16 %v810, %v806
    %v815 = vld [vmem:[#allocation9] sm:$0xff]
    %v816 = vld [vmem:[#allocation9 + $0x8] sm:$0xff]
    %v817 = vld [vmem:[#allocation9 + $0x10] sm:$0xff]
    %v818 = vld [vmem:[#allocation9 + $0x18] sm:$0xff]
    %v819 = vld [vmem:[#allocation9 + $0x20] sm:$0xff]
    %v820 = vld [vmem:[#allocation9 + $0x28] sm:$0xff]
    %v821 = vld [vmem:[#allocation9 + $0x30] sm:$0xff]
    %v822 = vld [vmem:[#allocation9 + $0x38] sm:$0xff]
    %v823 = vld [vmem:[#allocation9 + $0x40] sm:$0xff]
    %v824 = vld [vmem:[#allocation9 + $0x48] sm:$0xff]
    %v825 = vld [vmem:[#allocation9 + $0x50] sm:$0xff]
    %v826 = vld [vmem:[#allocation9 + $0x58] sm:$0xff]
    %v827 = vld [vmem:[#allocation9 + $0x60] sm:$0xff]
    %v828 = vld [vmem:[#allocation9 + $0x68] sm:$0xff]
    %v829 = vld [vmem:[#allocation9 + $0x70] sm:$0xff]
    %v830 = vld [vmem:[#allocation9 + $0x78] sm:$0xff]
    %v831 = vld [vmem:[#allocation9 + $0x80] sm:$0xff]
    %v832 = vld [vmem:[#allocation9 + $0x88] sm:$0xff]
    %v833 = vld [vmem:[#allocation9 + $0x90] sm:$0xff]
    %v834 = vld [vmem:[#allocation9 + $0x98] sm:$0xff]
    %v835 = vld [vmem:[#allocation9 + $0xa0] sm:$0xff]
    %v836 = vld [vmem:[#allocation9 + $0xa8] sm:$0xff]
    %v837 = vld [vmem:[#allocation9 + $0xb0] sm:$0xff]
    %v838 = vld [vmem:[#allocation9 + $0xb8] sm:$0xff]
    %v839 = vld [vmem:[#allocation9 + $0xc0] sm:$0xff]
    %v840 = vld [vmem:[#allocation9 + $0xc8] sm:$0xff]
    %v841 = vld [vmem:[#allocation9 + $0xd0] sm:$0xff]
    %v842 = vld [vmem:[#allocation9 + $0xd8] sm:$0xff]
    %v843 = vld [vmem:[#allocation9 + $0xe0] sm:$0xff]
    %v844 = vld [vmem:[#allocation9 + $0xe8] sm:$0xff]
    %v845 = vld [vmem:[#allocation9 + $0xf0] sm:$0xff]
    %v846 = vld [vmem:[#allocation9 + $0xf8] sm:$0xff]
    %v847 = vld [vmem:[#allocation9 + $0x100] sm:$0xff]
    %v848 = vld [vmem:[#allocation9 + $0x108] sm:$0xff]
    %v849 = vld [vmem:[#allocation9 + $0x110] sm:$0xff]
    %v850 = vld [vmem:[#allocation9 + $0x118] sm:$0xff]
    %v851 = vld [vmem:[#allocation9 + $0x120] sm:$0xff]
    %v852 = vld [vmem:[#allocation9 + $0x128] sm:$0xff]
    %v853 = vld [vmem:[#allocation9 + $0x130] sm:$0xff]
    %v854 = vld [vmem:[#allocation9 + $0x138] sm:$0xff]
    %v855 = vld [vmem:[#allocation9 + $0x140] sm:$0xff]
    %v856 = vld [vmem:[#allocation9 + $0x148] sm:$0xff]
    %v857 = vld [vmem:[#allocation9 + $0x150] sm:$0xff]
    %v858 = vld [vmem:[#allocation9 + $0x158] sm:$0xff]
    %v859 = vld [vmem:[#allocation9 + $0x160] sm:$0xff]
    %v860 = vld [vmem:[#allocation9 + $0x168] sm:$0xff]
    %v861 = vld [vmem:[#allocation9 + $0x170] sm:$0xff]
    %v862 = vld [vmem:[#allocation9 + $0x178] sm:$0xff]
    %v863 = vld [vmem:[#allocation9 + $0x180] sm:$0xff]
    %v864 = vld [vmem:[#allocation9 + $0x188] sm:$0xff]
    %v865 = vld [vmem:[#allocation9 + $0x190] sm:$0xff]
    %v866 = vld [vmem:[#allocation9 + $0x198] sm:$0xff]
    %v867 = vld [vmem:[#allocation9 + $0x1a0] sm:$0xff]
    %v868 = vld [vmem:[#allocation9 + $0x1a8] sm:$0xff]
    %v869 = vld [vmem:[#allocation9 + $0x1b0] sm:$0xff]
    %v870 = vld [vmem:[#allocation9 + $0x1b8] sm:$0xff]
    %v871 = vld [vmem:[#allocation9 + $0x1c0] sm:$0xff]
    %v872 = vld [vmem:[#allocation9 + $0x1c8] sm:$0xff]
    %v873 = vld [vmem:[#allocation9 + $0x1d0] sm:$0xff]
    %v874 = vld [vmem:[#allocation9 + $0x1d8] sm:$0xff]
    %v875 = vld [vmem:[#allocation9 + $0x1e0] sm:$0xff]
    %v876 = vld [vmem:[#allocation9 + $0x1e8] sm:$0xff]
    %v877 = vld [vmem:[#allocation9 + $0x1f0] sm:$0xff]
    %v878 = vld [vmem:[#allocation9 + $0x1f8] sm:$0xff]
    %v879 = vld [vmem:[#allocation9 + $0x200] sm:$0xff]
    %v880 = vld [vmem:[#allocation9 + $0x208] sm:$0xff]
    %v881 = vld [vmem:[#allocation9 + $0x210] sm:$0xff]
    %v882 = vld [vmem:[#allocation9 + $0x218] sm:$0xff]
    %v883 = vld [vmem:[#allocation9 + $0x220] sm:$0xff]
    %v884 = vld [vmem:[#allocation9 + $0x228] sm:$0xff]
    %v885 = vld [vmem:[#allocation9 + $0x230] sm:$0xff]
    %v886 = vld [vmem:[#allocation9 + $0x238] sm:$0xff]
    %v887 = vld [vmem:[#allocation9 + $0x240] sm:$0xff]
    %v888 = vld [vmem:[#allocation9 + $0x248] sm:$0xff]
    %v889 = vld [vmem:[#allocation9 + $0x250] sm:$0xff]
    %v890 = vld [vmem:[#allocation9 + $0x258] sm:$0xff]
    %v891 = vld [vmem:[#allocation9 + $0x260] sm:$0xff]
    %v892 = vld [vmem:[#allocation9 + $0x268] sm:$0xff]
    %v893 = vld [vmem:[#allocation9 + $0x270] sm:$0xff]
    %v894 = vld [vmem:[#allocation9 + $0x278] sm:$0xff]
    %v895 = vld [vmem:[#allocation9 + $0x280] sm:$0xff]
    %v896 = vld [vmem:[#allocation9 + $0x288] sm:$0xff]
    %v897 = vld [vmem:[#allocation9 + $0x290] sm:$0xff]
    %v898 = vld [vmem:[#allocation9 + $0x298] sm:$0xff]
    %v899 = vld [vmem:[#allocation9 + $0x2a0] sm:$0xff]
    %v900 = vld [vmem:[#allocation9 + $0x2a8] sm:$0xff]
    %v901 = vld [vmem:[#allocation9 + $0x2b0] sm:$0xff]
    %v902 = vld [vmem:[#allocation9 + $0x2b8] sm:$0xff]
    %v903 = vld [vmem:[#allocation9 + $0x2c0] sm:$0xff]
    %v904 = vld [vmem:[#allocation9 + $0x2c8] sm:$0xff]
    %v905 = vld [vmem:[#allocation9 + $0x2d0] sm:$0xff]
    %v906 = vld [vmem:[#allocation9 + $0x2d8] sm:$0xff]
    %v907 = vld [vmem:[#allocation9 + $0x2e0] sm:$0xff]
    %v908 = vld [vmem:[#allocation9 + $0x2e8] sm:$0xff]
    %v909 = vld [vmem:[#allocation9 + $0x2f0] sm:$0xff]
    %v910 = vld [vmem:[#allocation9 + $0x2f8] sm:$0xff]
    %v911 = vld [vmem:[#allocation9 + $0x300] sm:$0xff]
    %v912 = vld [vmem:[#allocation9 + $0x308] sm:$0xff]
    %v913 = vld [vmem:[#allocation9 + $0x310] sm:$0xff]
    %v914 = vld [vmem:[#allocation9 + $0x318] sm:$0xff]
    %v915 = vld [vmem:[#allocation9 + $0x320] sm:$0xff]
    %v916 = vld [vmem:[#allocation9 + $0x328] sm:$0xff]
    %v917 = vld [vmem:[#allocation9 + $0x330] sm:$0xff]
    %v918 = vld [vmem:[#allocation9 + $0x338] sm:$0xff]
    %v919 = vld [vmem:[#allocation9 + $0x340] sm:$0xff]
    %v920 = vld [vmem:[#allocation9 + $0x348] sm:$0xff]
    %v921 = vld [vmem:[#allocation9 + $0x350] sm:$0xff]
    %v922 = vld [vmem:[#allocation9 + $0x358] sm:$0xff]
    %v923 = vld [vmem:[#allocation9 + $0x360] sm:$0xff]
    %v924 = vld [vmem:[#allocation9 + $0x368] sm:$0xff]
    %v925 = vld [vmem:[#allocation9 + $0x370] sm:$0xff]
    %v926 = vld [vmem:[#allocation9 + $0x378] sm:$0xff]
    %v927 = vld [vmem:[#allocation9 + $0x380] sm:$0xff]
    %v928 = vld [vmem:[#allocation9 + $0x388] sm:$0xff]
    %v929 = vld [vmem:[#allocation9 + $0x390] sm:$0xff]
    %v930 = vld [vmem:[#allocation9 + $0x398] sm:$0xff]
    %v931 = vld [vmem:[#allocation9 + $0x3a0] sm:$0xff]
    %v932 = vld [vmem:[#allocation9 + $0x3a8] sm:$0xff]
    %v933 = vld [vmem:[#allocation9 + $0x3b0] sm:$0xff]
    %v934 = vld [vmem:[#allocation9 + $0x3b8] sm:$0xff]
    %v935 = vld [vmem:[#allocation9 + $0x3c0] sm:$0xff]
    %v936 = vld [vmem:[#allocation9 + $0x3c8] sm:$0xff]
    %v937 = vld [vmem:[#allocation9 + $0x3d0] sm:$0xff]
    %v938 = vld [vmem:[#allocation9 + $0x3d8] sm:$0xff]
    %v939 = vld [vmem:[#allocation9 + $0x3e0] sm:$0xff]
    %v940 = vld [vmem:[#allocation9 + $0x3e8] sm:$0xff]
    %v941 = vld [vmem:[#allocation9 + $0x3f0] sm:$0xff]
    %v942 = vld [vmem:[#allocation9 + $0x3f8] sm:$0xff]
    %v943 = vld [vmem:[#allocation9 + $0x400] sm:$0xff]
    %v944 = vld [vmem:[#allocation9 + $0x408] sm:$0xff]
    %v945 = vld [vmem:[#allocation9 + $0x410] sm:$0xff]
    %v946 = vld [vmem:[#allocation9 + $0x418] sm:$0xff]
    %v947 = vld [vmem:[#allocation9 + $0x420] sm:$0xff]
    %v948 = vld [vmem:[#allocation9 + $0x428] sm:$0xff]
    %v949 = vld [vmem:[#allocation9 + $0x430] sm:$0xff]
    %v950 = vld [vmem:[#allocation9 + $0x438] sm:$0xff]
    %v951 = vld [vmem:[#allocation9 + $0x440] sm:$0xff]
    %v952 = vld [vmem:[#allocation9 + $0x448] sm:$0xff]
    %v953 = vld [vmem:[#allocation9 + $0x450] sm:$0xff]
    %v954 = vld [vmem:[#allocation9 + $0x458] sm:$0xff]
    %v955 = vld [vmem:[#allocation9 + $0x460] sm:$0xff]
    %v956 = vld [vmem:[#allocation9 + $0x468] sm:$0xff]
    %v957 = vld [vmem:[#allocation9 + $0x470] sm:$0xff]
    %v958 = vld [vmem:[#allocation9 + $0x478] sm:$0xff]
    %v959 = vld [vmem:[#allocation9 + $0x480] sm:$0xff]
    %v960 = vld [vmem:[#allocation9 + $0x488] sm:$0xff]
    %v961 = vld [vmem:[#allocation9 + $0x490] sm:$0xff]
    %v962 = vld [vmem:[#allocation9 + $0x498] sm:$0xff]
    %v963 = vld [vmem:[#allocation9 + $0x4a0] sm:$0xff]
    %v964 = vld [vmem:[#allocation9 + $0x4a8] sm:$0xff]
    %v965 = vld [vmem:[#allocation9 + $0x4b0] sm:$0xff]
    %v966 = vld [vmem:[#allocation9 + $0x4b8] sm:$0xff]
    %v967 = vld [vmem:[#allocation9 + $0x4c0] sm:$0xff]
    %v968 = vld [vmem:[#allocation9 + $0x4c8] sm:$0xff]
    %v969 = vld [vmem:[#allocation9 + $0x4d0] sm:$0xff]
    %v970 = vld [vmem:[#allocation9 + $0x4d8] sm:$0xff]
    %v971 = vld [vmem:[#allocation9 + $0x4e0] sm:$0xff]
    %v972 = vld [vmem:[#allocation9 + $0x4e8] sm:$0xff]
    %v973 = vld [vmem:[#allocation9 + $0x4f0] sm:$0xff]
    %v974 = vld [vmem:[#allocation9 + $0x4f8] sm:$0xff]
    %v975 = vld [vmem:[#allocation9 + $0x500] sm:$0xff]
    %v976 = vld [vmem:[#allocation9 + $0x508] sm:$0xff]
    %v977 = vld [vmem:[#allocation9 + $0x510] sm:$0xff]
    %v978 = vld [vmem:[#allocation9 + $0x518] sm:$0xff]
    %v979 = vld [vmem:[#allocation9 + $0x520] sm:$0xff]
    %v980 = vld [vmem:[#allocation9 + $0x528] sm:$0xff]
    %v981 = vld [vmem:[#allocation9 + $0x530] sm:$0xff]
    %v982 = vld [vmem:[#allocation9 + $0x538] sm:$0xff]
    %v983 = vld [vmem:[#allocation9 + $0x540] sm:$0xff]
    %v984 = vld [vmem:[#allocation9 + $0x548] sm:$0xff]
    %v985 = vld [vmem:[#allocation9 + $0x550] sm:$0xff]
    %v986 = vld [vmem:[#allocation9 + $0x558] sm:$0xff]
    %v987 = vld [vmem:[#allocation9 + $0x560] sm:$0xff]
    %v988 = vld [vmem:[#allocation9 + $0x568] sm:$0xff]
    %v989 = vld [vmem:[#allocation9 + $0x570] sm:$0xff]
    %v990 = vld [vmem:[#allocation9 + $0x578] sm:$0xff]
    %v991 = vld [vmem:[#allocation9 + $0x580] sm:$0xff]
    %v992 = vld [vmem:[#allocation9 + $0x588] sm:$0xff]
    %v993 = vld [vmem:[#allocation9 + $0x590] sm:$0xff]
    %v994 = vld [vmem:[#allocation9 + $0x598] sm:$0xff]
    %v995 = vld [vmem:[#allocation9 + $0x5a0] sm:$0xff]
    %v996 = vld [vmem:[#allocation9 + $0x5a8] sm:$0xff]
    %v997 = vld [vmem:[#allocation9 + $0x5b0] sm:$0xff]
    %v998 = vld [vmem:[#allocation9 + $0x5b8] sm:$0xff]
    %v999 = vld [vmem:[#allocation9 + $0x5c0] sm:$0xff]
    %v1000 = vld [vmem:[#allocation9 + $0x5c8] sm:$0xff]
    %v1001 = vld [vmem:[#allocation9 + $0x5d0] sm:$0xff]
    %v1002 = vld [vmem:[#allocation9 + $0x5d8] sm:$0xff]
    %v1003 = vld [vmem:[#allocation9 + $0x5e0] sm:$0xff]
    %v1004 = vld [vmem:[#allocation9 + $0x5e8] sm:$0xff]
    %v1005 = vld [vmem:[#allocation9 + $0x5f0] sm:$0xff]
    %v1006 = vld [vmem:[#allocation9 + $0x5f8] sm:$0xff]
    %v1007 = vld [vmem:[#allocation9 + $0x600] sm:$0xff]
    %v1008 = vld [vmem:[#allocation9 + $0x608] sm:$0xff]
    %v1009 = vld [vmem:[#allocation9 + $0x610] sm:$0xff]
    %v1010 = vld [vmem:[#allocation9 + $0x618] sm:$0xff]
    %v1011 = vld [vmem:[#allocation9 + $0x620] sm:$0xff]
    %v1012 = vld [vmem:[#allocation9 + $0x628] sm:$0xff]
    %v1013 = vld [vmem:[#allocation9 + $0x630] sm:$0xff]
    %v1014 = vld [vmem:[#allocation9 + $0x638] sm:$0xff]
    %v1015 = vld [vmem:[#allocation9 + $0x640] sm:$0xff]
    %v1016 = vld [vmem:[#allocation9 + $0x648] sm:$0xff]
    %v1017 = vld [vmem:[#allocation9 + $0x650] sm:$0xff]
    %v1018 = vld [vmem:[#allocation9 + $0x658] sm:$0xff]
    %v1019 = vld [vmem:[#allocation9 + $0x660] sm:$0xff]
    %v1020 = vld [vmem:[#allocation9 + $0x668] sm:$0xff]
    %v1021 = vld [vmem:[#allocation9 + $0x670] sm:$0xff]
    %v1022 = vld [vmem:[#allocation9 + $0x678] sm:$0xff]
    %v1023 = vld [vmem:[#allocation9 + $0x680] sm:$0xff]
    %v1024 = vld [vmem:[#allocation9 + $0x688] sm:$0xff]
    %v1025 = vld [vmem:[#allocation9 + $0x690] sm:$0xff]
    %v1026 = vld [vmem:[#allocation9 + $0x698] sm:$0xff]
    %v1027 = vld [vmem:[#allocation9 + $0x6a0] sm:$0xff]
    %v1028 = vld [vmem:[#allocation9 + $0x6a8] sm:$0xff]
    %v1029 = vld [vmem:[#allocation9 + $0x6b0] sm:$0xff]
    %v1030 = vld [vmem:[#allocation9 + $0x6b8] sm:$0xff]
    %v1031 = vld [vmem:[#allocation9 + $0x6c0] sm:$0xff]
    %v1032 = vld [vmem:[#allocation9 + $0x6c8] sm:$0xff]
    %v1033 = vld [vmem:[#allocation9 + $0x6d0] sm:$0xff]
    %v1034 = vld [vmem:[#allocation9 + $0x6d8] sm:$0xff]
    %v1035 = vld [vmem:[#allocation9 + $0x6e0] sm:$0xff]
    %v1036 = vld [vmem:[#allocation9 + $0x6e8] sm:$0xff]
    %v1037 = vld [vmem:[#allocation9 + $0x6f0] sm:$0xff]
    %v1038 = vld [vmem:[#allocation9 + $0x6f8] sm:$0xff]
    %v1039 = vld [vmem:[#allocation9 + $0x700] sm:$0xff]
    %v1040 = vld [vmem:[#allocation9 + $0x708] sm:$0xff]
    %v1041 = vld [vmem:[#allocation9 + $0x710] sm:$0xff]
    %v1042 = vld [vmem:[#allocation9 + $0x718] sm:$0xff]
    %v1043 = vld [vmem:[#allocation9 + $0x720] sm:$0xff]
    %v1044 = vld [vmem:[#allocation9 + $0x728] sm:$0xff]
    %v1045 = vld [vmem:[#allocation9 + $0x730] sm:$0xff]
    %v1046 = vld [vmem:[#allocation9 + $0x738] sm:$0xff]
    %v1047 = vld [vmem:[#allocation9 + $0x740] sm:$0xff]
    %v1048 = vld [vmem:[#allocation9 + $0x748] sm:$0xff]
    %v1049 = vld [vmem:[#allocation9 + $0x750] sm:$0xff]
    %v1050 = vld [vmem:[#allocation9 + $0x758] sm:$0xff]
    %v1051 = vld [vmem:[#allocation9 + $0x760] sm:$0xff]
    %v1052 = vld [vmem:[#allocation9 + $0x768] sm:$0xff]
    %v1053 = vld [vmem:[#allocation9 + $0x770] sm:$0xff]
    %v1054 = vld [vmem:[#allocation9 + $0x778] sm:$0xff]
    %v1055 = vld [vmem:[#allocation9 + $0x780] sm:$0xff]
    %v1056 = vld [vmem:[#allocation9 + $0x788] sm:$0xff]
    %v1057 = vld [vmem:[#allocation9 + $0x790] sm:$0xff]
    %v1058 = vld [vmem:[#allocation9 + $0x798] sm:$0xff]
    %v1059 = vld [vmem:[#allocation9 + $0x7a0] sm:$0xff]
    %v1060 = vld [vmem:[#allocation9 + $0x7a8] sm:$0xff]
    %v1061 = vld [vmem:[#allocation9 + $0x7b0] sm:$0xff]
    %v1062 = vld [vmem:[#allocation9 + $0x7b8] sm:$0xff]
    %v1063 = vld [vmem:[#allocation9 + $0x7c0] sm:$0xff]
    %v1064 = vld [vmem:[#allocation9 + $0x7c8] sm:$0xff]
    %v1065 = vld [vmem:[#allocation9 + $0x7d0] sm:$0xff]
    %v1066 = vld [vmem:[#allocation9 + $0x7d8] sm:$0xff]
    %v1067 = vld [vmem:[#allocation9 + $0x7e0] sm:$0xff]
    %v1068 = vld [vmem:[#allocation9 + $0x7e8] sm:$0xff]
    %v1069 = vld [vmem:[#allocation9 + $0x7f0] sm:$0xff]
    %v1070 = vld [vmem:[#allocation9 + $0x7f8] sm:$0xff]
    %v1071 = vld [vmem:[#allocation10] sm:$0xff]
    %v1073 = vlaneseq
    %v1074 = vshrl.u32 %v1073, 7
    %v1075 = vsub.s32 0, %v1074
    %v1076 = vrot.slane %v1071, %v1075
    %v1077 = vlaneseq
    %v1078 = vshrl.u32 %v1077, 7
    %v1079 = vsub.s32 1, %v1078
    %v1080 = vrot.slane %v1071, %v1079
    %v1081 = vlaneseq
    %v1082 = vshrl.u32 %v1081, 7
    %v1083 = vsub.s32 2, %v1082
    %v1084 = vrot.slane %v1071, %v1083
    %v1085 = vlaneseq
    %v1086 = vshrl.u32 %v1085, 7
    %v1087 = vsub.s32 3, %v1086
    %v1088 = vrot.slane %v1071, %v1087
    %v1089 = vlaneseq
    %v1090 = vshrl.u32 %v1089, 7
    %v1091 = vsub.s32 4, %v1090
    %v1092 = vrot.slane %v1071, %v1091
    %v1093 = vlaneseq
    %v1094 = vshrl.u32 %v1093, 7
    %v1095 = vsub.s32 5, %v1094
    %v1096 = vrot.slane %v1071, %v1095
    %v1097 = vlaneseq
    %v1098 = vshrl.u32 %v1097, 7
    %v1099 = vsub.s32 6, %v1098
    %v1100 = vrot.slane %v1071, %v1099
    %v1101 = vlaneseq
    %v1102 = vshrl.u32 %v1101, 7
    %v1103 = vsub.s32 7, %v1102
    %v1104 = vrot.slane %v1071, %v1103
    %v1369 = vunpack.c.l.b16 %v815
    %v1370 = vunpack.c.h.b16 %v815
    %v1371 = vunpack.c.l.b16 %v816
    %v1372 = vunpack.c.h.b16 %v816
    %v1373 = vunpack.c.l.b16 %v817
    %v1374 = vunpack.c.h.b16 %v817
    %v1375 = vunpack.c.l.b16 %v818
    %v1376 = vunpack.c.h.b16 %v818
    %v1377 = vunpack.c.l.b16 %v819
    %v1378 = vunpack.c.h.b16 %v819
    %v1379 = vunpack.c.l.b16 %v820
    %v1380 = vunpack.c.h.b16 %v820
    %v1381 = vunpack.c.l.b16 %v821
    %v1382 = vunpack.c.h.b16 %v821
    %v1383 = vunpack.c.l.b16 %v822
    %v1384 = vunpack.c.h.b16 %v822
    %v1385 = vunpack.c.l.b16 %v823
    %v1386 = vunpack.c.h.b16 %v823
    %v1387 = vunpack.c.l.b16 %v824
    %v1388 = vunpack.c.h.b16 %v824
    %v1389 = vunpack.c.l.b16 %v825
    %v1390 = vunpack.c.h.b16 %v825
    %v1391 = vunpack.c.l.b16 %v826
    %v1392 = vunpack.c.h.b16 %v826
    %v1393 = vunpack.c.l.b16 %v827
    %v1394 = vunpack.c.h.b16 %v827
    %v1395 = vunpack.c.l.b16 %v828
    %v1396 = vunpack.c.h.b16 %v828
    %v1397 = vunpack.c.l.b16 %v829
    %v1398 = vunpack.c.h.b16 %v829
    %v1399 = vunpack.c.l.b16 %v830
    %v1400 = vunpack.c.h.b16 %v830
    %v1401 = vunpack.c.l.b16 %v831
    %v1402 = vunpack.c.h.b16 %v831
    %v1403 = vunpack.c.l.b16 %v832
    %v1404 = vunpack.c.h.b16 %v832
    %v1405 = vunpack.c.l.b16 %v833
    %v1406 = vunpack.c.h.b16 %v833
    %v1407 = vunpack.c.l.b16 %v834
    %v1408 = vunpack.c.h.b16 %v834
    %v1409 = vunpack.c.l.b16 %v835
    %v1410 = vunpack.c.h.b16 %v835
    %v1411 = vunpack.c.l.b16 %v836
    %v1412 = vunpack.c.h.b16 %v836
    %v1413 = vunpack.c.l.b16 %v837
    %v1414 = vunpack.c.h.b16 %v837
    %v1415 = vunpack.c.l.b16 %v838
    %v1416 = vunpack.c.h.b16 %v838
    %v1417 = vunpack.c.l.b16 %v839
    %v1418 = vunpack.c.h.b16 %v839
    %v1419 = vunpack.c.l.b16 %v840
    %v1420 = vunpack.c.h.b16 %v840
    %v1421 = vunpack.c.l.b16 %v841
    %v1422 = vunpack.c.h.b16 %v841
    %v1423 = vunpack.c.l.b16 %v842
    %v1424 = vunpack.c.h.b16 %v842
    %v1425 = vunpack.c.l.b16 %v843
    %v1426 = vunpack.c.h.b16 %v843
    %v1427 = vunpack.c.l.b16 %v844
    %v1428 = vunpack.c.h.b16 %v844
    %v1429 = vunpack.c.l.b16 %v845
    %v1430 = vunpack.c.h.b16 %v845
    %v1431 = vunpack.c.l.b16 %v846
    %v1432 = vunpack.c.h.b16 %v846
    %v1433 = vunpack.c.l.b16 %v847
    %v1434 = vunpack.c.h.b16 %v847
    %v1435 = vunpack.c.l.b16 %v848
    %v1436 = vunpack.c.h.b16 %v848
    %v1437 = vunpack.c.l.b16 %v849
    %v1438 = vunpack.c.h.b16 %v849
    %v1439 = vunpack.c.l.b16 %v850
    %v1440 = vunpack.c.h.b16 %v850
    %v1441 = vunpack.c.l.b16 %v851
    %v1442 = vunpack.c.h.b16 %v851
    %v1443 = vunpack.c.l.b16 %v852
    %v1444 = vunpack.c.h.b16 %v852
    %v1445 = vunpack.c.l.b16 %v853
    %v1446 = vunpack.c.h.b16 %v853
    %v1447 = vunpack.c.l.b16 %v854
    %v1448 = vunpack.c.h.b16 %v854
    %v1449 = vunpack.c.l.b16 %v855
    %v1450 = vunpack.c.h.b16 %v855
    %v1451 = vunpack.c.l.b16 %v856
    %v1452 = vunpack.c.h.b16 %v856
    %v1453 = vunpack.c.l.b16 %v857
    %v1454 = vunpack.c.h.b16 %v857
    %v1455 = vunpack.c.l.b16 %v858
    %v1456 = vunpack.c.h.b16 %v858
    %v1457 = vunpack.c.l.b16 %v859
    %v1458 = vunpack.c.h.b16 %v859
    %v1459 = vunpack.c.l.b16 %v860
    %v1460 = vunpack.c.h.b16 %v860
    %v1461 = vunpack.c.l.b16 %v861
    %v1462 = vunpack.c.h.b16 %v861
    %v1463 = vunpack.c.l.b16 %v862
    %v1464 = vunpack.c.h.b16 %v862
    %v1465 = vunpack.c.l.b16 %v863
    %v1466 = vunpack.c.h.b16 %v863
    %v1467 = vunpack.c.l.b16 %v864
    %v1468 = vunpack.c.h.b16 %v864
    %v1469 = vunpack.c.l.b16 %v865
    %v1470 = vunpack.c.h.b16 %v865
    %v1471 = vunpack.c.l.b16 %v866
    %v1472 = vunpack.c.h.b16 %v866
    %v1473 = vunpack.c.l.b16 %v867
    %v1474 = vunpack.c.h.b16 %v867
    %v1475 = vunpack.c.l.b16 %v868
    %v1476 = vunpack.c.h.b16 %v868
    %v1477 = vunpack.c.l.b16 %v869
    %v1478 = vunpack.c.h.b16 %v869
    %v1479 = vunpack.c.l.b16 %v870
    %v1480 = vunpack.c.h.b16 %v870
    %v1481 = vunpack.c.l.b16 %v871
    %v1482 = vunpack.c.h.b16 %v871
    %v1483 = vunpack.c.l.b16 %v872
    %v1484 = vunpack.c.h.b16 %v872
    %v1485 = vunpack.c.l.b16 %v873
    %v1486 = vunpack.c.h.b16 %v873
    %v1487 = vunpack.c.l.b16 %v874
    %v1488 = vunpack.c.h.b16 %v874
    %v1489 = vunpack.c.l.b16 %v875
    %v1490 = vunpack.c.h.b16 %v875
    %v1491 = vunpack.c.l.b16 %v876
    %v1492 = vunpack.c.h.b16 %v876
    %v1493 = vunpack.c.l.b16 %v877
    %v1494 = vunpack.c.h.b16 %v877
    %v1495 = vunpack.c.l.b16 %v878
    %v1496 = vunpack.c.h.b16 %v878
    %v1497 = vunpack.c.l.b16 %v879
    %v1498 = vunpack.c.h.b16 %v879
    %v1499 = vunpack.c.l.b16 %v880
    %v1500 = vunpack.c.h.b16 %v880
    %v1501 = vunpack.c.l.b16 %v881
    %v1502 = vunpack.c.h.b16 %v881
    %v1503 = vunpack.c.l.b16 %v882
    %v1504 = vunpack.c.h.b16 %v882
    %v1505 = vunpack.c.l.b16 %v883
    %v1506 = vunpack.c.h.b16 %v883
    %v1507 = vunpack.c.l.b16 %v884
    %v1508 = vunpack.c.h.b16 %v884
    %v1509 = vunpack.c.l.b16 %v885
    %v1510 = vunpack.c.h.b16 %v885
    %v1511 = vunpack.c.l.b16 %v886
    %v1512 = vunpack.c.h.b16 %v886
    %v1513 = vunpack.c.l.b16 %v887
    %v1514 = vunpack.c.h.b16 %v887
    %v1515 = vunpack.c.l.b16 %v888
    %v1516 = vunpack.c.h.b16 %v888
    %v1517 = vunpack.c.l.b16 %v889
    %v1518 = vunpack.c.h.b16 %v889
    %v1519 = vunpack.c.l.b16 %v890
    %v1520 = vunpack.c.h.b16 %v890
    %v1521 = vunpack.c.l.b16 %v891
    %v1522 = vunpack.c.h.b16 %v891
    %v1523 = vunpack.c.l.b16 %v892
    %v1524 = vunpack.c.h.b16 %v892
    %v1525 = vunpack.c.l.b16 %v893
    %v1526 = vunpack.c.h.b16 %v893
    %v1527 = vunpack.c.l.b16 %v894
    %v1528 = vunpack.c.h.b16 %v894
    %v1529 = vunpack.c.l.b16 %v895
    %v1530 = vunpack.c.h.b16 %v895
    %v1531 = vunpack.c.l.b16 %v896
    %v1532 = vunpack.c.h.b16 %v896
    %v1533 = vunpack.c.l.b16 %v897
    %v1534 = vunpack.c.h.b16 %v897
    %v1535 = vunpack.c.l.b16 %v898
    %v1536 = vunpack.c.h.b16 %v898
    %v1537 = vunpack.c.l.b16 %v899
    %v1538 = vunpack.c.h.b16 %v899
    %v1539 = vunpack.c.l.b16 %v900
    %v1540 = vunpack.c.h.b16 %v900
    %v1541 = vunpack.c.l.b16 %v901
    %v1542 = vunpack.c.h.b16 %v901
    %v1543 = vunpack.c.l.b16 %v902
    %v1544 = vunpack.c.h.b16 %v902
    %v1545 = vunpack.c.l.b16 %v903
    %v1546 = vunpack.c.h.b16 %v903
    %v1547 = vunpack.c.l.b16 %v904
    %v1548 = vunpack.c.h.b16 %v904
    %v1549 = vunpack.c.l.b16 %v905
    %v1550 = vunpack.c.h.b16 %v905
    %v1551 = vunpack.c.l.b16 %v906
    %v1552 = vunpack.c.h.b16 %v906
    %v1553 = vunpack.c.l.b16 %v907
    %v1554 = vunpack.c.h.b16 %v907
    %v1555 = vunpack.c.l.b16 %v908
    %v1556 = vunpack.c.h.b16 %v908
    %v1557 = vunpack.c.l.b16 %v909
    %v1558 = vunpack.c.h.b16 %v909
    %v1559 = vunpack.c.l.b16 %v910
    %v1560 = vunpack.c.h.b16 %v910
    %v1561 = vunpack.c.l.b16 %v911
    %v1562 = vunpack.c.h.b16 %v911
    %v1563 = vunpack.c.l.b16 %v912
    %v1564 = vunpack.c.h.b16 %v912
    %v1565 = vunpack.c.l.b16 %v913
    %v1566 = vunpack.c.h.b16 %v913
    %v1567 = vunpack.c.l.b16 %v914
    %v1568 = vunpack.c.h.b16 %v914
    %v1569 = vunpack.c.l.b16 %v915
    %v1570 = vunpack.c.h.b16 %v915
    %v1571 = vunpack.c.l.b16 %v916
    %v1572 = vunpack.c.h.b16 %v916
    %v1573 = vunpack.c.l.b16 %v917
    %v1574 = vunpack.c.h.b16 %v917
    %v1575 = vunpack.c.l.b16 %v918
    %v1576 = vunpack.c.h.b16 %v918
    %v1577 = vunpack.c.l.b16 %v919
    %v1578 = vunpack.c.h.b16 %v919
    %v1579 = vunpack.c.l.b16 %v920
    %v1580 = vunpack.c.h.b16 %v920
    %v1581 = vunpack.c.l.b16 %v921
    %v1582 = vunpack.c.h.b16 %v921
    %v1583 = vunpack.c.l.b16 %v922
    %v1584 = vunpack.c.h.b16 %v922
    %v1585 = vunpack.c.l.b16 %v923
    %v1586 = vunpack.c.h.b16 %v923
    %v1587 = vunpack.c.l.b16 %v924
    %v1588 = vunpack.c.h.b16 %v924
    %v1589 = vunpack.c.l.b16 %v925
    %v1590 = vunpack.c.h.b16 %v925
    %v1591 = vunpack.c.l.b16 %v926
    %v1592 = vunpack.c.h.b16 %v926
    %v1593 = vunpack.c.l.b16 %v927
    %v1594 = vunpack.c.h.b16 %v927
    %v1595 = vunpack.c.l.b16 %v928
    %v1596 = vunpack.c.h.b16 %v928
    %v1597 = vunpack.c.l.b16 %v929
    %v1598 = vunpack.c.h.b16 %v929
    %v1599 = vunpack.c.l.b16 %v930
    %v1600 = vunpack.c.h.b16 %v930
    %v1601 = vunpack.c.l.b16 %v931
    %v1602 = vunpack.c.h.b16 %v931
    %v1603 = vunpack.c.l.b16 %v932
    %v1604 = vunpack.c.h.b16 %v932
    %v1605 = vunpack.c.l.b16 %v933
    %v1606 = vunpack.c.h.b16 %v933
    %v1607 = vunpack.c.l.b16 %v934
    %v1608 = vunpack.c.h.b16 %v934
    %v1609 = vunpack.c.l.b16 %v935
    %v1610 = vunpack.c.h.b16 %v935
    %v1611 = vunpack.c.l.b16 %v936
    %v1612 = vunpack.c.h.b16 %v936
    %v1613 = vunpack.c.l.b16 %v937
    %v1614 = vunpack.c.h.b16 %v937
    %v1615 = vunpack.c.l.b16 %v938
    %v1616 = vunpack.c.h.b16 %v938
    %v1617 = vunpack.c.l.b16 %v939
    %v1618 = vunpack.c.h.b16 %v939
    %v1619 = vunpack.c.l.b16 %v940
    %v1620 = vunpack.c.h.b16 %v940
    %v1621 = vunpack.c.l.b16 %v941
    %v1622 = vunpack.c.h.b16 %v941
    %v1623 = vunpack.c.l.b16 %v942
    %v1624 = vunpack.c.h.b16 %v942
    %v1625 = vunpack.c.l.b16 %v943
    %v1626 = vunpack.c.h.b16 %v943
    %v1627 = vunpack.c.l.b16 %v944
    %v1628 = vunpack.c.h.b16 %v944
    %v1629 = vunpack.c.l.b16 %v945
    %v1630 = vunpack.c.h.b16 %v945
    %v1631 = vunpack.c.l.b16 %v946
    %v1632 = vunpack.c.h.b16 %v946
    %v1633 = vunpack.c.l.b16 %v947
    %v1634 = vunpack.c.h.b16 %v947
    %v1635 = vunpack.c.l.b16 %v948
    %v1636 = vunpack.c.h.b16 %v948
    %v1637 = vunpack.c.l.b16 %v949
    %v1638 = vunpack.c.h.b16 %v949
    %v1639 = vunpack.c.l.b16 %v950
    %v1640 = vunpack.c.h.b16 %v950
    %v1641 = vunpack.c.l.b16 %v951
    %v1642 = vunpack.c.h.b16 %v951
    %v1643 = vunpack.c.l.b16 %v952
    %v1644 = vunpack.c.h.b16 %v952
    %v1645 = vunpack.c.l.b16 %v953
    %v1646 = vunpack.c.h.b16 %v953
    %v1647 = vunpack.c.l.b16 %v954
    %v1648 = vunpack.c.h.b16 %v954
    %v1649 = vunpack.c.l.b16 %v955
    %v1650 = vunpack.c.h.b16 %v955
    %v1651 = vunpack.c.l.b16 %v956
    %v1652 = vunpack.c.h.b16 %v956
    %v1653 = vunpack.c.l.b16 %v957
    %v1654 = vunpack.c.h.b16 %v957
    %v1655 = vunpack.c.l.b16 %v958
    %v1656 = vunpack.c.h.b16 %v958
    %v1657 = vunpack.c.l.b16 %v959
    %v1658 = vunpack.c.h.b16 %v959
    %v1659 = vunpack.c.l.b16 %v960
    %v1660 = vunpack.c.h.b16 %v960
    %v1661 = vunpack.c.l.b16 %v961
    %v1662 = vunpack.c.h.b16 %v961
    %v1663 = vunpack.c.l.b16 %v962
    %v1664 = vunpack.c.h.b16 %v962
    %v1665 = vunpack.c.l.b16 %v963
    %v1666 = vunpack.c.h.b16 %v963
    %v1667 = vunpack.c.l.b16 %v964
    %v1668 = vunpack.c.h.b16 %v964
    %v1669 = vunpack.c.l.b16 %v965
    %v1670 = vunpack.c.h.b16 %v965
    %v1671 = vunpack.c.l.b16 %v966
    %v1672 = vunpack.c.h.b16 %v966
    %v1673 = vunpack.c.l.b16 %v967
    %v1674 = vunpack.c.h.b16 %v967
    %v1675 = vunpack.c.l.b16 %v968
    %v1676 = vunpack.c.h.b16 %v968
    %v1677 = vunpack.c.l.b16 %v969
    %v1678 = vunpack.c.h.b16 %v969
    %v1679 = vunpack.c.l.b16 %v970
    %v1680 = vunpack.c.h.b16 %v970
    %v1681 = vunpack.c.l.b16 %v971
    %v1682 = vunpack.c.h.b16 %v971
    %v1683 = vunpack.c.l.b16 %v972
    %v1684 = vunpack.c.h.b16 %v972
    %v1685 = vunpack.c.l.b16 %v973
    %v1686 = vunpack.c.h.b16 %v973
    %v1687 = vunpack.c.l.b16 %v974
    %v1688 = vunpack.c.h.b16 %v974
    %v1689 = vunpack.c.l.b16 %v975
    %v1690 = vunpack.c.h.b16 %v975
    %v1691 = vunpack.c.l.b16 %v976
    %v1692 = vunpack.c.h.b16 %v976
    %v1693 = vunpack.c.l.b16 %v977
    %v1694 = vunpack.c.h.b16 %v977
    %v1695 = vunpack.c.l.b16 %v978
    %v1696 = vunpack.c.h.b16 %v978
    %v1697 = vunpack.c.l.b16 %v979
    %v1698 = vunpack.c.h.b16 %v979
    %v1699 = vunpack.c.l.b16 %v980
    %v1700 = vunpack.c.h.b16 %v980
    %v1701 = vunpack.c.l.b16 %v981
    %v1702 = vunpack.c.h.b16 %v981
    %v1703 = vunpack.c.l.b16 %v982
    %v1704 = vunpack.c.h.b16 %v982
    %v1705 = vunpack.c.l.b16 %v983
    %v1706 = vunpack.c.h.b16 %v983
    %v1707 = vunpack.c.l.b16 %v984
    %v1708 = vunpack.c.h.b16 %v984
    %v1709 = vunpack.c.l.b16 %v985
    %v1710 = vunpack.c.h.b16 %v985
    %v1711 = vunpack.c.l.b16 %v986
    %v1712 = vunpack.c.h.b16 %v986
    %v1713 = vunpack.c.l.b16 %v987
    %v1714 = vunpack.c.h.b16 %v987
    %v1715 = vunpack.c.l.b16 %v988
    %v1716 = vunpack.c.h.b16 %v988
    %v1717 = vunpack.c.l.b16 %v989
    %v1718 = vunpack.c.h.b16 %v989
    %v1719 = vunpack.c.l.b16 %v990
    %v1720 = vunpack.c.h.b16 %v990
    %v1721 = vunpack.c.l.b16 %v991
    %v1722 = vunpack.c.h.b16 %v991
    %v1723 = vunpack.c.l.b16 %v992
    %v1724 = vunpack.c.h.b16 %v992
    %v1725 = vunpack.c.l.b16 %v993
    %v1726 = vunpack.c.h.b16 %v993
    %v1727 = vunpack.c.l.b16 %v994
    %v1728 = vunpack.c.h.b16 %v994
    %v1729 = vunpack.c.l.b16 %v995
    %v1730 = vunpack.c.h.b16 %v995
    %v1731 = vunpack.c.l.b16 %v996
    %v1732 = vunpack.c.h.b16 %v996
    %v1733 = vunpack.c.l.b16 %v997
    %v1734 = vunpack.c.h.b16 %v997
    %v1735 = vunpack.c.l.b16 %v998
    %v1736 = vunpack.c.h.b16 %v998
    %v1737 = vunpack.c.l.b16 %v999
    %v1738 = vunpack.c.h.b16 %v999
    %v1739 = vunpack.c.l.b16 %v1000
    %v1740 = vunpack.c.h.b16 %v1000
    %v1741 = vunpack.c.l.b16 %v1001
    %v1742 = vunpack.c.h.b16 %v1001
    %v1743 = vunpack.c.l.b16 %v1002
    %v1744 = vunpack.c.h.b16 %v1002
    %v1745 = vunpack.c.l.b16 %v1003
    %v1746 = vunpack.c.h.b16 %v1003
    %v1747 = vunpack.c.l.b16 %v1004
    %v1748 = vunpack.c.h.b16 %v1004
    %v1749 = vunpack.c.l.b16 %v1005
    %v1750 = vunpack.c.h.b16 %v1005
    %v1751 = vunpack.c.l.b16 %v1006
    %v1752 = vunpack.c.h.b16 %v1006
    %v1753 = vunpack.c.l.b16 %v1007
    %v1754 = vunpack.c.h.b16 %v1007
    %v1755 = vunpack.c.l.b16 %v1008
    %v1756 = vunpack.c.h.b16 %v1008
    %v1757 = vunpack.c.l.b16 %v1009
    %v1758 = vunpack.c.h.b16 %v1009
    %v1759 = vunpack.c.l.b16 %v1010
    %v1760 = vunpack.c.h.b16 %v1010
    %v1761 = vunpack.c.l.b16 %v1011
    %v1762 = vunpack.c.h.b16 %v1011
    %v1763 = vunpack.c.l.b16 %v1012
    %v1764 = vunpack.c.h.b16 %v1012
    %v1765 = vunpack.c.l.b16 %v1013
    %v1766 = vunpack.c.h.b16 %v1013
    %v1767 = vunpack.c.l.b16 %v1014
    %v1768 = vunpack.c.h.b16 %v1014
    %v1769 = vunpack.c.l.b16 %v1015
    %v1770 = vunpack.c.h.b16 %v1015
    %v1771 = vunpack.c.l.b16 %v1016
    %v1772 = vunpack.c.h.b16 %v1016
    %v1773 = vunpack.c.l.b16 %v1017
    %v1774 = vunpack.c.h.b16 %v1017
    %v1775 = vunpack.c.l.b16 %v1018
    %v1776 = vunpack.c.h.b16 %v1018
    %v1777 = vunpack.c.l.b16 %v1019
    %v1778 = vunpack.c.h.b16 %v1019
    %v1779 = vunpack.c.l.b16 %v1020
    %v1780 = vunpack.c.h.b16 %v1020
    %v1781 = vunpack.c.l.b16 %v1021
    %v1782 = vunpack.c.h.b16 %v1021
    %v1783 = vunpack.c.l.b16 %v1022
    %v1784 = vunpack.c.h.b16 %v1022
    %v1785 = vunpack.c.l.b16 %v1023
    %v1786 = vunpack.c.h.b16 %v1023
    %v1787 = vunpack.c.l.b16 %v1024
    %v1788 = vunpack.c.h.b16 %v1024
    %v1789 = vunpack.c.l.b16 %v1025
    %v1790 = vunpack.c.h.b16 %v1025
    %v1791 = vunpack.c.l.b16 %v1026
    %v1792 = vunpack.c.h.b16 %v1026
    %v1793 = vunpack.c.l.b16 %v1027
    %v1794 = vunpack.c.h.b16 %v1027
    %v1795 = vunpack.c.l.b16 %v1028
    %v1796 = vunpack.c.h.b16 %v1028
    %v1797 = vunpack.c.l.b16 %v1029
    %v1798 = vunpack.c.h.b16 %v1029
    %v1799 = vunpack.c.l.b16 %v1030
    %v1800 = vunpack.c.h.b16 %v1030
    %v1801 = vunpack.c.l.b16 %v1031
    %v1802 = vunpack.c.h.b16 %v1031
    %v1803 = vunpack.c.l.b16 %v1032
    %v1804 = vunpack.c.h.b16 %v1032
    %v1805 = vunpack.c.l.b16 %v1033
    %v1806 = vunpack.c.h.b16 %v1033
    %v1807 = vunpack.c.l.b16 %v1034
    %v1808 = vunpack.c.h.b16 %v1034
    %v1809 = vunpack.c.l.b16 %v1035
    %v1810 = vunpack.c.h.b16 %v1035
    %v1811 = vunpack.c.l.b16 %v1036
    %v1812 = vunpack.c.h.b16 %v1036
    %v1813 = vunpack.c.l.b16 %v1037
    %v1814 = vunpack.c.h.b16 %v1037
    %v1815 = vunpack.c.l.b16 %v1038
    %v1816 = vunpack.c.h.b16 %v1038
    %v1817 = vunpack.c.l.b16 %v1039
    %v1818 = vunpack.c.h.b16 %v1039
    %v1819 = vunpack.c.l.b16 %v1040
    %v1820 = vunpack.c.h.b16 %v1040
    %v1821 = vunpack.c.l.b16 %v1041
    %v1822 = vunpack.c.h.b16 %v1041
    %v1823 = vunpack.c.l.b16 %v1042
    %v1824 = vunpack.c.h.b16 %v1042
    %v1825 = vunpack.c.l.b16 %v1043
    %v1826 = vunpack.c.h.b16 %v1043
    %v1827 = vunpack.c.l.b16 %v1044
    %v1828 = vunpack.c.h.b16 %v1044
    %v1829 = vunpack.c.l.b16 %v1045
    %v1830 = vunpack.c.h.b16 %v1045
    %v1831 = vunpack.c.l.b16 %v1046
    %v1832 = vunpack.c.h.b16 %v1046
    %v1833 = vunpack.c.l.b16 %v1047
    %v1834 = vunpack.c.h.b16 %v1047
    %v1835 = vunpack.c.l.b16 %v1048
    %v1836 = vunpack.c.h.b16 %v1048
    %v1837 = vunpack.c.l.b16 %v1049
    %v1838 = vunpack.c.h.b16 %v1049
    %v1839 = vunpack.c.l.b16 %v1050
    %v1840 = vunpack.c.h.b16 %v1050
    %v1841 = vunpack.c.l.b16 %v1051
    %v1842 = vunpack.c.h.b16 %v1051
    %v1843 = vunpack.c.l.b16 %v1052
    %v1844 = vunpack.c.h.b16 %v1052
    %v1845 = vunpack.c.l.b16 %v1053
    %v1846 = vunpack.c.h.b16 %v1053
    %v1847 = vunpack.c.l.b16 %v1054
    %v1848 = vunpack.c.h.b16 %v1054
    %v1849 = vunpack.c.l.b16 %v1055
    %v1850 = vunpack.c.h.b16 %v1055
    %v1851 = vunpack.c.l.b16 %v1056
    %v1852 = vunpack.c.h.b16 %v1056
    %v1853 = vunpack.c.l.b16 %v1057
    %v1854 = vunpack.c.h.b16 %v1057
    %v1855 = vunpack.c.l.b16 %v1058
    %v1856 = vunpack.c.h.b16 %v1058
    %v1857 = vunpack.c.l.b16 %v1059
    %v1858 = vunpack.c.h.b16 %v1059
    %v1859 = vunpack.c.l.b16 %v1060
    %v1860 = vunpack.c.h.b16 %v1060
    %v1861 = vunpack.c.l.b16 %v1061
    %v1862 = vunpack.c.h.b16 %v1061
    %v1863 = vunpack.c.l.b16 %v1062
    %v1864 = vunpack.c.h.b16 %v1062
    %v1865 = vunpack.c.l.b16 %v1063
    %v1866 = vunpack.c.h.b16 %v1063
    %v1867 = vunpack.c.l.b16 %v1064
    %v1868 = vunpack.c.h.b16 %v1064
    %v1869 = vunpack.c.l.b16 %v1065
    %v1870 = vunpack.c.h.b16 %v1065
    %v1871 = vunpack.c.l.b16 %v1066
    %v1872 = vunpack.c.h.b16 %v1066
    %v1873 = vunpack.c.l.b16 %v1067
    %v1874 = vunpack.c.h.b16 %v1067
    %v1875 = vunpack.c.l.b16 %v1068
    %v1876 = vunpack.c.h.b16 %v1068
    %v1877 = vunpack.c.l.b16 %v1069
    %v1878 = vunpack.c.h.b16 %v1069
    %v1879 = vunpack.c.l.b16 %v1070
    %v1880 = vunpack.c.h.b16 %v1070
    %v1881 = vpack.c.b16 %v1377, %v1369
    %v1882 = vpack.c.b16 %v1378, %v1370
    %v1883 = vpack.c.b16 %v1379, %v1371
    %v1884 = vpack.c.b16 %v1380, %v1372
    %v1885 = vpack.c.b16 %v1381, %v1373
    %v1886 = vpack.c.b16 %v1382, %v1374
    %v1887 = vpack.c.b16 %v1383, %v1375
    %v1888 = vpack.c.b16 %v1384, %v1376
    %v1889 = vpack.c.b16 %v1393, %v1385
    %v1890 = vpack.c.b16 %v1394, %v1386
    %v1891 = vpack.c.b16 %v1395, %v1387
    %v1892 = vpack.c.b16 %v1396, %v1388
    %v1893 = vpack.c.b16 %v1397, %v1389
    %v1894 = vpack.c.b16 %v1398, %v1390
    %v1895 = vpack.c.b16 %v1399, %v1391
    %v1896 = vpack.c.b16 %v1400, %v1392
    %v1897 = vpack.c.b16 %v1409, %v1401
    %v1898 = vpack.c.b16 %v1410, %v1402
    %v1899 = vpack.c.b16 %v1411, %v1403
    %v1900 = vpack.c.b16 %v1412, %v1404
    %v1901 = vpack.c.b16 %v1413, %v1405
    %v1902 = vpack.c.b16 %v1414, %v1406
    %v1903 = vpack.c.b16 %v1415, %v1407
    %v1904 = vpack.c.b16 %v1416, %v1408
    %v1905 = vpack.c.b16 %v1425, %v1417
    %v1906 = vpack.c.b16 %v1426, %v1418
    %v1907 = vpack.c.b16 %v1427, %v1419
    %v1908 = vpack.c.b16 %v1428, %v1420
    %v1909 = vpack.c.b16 %v1429, %v1421
    %v1910 = vpack.c.b16 %v1430, %v1422
    %v1911 = vpack.c.b16 %v1431, %v1423
    %v1912 = vpack.c.b16 %v1432, %v1424
    %v1913 = vpack.c.b16 %v1441, %v1433
    %v1914 = vpack.c.b16 %v1442, %v1434
    %v1915 = vpack.c.b16 %v1443, %v1435
    %v1916 = vpack.c.b16 %v1444, %v1436
    %v1917 = vpack.c.b16 %v1445, %v1437
    %v1918 = vpack.c.b16 %v1446, %v1438
    %v1919 = vpack.c.b16 %v1447, %v1439
    %v1920 = vpack.c.b16 %v1448, %v1440
    %v1921 = vpack.c.b16 %v1457, %v1449
    %v1922 = vpack.c.b16 %v1458, %v1450
    %v1923 = vpack.c.b16 %v1459, %v1451
    %v1924 = vpack.c.b16 %v1460, %v1452
    %v1925 = vpack.c.b16 %v1461, %v1453
    %v1926 = vpack.c.b16 %v1462, %v1454
    %v1927 = vpack.c.b16 %v1463, %v1455
    %v1928 = vpack.c.b16 %v1464, %v1456
    %v1929 = vpack.c.b16 %v1473, %v1465
    %v1930 = vpack.c.b16 %v1474, %v1466
    %v1931 = vpack.c.b16 %v1475, %v1467
    %v1932 = vpack.c.b16 %v1476, %v1468
    %v1933 = vpack.c.b16 %v1477, %v1469
    %v1934 = vpack.c.b16 %v1478, %v1470
    %v1935 = vpack.c.b16 %v1479, %v1471
    %v1936 = vpack.c.b16 %v1480, %v1472
    %v1937 = vpack.c.b16 %v1489, %v1481
    %v1938 = vpack.c.b16 %v1490, %v1482
    %v1939 = vpack.c.b16 %v1491, %v1483
    %v1940 = vpack.c.b16 %v1492, %v1484
    %v1941 = vpack.c.b16 %v1493, %v1485
    %v1942 = vpack.c.b16 %v1494, %v1486
    %v1943 = vpack.c.b16 %v1495, %v1487
    %v1944 = vpack.c.b16 %v1496, %v1488
    %v1945 = vpack.c.b16 %v1505, %v1497
    %v1946 = vpack.c.b16 %v1506, %v1498
    %v1947 = vpack.c.b16 %v1507, %v1499
    %v1948 = vpack.c.b16 %v1508, %v1500
    %v1949 = vpack.c.b16 %v1509, %v1501
    %v1950 = vpack.c.b16 %v1510, %v1502
    %v1951 = vpack.c.b16 %v1511, %v1503
    %v1952 = vpack.c.b16 %v1512, %v1504
    %v1953 = vpack.c.b16 %v1521, %v1513
    %v1954 = vpack.c.b16 %v1522, %v1514
    %v1955 = vpack.c.b16 %v1523, %v1515
    %v1956 = vpack.c.b16 %v1524, %v1516
    %v1957 = vpack.c.b16 %v1525, %v1517
    %v1958 = vpack.c.b16 %v1526, %v1518
    %v1959 = vpack.c.b16 %v1527, %v1519
    %v1960 = vpack.c.b16 %v1528, %v1520
    %v1961 = vpack.c.b16 %v1537, %v1529
    %v1962 = vpack.c.b16 %v1538, %v1530
    %v1963 = vpack.c.b16 %v1539, %v1531
    %v1964 = vpack.c.b16 %v1540, %v1532
    %v1965 = vpack.c.b16 %v1541, %v1533
    %v1966 = vpack.c.b16 %v1542, %v1534
    %v1967 = vpack.c.b16 %v1543, %v1535
    %v1968 = vpack.c.b16 %v1544, %v1536
    %v1969 = vpack.c.b16 %v1553, %v1545
    %v1970 = vpack.c.b16 %v1554, %v1546
    %v1971 = vpack.c.b16 %v1555, %v1547
    %v1972 = vpack.c.b16 %v1556, %v1548
    %v1973 = vpack.c.b16 %v1557, %v1549
    %v1974 = vpack.c.b16 %v1558, %v1550
    %v1975 = vpack.c.b16 %v1559, %v1551
    %v1976 = vpack.c.b16 %v1560, %v1552
    %v1977 = vpack.c.b16 %v1569, %v1561
    %v1978 = vpack.c.b16 %v1570, %v1562
    %v1979 = vpack.c.b16 %v1571, %v1563
    %v1980 = vpack.c.b16 %v1572, %v1564
    %v1981 = vpack.c.b16 %v1573, %v1565
    %v1982 = vpack.c.b16 %v1574, %v1566
    %v1983 = vpack.c.b16 %v1575, %v1567
    %v1984 = vpack.c.b16 %v1576, %v1568
    %v1985 = vpack.c.b16 %v1585, %v1577
    %v1986 = vpack.c.b16 %v1586, %v1578
    %v1987 = vpack.c.b16 %v1587, %v1579
    %v1988 = vpack.c.b16 %v1588, %v1580
    %v1989 = vpack.c.b16 %v1589, %v1581
    %v1990 = vpack.c.b16 %v1590, %v1582
    %v1991 = vpack.c.b16 %v1591, %v1583
    %v1992 = vpack.c.b16 %v1592, %v1584
    %v1993 = vpack.c.b16 %v1601, %v1593
    %v1994 = vpack.c.b16 %v1602, %v1594
    %v1995 = vpack.c.b16 %v1603, %v1595
    %v1996 = vpack.c.b16 %v1604, %v1596
    %v1997 = vpack.c.b16 %v1605, %v1597
    %v1998 = vpack.c.b16 %v1606, %v1598
    %v1999 = vpack.c.b16 %v1607, %v1599
    %v2000 = vpack.c.b16 %v1608, %v1600
    %v2001 = vpack.c.b16 %v1617, %v1609
    %v2002 = vpack.c.b16 %v1618, %v1610
    %v2003 = vpack.c.b16 %v1619, %v1611
    %v2004 = vpack.c.b16 %v1620, %v1612
    %v2005 = vpack.c.b16 %v1621, %v1613
    %v2006 = vpack.c.b16 %v1622, %v1614
    %v2007 = vpack.c.b16 %v1623, %v1615
    %v2008 = vpack.c.b16 %v1624, %v1616
    %v2009 = vpack.c.b16 %v1633, %v1625
    %v2010 = vpack.c.b16 %v1634, %v1626
    %v2011 = vpack.c.b16 %v1635, %v1627
    %v2012 = vpack.c.b16 %v1636, %v1628
    %v2013 = vpack.c.b16 %v1637, %v1629
    %v2014 = vpack.c.b16 %v1638, %v1630
    %v2015 = vpack.c.b16 %v1639, %v1631
    %v2016 = vpack.c.b16 %v1640, %v1632
    %v2017 = vpack.c.b16 %v1649, %v1641
    %v2018 = vpack.c.b16 %v1650, %v1642
    %v2019 = vpack.c.b16 %v1651, %v1643
    %v2020 = vpack.c.b16 %v1652, %v1644
    %v2021 = vpack.c.b16 %v1653, %v1645
    %v2022 = vpack.c.b16 %v1654, %v1646
    %v2023 = vpack.c.b16 %v1655, %v1647
    %v2024 = vpack.c.b16 %v1656, %v1648
    %v2025 = vpack.c.b16 %v1665, %v1657
    %v2026 = vpack.c.b16 %v1666, %v1658
    %v2027 = vpack.c.b16 %v1667, %v1659
    %v2028 = vpack.c.b16 %v1668, %v1660
    %v2029 = vpack.c.b16 %v1669, %v1661
    %v2030 = vpack.c.b16 %v1670, %v1662
    %v2031 = vpack.c.b16 %v1671, %v1663
    %v2032 = vpack.c.b16 %v1672, %v1664
    %v2033 = vpack.c.b16 %v1681, %v1673
    %v2034 = vpack.c.b16 %v1682, %v1674
    %v2035 = vpack.c.b16 %v1683, %v1675
    %v2036 = vpack.c.b16 %v1684, %v1676
    %v2037 = vpack.c.b16 %v1685, %v1677
    %v2038 = vpack.c.b16 %v1686, %v1678
    %v2039 = vpack.c.b16 %v1687, %v1679
    %v2040 = vpack.c.b16 %v1688, %v1680
    %v2041 = vpack.c.b16 %v1697, %v1689
    %v2042 = vpack.c.b16 %v1698, %v1690
    %v2043 = vpack.c.b16 %v1699, %v1691
    %v2044 = vpack.c.b16 %v1700, %v1692
    %v2045 = vpack.c.b16 %v1701, %v1693
    %v2046 = vpack.c.b16 %v1702, %v1694
    %v2047 = vpack.c.b16 %v1703, %v1695
    %v2048 = vpack.c.b16 %v1704, %v1696
    %v2049 = vpack.c.b16 %v1713, %v1705
    %v2050 = vpack.c.b16 %v1714, %v1706
    %v2051 = vpack.c.b16 %v1715, %v1707
    %v2052 = vpack.c.b16 %v1716, %v1708
    %v2053 = vpack.c.b16 %v1717, %v1709
    %v2054 = vpack.c.b16 %v1718, %v1710
    %v2055 = vpack.c.b16 %v1719, %v1711
    %v2056 = vpack.c.b16 %v1720, %v1712
    %v2057 = vpack.c.b16 %v1729, %v1721
    %v2058 = vpack.c.b16 %v1730, %v1722
    %v2059 = vpack.c.b16 %v1731, %v1723
    %v2060 = vpack.c.b16 %v1732, %v1724
    %v2061 = vpack.c.b16 %v1733, %v1725
    %v2062 = vpack.c.b16 %v1734, %v1726
    %v2063 = vpack.c.b16 %v1735, %v1727
    %v2064 = vpack.c.b16 %v1736, %v1728
    %v2065 = vpack.c.b16 %v1745, %v1737
    %v2066 = vpack.c.b16 %v1746, %v1738
    %v2067 = vpack.c.b16 %v1747, %v1739
    %v2068 = vpack.c.b16 %v1748, %v1740
    %v2069 = vpack.c.b16 %v1749, %v1741
    %v2070 = vpack.c.b16 %v1750, %v1742
    %v2071 = vpack.c.b16 %v1751, %v1743
    %v2072 = vpack.c.b16 %v1752, %v1744
    %v2073 = vpack.c.b16 %v1761, %v1753
    %v2074 = vpack.c.b16 %v1762, %v1754
    %v2075 = vpack.c.b16 %v1763, %v1755
    %v2076 = vpack.c.b16 %v1764, %v1756
    %v2077 = vpack.c.b16 %v1765, %v1757
    %v2078 = vpack.c.b16 %v1766, %v1758
    %v2079 = vpack.c.b16 %v1767, %v1759
    %v2080 = vpack.c.b16 %v1768, %v1760
    %v2081 = vpack.c.b16 %v1777, %v1769
    %v2082 = vpack.c.b16 %v1778, %v1770
    %v2083 = vpack.c.b16 %v1779, %v1771
    %v2084 = vpack.c.b16 %v1780, %v1772
    %v2085 = vpack.c.b16 %v1781, %v1773
    %v2086 = vpack.c.b16 %v1782, %v1774
    %v2087 = vpack.c.b16 %v1783, %v1775
    %v2088 = vpack.c.b16 %v1784, %v1776
    %v2089 = vpack.c.b16 %v1793, %v1785
    %v2090 = vpack.c.b16 %v1794, %v1786
    %v2091 = vpack.c.b16 %v1795, %v1787
    %v2092 = vpack.c.b16 %v1796, %v1788
    %v2093 = vpack.c.b16 %v1797, %v1789
    %v2094 = vpack.c.b16 %v1798, %v1790
    %v2095 = vpack.c.b16 %v1799, %v1791
    %v2096 = vpack.c.b16 %v1800, %v1792
    %v2097 = vpack.c.b16 %v1809, %v1801
    %v2098 = vpack.c.b16 %v1810, %v1802
    %v2099 = vpack.c.b16 %v1811, %v1803
    %v2100 = vpack.c.b16 %v1812, %v1804
    %v2101 = vpack.c.b16 %v1813, %v1805
    %v2102 = vpack.c.b16 %v1814, %v1806
    %v2103 = vpack.c.b16 %v1815, %v1807
    %v2104 = vpack.c.b16 %v1816, %v1808
    %v2105 = vpack.c.b16 %v1825, %v1817
    %v2106 = vpack.c.b16 %v1826, %v1818
    %v2107 = vpack.c.b16 %v1827, %v1819
    %v2108 = vpack.c.b16 %v1828, %v1820
    %v2109 = vpack.c.b16 %v1829, %v1821
    %v2110 = vpack.c.b16 %v1830, %v1822
    %v2111 = vpack.c.b16 %v1831, %v1823
    %v2112 = vpack.c.b16 %v1832, %v1824
    %v2113 = vpack.c.b16 %v1841, %v1833
    %v2114 = vpack.c.b16 %v1842, %v1834
    %v2115 = vpack.c.b16 %v1843, %v1835
    %v2116 = vpack.c.b16 %v1844, %v1836
    %v2117 = vpack.c.b16 %v1845, %v1837
    %v2118 = vpack.c.b16 %v1846, %v1838
    %v2119 = vpack.c.b16 %v1847, %v1839
    %v2120 = vpack.c.b16 %v1848, %v1840
    %v2121 = vpack.c.b16 %v1857, %v1849
    %v2122 = vpack.c.b16 %v1858, %v1850
    %v2123 = vpack.c.b16 %v1859, %v1851
    %v2124 = vpack.c.b16 %v1860, %v1852
    %v2125 = vpack.c.b16 %v1861, %v1853
    %v2126 = vpack.c.b16 %v1862, %v1854
    %v2127 = vpack.c.b16 %v1863, %v1855
    %v2128 = vpack.c.b16 %v1864, %v1856
    %v2129 = vpack.c.b16 %v1873, %v1865
    %v2130 = vpack.c.b16 %v1874, %v1866
    %v2131 = vpack.c.b16 %v1875, %v1867
    %v2132 = vpack.c.b16 %v1876, %v1868
    %v2133 = vpack.c.b16 %v1877, %v1869
    %v2134 = vpack.c.b16 %v1878, %v1870
    %v2135 = vpack.c.b16 %v1879, %v1871
    %v2136 = vpack.c.b16 %v1880, %v1872
    %2393 = vmatprep.subr.bf16.mxu0 %v1882
    %2394 = vmatpush1.bf16.msra.mxu0 %v1881
    %2395 = vmatprep.subr.bf16.mxu0 %v1890
    %2396 = vmatpush1.bf16.msra.mxu0 %v1889
    %2397 = vmatprep.subr.bf16.mxu0 %v1898
    %2398 = vmatpush1.bf16.msra.mxu0 %v1897
    %2399 = vmatprep.subr.bf16.mxu0 %v1906
    %2400 = vmatpush1.bf16.msra.mxu0 %v1905
    %2401 = vmatprep.subr.bf16.mxu0 %v1914
    %2402 = vmatpush1.bf16.msra.mxu0 %v1913
    %2403 = vmatprep.subr.bf16.mxu0 %v1922
    %2404 = vmatpush1.bf16.msra.mxu0 %v1921
    %2405 = vmatprep.subr.bf16.mxu0 %v1930
    %2406 = vmatpush1.bf16.msra.mxu0 %v1929
    %2407 = vmatprep.subr.bf16.mxu0 %v1938
    %2408 = vmatpush1.bf16.msra.mxu0 %v1937
    %2409 = vmatprep.subr.bf16.mxu0 %v1946
    %2410 = vmatpush1.bf16.msra.mxu0 %v1945
    %2411 = vmatprep.subr.bf16.mxu0 %v1954
    %2412 = vmatpush1.bf16.msra.mxu0 %v1953
    %2413 = vmatprep.subr.bf16.mxu0 %v1962
    %2414 = vmatpush1.bf16.msra.mxu0 %v1961
    %2415 = vmatprep.subr.bf16.mxu0 %v1970
    %2416 = vmatpush1.bf16.msra.mxu0 %v1969
    %2417 = vmatprep.subr.bf16.mxu0 %v1978
    %2418 = vmatpush1.bf16.msra.mxu0 %v1977
    %2419 = vmatprep.subr.bf16.mxu0 %v1986
    %2420 = vmatpush1.bf16.msra.mxu0 %v1985
    %2421 = vmatprep.subr.bf16.mxu0 %v1994
    %2422 = vmatpush1.bf16.msra.mxu0 %v1993
    %2423 = vmatprep.subr.bf16.mxu0 %v2002
    %2424 = vmatpush1.bf16.msra.mxu0 %v2001
    %2425 = vmatprep.mubr.bf16.mxu0 %v812
    %2426 = vmatmul.mubr.bf16.gmra.mrb[0].mxu0 %v811
    %v2427 = vpop.f32.mrb[0].mxu0
    %v2428 = vadd.f32 %v1076, %v2427
    %v2429 = vpop.f32.mrb[0].mxu0
    %v2430 = vadd.f32 %v1080, %v2429
    %v2431 = vpop.f32.mrb[0].mxu0
    %v2432 = vadd.f32 %v1076, %v2431
    %v2433 = vpop.f32.mrb[0].mxu0
    %v2434 = vadd.f32 %v1080, %v2433
    %2435 = vdwg.mxu0
    %2436 = vmatprep.subr.bf16.mxu0 %v2010
    %2437 = vmatpush1.bf16.msra.mxu0 %v2009
    %2438 = vmatprep.subr.bf16.mxu0 %v2018
    %2439 = vmatpush1.bf16.msra.mxu0 %v2017
    %2440 = vmatprep.subr.bf16.mxu0 %v2026
    %2441 = vmatpush1.bf16.msra.mxu0 %v2025
    %2442 = vmatprep.subr.bf16.mxu0 %v2034
    %2443 = vmatpush1.bf16.msra.mxu0 %v2033
    %2444 = vmatprep.subr.bf16.mxu0 %v2042
    %2445 = vmatpush1.bf16.msra.mxu0 %v2041
    %2446 = vmatprep.subr.bf16.mxu0 %v2050
    %2447 = vmatpush1.bf16.msra.mxu0 %v2049
    %2448 = vmatprep.subr.bf16.mxu0 %v2058
    %2449 = vmatpush1.bf16.msra.mxu0 %v2057
    %2450 = vmatprep.subr.bf16.mxu0 %v2066
    %2451 = vmatpush1.bf16.msra.mxu0 %v2065
    %2452 = vmatprep.subr.bf16.mxu0 %v2074
    %2453 = vmatpush1.bf16.msra.mxu0 %v2073
    %2454 = vmatprep.subr.bf16.mxu0 %v2082
    %2455 = vmatpush1.bf16.msra.mxu0 %v2081
    %2456 = vmatprep.subr.bf16.mxu0 %v2090
    %2457 = vmatpush1.bf16.msra.mxu0 %v2089
    %2458 = vmatprep.subr.bf16.mxu0 %v2098
    %2459 = vmatpush1.bf16.msra.mxu0 %v2097
    %2460 = vmatprep.subr.bf16.mxu0 %v2106
    %2461 = vmatpush1.bf16.msra.mxu0 %v2105
    %2462 = vmatprep.subr.bf16.mxu0 %v2114
    %2463 = vmatpush1.bf16.msra.mxu0 %v2113
    %2464 = vmatprep.subr.bf16.mxu0 %v2122
    %2465 = vmatpush1.bf16.msra.mxu0 %v2121
    %2466 = vmatprep.subr.bf16.mxu0 %v2130
    %2467 = vmatpush1.bf16.msra.mxu0 %v2129
    %2468 = vmatprep.mubr.bf16.mxu0 %v814
    %2469 = vmatmul.mubr.bf16.gmra.mrb[0].mxu0 %v813
    %v2470 = vpop.f32.mrb[0].mxu0
    %v2471 = vadd.f32 %v2428, %v2470
    %v2472 = vpop.f32.mrb[0].mxu0
    %v2473 = vadd.f32 %v2430, %v2472
    %v2474 = vpop.f32.mrb[0].mxu0
    %v2475 = vadd.f32 %v2432, %v2474
    %v2476 = vpop.f32.mrb[0].mxu0
    %v2477 = vadd.f32 %v2434, %v2476
    %2478 = vdwg.mxu0
    %2479 = vmatprep.subr.bf16.mxu0 %v1884
    %2480 = vmatpush1.bf16.msra.mxu0 %v1883
    %2481 = vmatprep.subr.bf16.mxu0 %v1892
    %2482 = vmatpush1.bf16.msra.mxu0 %v1891
    %2483 = vmatprep.subr.bf16.mxu0 %v1900
    %2484 = vmatpush1.bf16.msra.mxu0 %v1899
    %2485 = vmatprep.subr.bf16.mxu0 %v1908
    %2486 = vmatpush1.bf16.msra.mxu0 %v1907
    %2487 = vmatprep.subr.bf16.mxu0 %v1916
    %2488 = vmatpush1.bf16.msra.mxu0 %v1915
    %2489 = vmatprep.subr.bf16.mxu0 %v1924
    %2490 = vmatpush1.bf16.msra.mxu0 %v1923
    %2491 = vmatprep.subr.bf16.mxu0 %v1932
    %2492 = vmatpush1.bf16.msra.mxu0 %v1931
    %2493 = vmatprep.subr.bf16.mxu0 %v1940
    %2494 = vmatpush1.bf16.msra.mxu0 %v1939
    %2495 = vmatprep.subr.bf16.mxu0 %v1948
    %2496 = vmatpush1.bf16.msra.mxu0 %v1947
    %2497 = vmatprep.subr.bf16.mxu0 %v1956
    %2498 = vmatpush1.bf16.msra.mxu0 %v1955
    %2499 = vmatprep.subr.bf16.mxu0 %v1964
    %2500 = vmatpush1.bf16.msra.mxu0 %v1963
    %2501 = vmatprep.subr.bf16.mxu0 %v1972
    %2502 = vmatpush1.bf16.msra.mxu0 %v1971
    %2503 = vmatprep.subr.bf16.mxu0 %v1980
    %2504 = vmatpush1.bf16.msra.mxu0 %v1979
    %2505 = vmatprep.subr.bf16.mxu0 %v1988
    %2506 = vmatpush1.bf16.msra.mxu0 %v1987
    %2507 = vmatprep.subr.bf16.mxu0 %v1996
    %2508 = vmatpush1.bf16.msra.mxu0 %v1995
    %2509 = vmatprep.subr.bf16.mxu0 %v2004
    %2510 = vmatpush1.bf16.msra.mxu0 %v2003
    %2511 = vmatprep.mubr.bf16.mxu0 %v812
    %2512 = vmatmul.mubr.bf16.gmra.mrb[0].mxu0 %v811
    %v2513 = vpop.f32.mrb[0].mxu0
    %v2514 = vadd.f32 %v1084, %v2513
    %v2515 = vpop.f32.mrb[0].mxu0
    %v2516 = vadd.f32 %v1088, %v2515
    %v2517 = vpop.f32.mrb[0].mxu0
    %v2518 = vadd.f32 %v1084, %v2517
    %v2519 = vpop.f32.mrb[0].mxu0
    %v2520 = vadd.f32 %v1088, %v2519
    %2521 = vdwg.mxu0
    %2522 = vmatprep.subr.bf16.mxu0 %v2012
    %2523 = vmatpush1.bf16.msra.mxu0 %v2011
    %2524 = vmatprep.subr.bf16.mxu0 %v2020
    %2525 = vmatpush1.bf16.msra.mxu0 %v2019
    %2526 = vmatprep.subr.bf16.mxu0 %v2028
    %2527 = vmatpush1.bf16.msra.mxu0 %v2027
    %2528 = vmatprep.subr.bf16.mxu0 %v2036
    %2529 = vmatpush1.bf16.msra.mxu0 %v2035
    %2530 = vmatprep.subr.bf16.mxu0 %v2044
    %2531 = vmatpush1.bf16.msra.mxu0 %v2043
    %2532 = vmatprep.subr.bf16.mxu0 %v2052
    %2533 = vmatpush1.bf16.msra.mxu0 %v2051
    %2534 = vmatprep.subr.bf16.mxu0 %v2060
    %2535 = vmatpush1.bf16.msra.mxu0 %v2059
    %2536 = vmatprep.subr.bf16.mxu0 %v2068
    %2537 = vmatpush1.bf16.msra.mxu0 %v2067
    %2538 = vmatprep.subr.bf16.mxu0 %v2076
    %2539 = vmatpush1.bf16.msra.mxu0 %v2075
    %2540 = vmatprep.subr.bf16.mxu0 %v2084
    %2541 = vmatpush1.bf16.msra.mxu0 %v2083
    %2542 = vmatprep.subr.bf16.mxu0 %v2092
    %2543 = vmatpush1.bf16.msra.mxu0 %v2091
    %2544 = vmatprep.subr.bf16.mxu0 %v2100
    %2545 = vmatpush1.bf16.msra.mxu0 %v2099
    %2546 = vmatprep.subr.bf16.mxu0 %v2108
    %2547 = vmatpush1.bf16.msra.mxu0 %v2107
    %2548 = vmatprep.subr.bf16.mxu0 %v2116
    %2549 = vmatpush1.bf16.msra.mxu0 %v2115
    %2550 = vmatprep.subr.bf16.mxu0 %v2124
    %2551 = vmatpush1.bf16.msra.mxu0 %v2123
    %2552 = vmatprep.subr.bf16.mxu0 %v2132
    %2553 = vmatpush1.bf16.msra.mxu0 %v2131
    %2554 = vmatprep.mubr.bf16.mxu0 %v814
    %2555 = vmatmul.mubr.bf16.gmra.mrb[0].mxu0 %v813
    %v2556 = vpop.f32.mrb[0].mxu0
    %v2557 = vadd.f32 %v2514, %v2556
    %v2558 = vpop.f32.mrb[0].mxu0
    %v2559 = vadd.f32 %v2516, %v2558
    %v2560 = vpop.f32.mrb[0].mxu0
    %v2561 = vadd.f32 %v2518, %v2560
    %v2562 = vpop.f32.mrb[0].mxu0
    %v2563 = vadd.f32 %v2520, %v2562
    %2564 = vdwg.mxu0
    %2565 = vmatprep.subr.bf16.mxu0 %v1886
    %2566 = vmatpush1.bf16.msra.mxu0 %v1885
    %2567 = vmatprep.subr.bf16.mxu0 %v1894
    %2568 = vmatpush1.bf16.msra.mxu0 %v1893
    %2569 = vmatprep.subr.bf16.mxu0 %v1902
    %2570 = vmatpush1.bf16.msra.mxu0 %v1901
    %2571 = vmatprep.subr.bf16.mxu0 %v1910
    %2572 = vmatpush1.bf16.msra.mxu0 %v1909
    %2573 = vmatprep.subr.bf16.mxu0 %v1918
    %2574 = vmatpush1.bf16.msra.mxu0 %v1917
    %2575 = vmatprep.subr.bf16.mxu0 %v1926
    %2576 = vmatpush1.bf16.msra.mxu0 %v1925
    %2577 = vmatprep.subr.bf16.mxu0 %v1934
    %2578 = vmatpush1.bf16.msra.mxu0 %v1933
    %2579 = vmatprep.subr.bf16.mxu0 %v1942
    %2580 = vmatpush1.bf16.msra.mxu0 %v1941
    %2581 = vmatprep.subr.bf16.mxu0 %v1950
    %2582 = vmatpush1.bf16.msra.mxu0 %v1949
    %2583 = vmatprep.subr.bf16.mxu0 %v1958
    %2584 = vmatpush1.bf16.msra.mxu0 %v1957
    %2585 = vmatprep.subr.bf16.mxu0 %v1966
    %2586 = vmatpush1.bf16.msra.mxu0 %v1965
    %2587 = vmatprep.subr.bf16.mxu0 %v1974
    %2588 = vmatpush1.bf16.msra.mxu0 %v1973
    %2589 = vmatprep.subr.bf16.mxu0 %v1982
    %2590 = vmatpush1.bf16.msra.mxu0 %v1981
    %2591 = vmatprep.subr.bf16.mxu0 %v1990
    %2592 = vmatpush1.bf16.msra.mxu0 %v1989
    %2593 = vmatprep.subr.bf16.mxu0 %v1998
    %2594 = vmatpush1.bf16.msra.mxu0 %v1997
    %2595 = vmatprep.subr.bf16.mxu0 %v2006
    %2596 = vmatpush1.bf16.msra.mxu0 %v2005
    %2597 = vmatprep.mubr.bf16.mxu0 %v812
    %2598 = vmatmul.mubr.bf16.gmra.mrb[0].mxu0 %v811
    %v2599 = vpop.f32.mrb[0].mxu0
    %v2600 = vadd.f32 %v1092, %v2599
    %v2601 = vpop.f32.mrb[0].mxu0
    %v2602 = vadd.f32 %v1096, %v2601
    %v2603 = vpop.f32.mrb[0].mxu0
    %v2604 = vadd.f32 %v1092, %v2603
    %v2605 = vpop.f32.mrb[0].mxu0
    %v2606 = vadd.f32 %v1096, %v2605
    %2607 = vdwg.mxu0
    %2608 = vmatprep.subr.bf16.mxu0 %v2014
    %2609 = vmatpush1.bf16.msra.mxu0 %v2013
    %2610 = vmatprep.subr.bf16.mxu0 %v2022
    %2611 = vmatpush1.bf16.msra.mxu0 %v2021
    %2612 = vmatprep.subr.bf16.mxu0 %v2030
    %2613 = vmatpush1.bf16.msra.mxu0 %v2029
    %2614 = vmatprep.subr.bf16.mxu0 %v2038
    %2615 = vmatpush1.bf16.msra.mxu0 %v2037
    %2616 = vmatprep.subr.bf16.mxu0 %v2046
    %2617 = vmatpush1.bf16.msra.mxu0 %v2045
    %2618 = vmatprep.subr.bf16.mxu0 %v2054
    %2619 = vmatpush1.bf16.msra.mxu0 %v2053
    %2620 = vmatprep.subr.bf16.mxu0 %v2062
    %2621 = vmatpush1.bf16.msra.mxu0 %v2061
    %2622 = vmatprep.subr.bf16.mxu0 %v2070
    %2623 = vmatpush1.bf16.msra.mxu0 %v2069
    %2624 = vmatprep.subr.bf16.mxu0 %v2078
    %2625 = vmatpush1.bf16.msra.mxu0 %v2077
    %2626 = vmatprep.subr.bf16.mxu0 %v2086
    %2627 = vmatpush1.bf16.msra.mxu0 %v2085
    %2628 = vmatprep.subr.bf16.mxu0 %v2094
    %2629 = vmatpush1.bf16.msra.mxu0 %v2093
    %2630 = vmatprep.subr.bf16.mxu0 %v2102
    %2631 = vmatpush1.bf16.msra.mxu0 %v2101
    %2632 = vmatprep.subr.bf16.mxu0 %v2110
    %2633 = vmatpush1.bf16.msra.mxu0 %v2109
    %2634 = vmatprep.subr.bf16.mxu0 %v2118
    %2635 = vmatpush1.bf16.msra.mxu0 %v2117
    %2636 = vmatprep.subr.bf16.mxu0 %v2126
    %2637 = vmatpush1.bf16.msra.mxu0 %v2125
    %2638 = vmatprep.subr.bf16.mxu0 %v2134
    %2639 = vmatpush1.bf16.msra.mxu0 %v2133
    %2640 = vmatprep.mubr.bf16.mxu0 %v814
    %2641 = vmatmul.mubr.bf16.gmra.mrb[0].mxu0 %v813
    %v2642 = vpop.f32.mrb[0].mxu0
    %v2643 = vadd.f32 %v2600, %v2642
    %v2644 = vpop.f32.mrb[0].mxu0
    %v2645 = vadd.f32 %v2602, %v2644
    %v2646 = vpop.f32.mrb[0].mxu0
    %v2647 = vadd.f32 %v2604, %v2646
    %v2648 = vpop.f32.mrb[0].mxu0
    %v2649 = vadd.f32 %v2606, %v2648
    %2650 = vdwg.mxu0
    %2651 = vmatprep.subr.bf16.mxu0 %v1888
    %2652 = vmatpush1.bf16.msra.mxu0 %v1887
    %2653 = vmatprep.subr.bf16.mxu0 %v1896
    %2654 = vmatpush1.bf16.msra.mxu0 %v1895
    %2655 = vmatprep.subr.bf16.mxu0 %v1904
    %2656 = vmatpush1.bf16.msra.mxu0 %v1903
    %2657 = vmatprep.subr.bf16.mxu0 %v1912
    %2658 = vmatpush1.bf16.msra.mxu0 %v1911
    %2659 = vmatprep.subr.bf16.mxu0 %v1920
    %2660 = vmatpush1.bf16.msra.mxu0 %v1919
    %2661 = vmatprep.subr.bf16.mxu0 %v1928
    %2662 = vmatpush1.bf16.msra.mxu0 %v1927
    %2663 = vmatprep.subr.bf16.mxu0 %v1936
    %2664 = vmatpush1.bf16.msra.mxu0 %v1935
    %2665 = vmatprep.subr.bf16.mxu0 %v1944
    %2666 = vmatpush1.bf16.msra.mxu0 %v1943
    %2667 = vmatprep.subr.bf16.mxu0 %v1952
    %2668 = vmatpush1.bf16.msra.mxu0 %v1951
    %2669 = vmatprep.subr.bf16.mxu0 %v1960
    %2670 = vmatpush1.bf16.msra.mxu0 %v1959
    %2671 = vmatprep.subr.bf16.mxu0 %v1968
    %2672 = vmatpush1.bf16.msra.mxu0 %v1967
    %2673 = vmatprep.subr.bf16.mxu0 %v1976
    %2674 = vmatpush1.bf16.msra.mxu0 %v1975
    %2675 = vmatprep.subr.bf16.mxu0 %v1984
    %2676 = vmatpush1.bf16.msra.mxu0 %v1983
    %2677 = vmatprep.subr.bf16.mxu0 %v1992
    %2678 = vmatpush1.bf16.msra.mxu0 %v1991
    %2679 = vmatprep.subr.bf16.mxu0 %v2000
    %2680 = vmatpush1.bf16.msra.mxu0 %v1999
    %2681 = vmatprep.subr.bf16.mxu0 %v2008
    %2682 = vmatpush1.bf16.msra.mxu0 %v2007
    %2683 = vmatprep.mubr.bf16.mxu0 %v812
    %2684 = vmatmul.mubr.bf16.gmra.mrb[0].mxu0 %v811
    %v2685 = vpop.f32.mrb[0].mxu0
    %v2686 = vadd.f32 %v1100, %v2685
    %v2687 = vpop.f32.mrb[0].mxu0
    %v2688 = vadd.f32 %v1104, %v2687
    %v2689 = vpop.f32.mrb[0].mxu0
    %v2690 = vadd.f32 %v1100, %v2689
    %v2691 = vpop.f32.mrb[0].mxu0
    %v2692 = vadd.f32 %v1104, %v2691
    %2693 = vdwg.mxu0
    %2694 = vmatprep.subr.bf16.mxu0 %v2016
    %2695 = vmatpush1.bf16.msra.mxu0 %v2015
    %2696 = vmatprep.subr.bf16.mxu0 %v2024
    %2697 = vmatpush1.bf16.msra.mxu0 %v2023
    %2698 = vmatprep.subr.bf16.mxu0 %v2032
    %2699 = vmatpush1.bf16.msra.mxu0 %v2031
    %2700 = vmatprep.subr.bf16.mxu0 %v2040
    %2701 = vmatpush1.bf16.msra.mxu0 %v2039
    %2702 = vmatprep.subr.bf16.mxu0 %v2048
    %2703 = vmatpush1.bf16.msra.mxu0 %v2047
    %2704 = vmatprep.subr.bf16.mxu0 %v2056
    %2705 = vmatpush1.bf16.msra.mxu0 %v2055
    %2706 = vmatprep.subr.bf16.mxu0 %v2064
    %2707 = vmatpush1.bf16.msra.mxu0 %v2063
    %2708 = vmatprep.subr.bf16.mxu0 %v2072
    %2709 = vmatpush1.bf16.msra.mxu0 %v2071
    %2710 = vmatprep.subr.bf16.mxu0 %v2080
    %2711 = vmatpush1.bf16.msra.mxu0 %v2079
    %2712 = vmatprep.subr.bf16.mxu0 %v2088
    %2713 = vmatpush1.bf16.msra.mxu0 %v2087
    %2714 = vmatprep.subr.bf16.mxu0 %v2096
    %2715 = vmatpush1.bf16.msra.mxu0 %v2095
    %2716 = vmatprep.subr.bf16.mxu0 %v2104
    %2717 = vmatpush1.bf16.msra.mxu0 %v2103
    %2718 = vmatprep.subr.bf16.mxu0 %v2112
    %2719 = vmatpush1.bf16.msra.mxu0 %v2111
    %2720 = vmatprep.subr.bf16.mxu0 %v2120
    %2721 = vmatpush1.bf16.msra.mxu0 %v2119
    %2722 = vmatprep.subr.bf16.mxu0 %v2128
    %2723 = vmatpush1.bf16.msra.mxu0 %v2127
    %2724 = vmatprep.subr.bf16.mxu0 %v2136
    %2725 = vmatpush1.bf16.msra.mxu0 %v2135
    %2726 = vmatprep.mubr.bf16.mxu0 %v814
    %2727 = vmatmul.mubr.bf16.gmra.mrb[0].mxu0 %v813
    %v2728 = vpop.f32.mrb[0].mxu0
    %v2729 = vadd.f32 %v2686, %v2728
    %v2730 = vpop.f32.mrb[0].mxu0
    %v2731 = vadd.f32 %v2688, %v2730
    %v2732 = vpop.f32.mrb[0].mxu0
    %v2733 = vadd.f32 %v2690, %v2732
    %v2734 = vpop.f32.mrb[0].mxu0
    %v2735 = vadd.f32 %v2692, %v2734
    %2736 = vdwg.mxu0
    %v2737 = vmul.f32 %v2471, 0.2
    %v2738 = vmul.f32 %v2473, 0.2
    %v2739 = vmul.f32 %v2557, 0.2
    %v2740 = vmul.f32 %v2559, 0.2
    %v2741 = vmul.f32 %v2643, 0.2
    %v2742 = vmul.f32 %v2645, 0.2
    %v2743 = vmul.f32 %v2729, 0.2
    %v2744 = vmul.f32 %v2731, 0.2
    %v2745 = vmul.f32 %v2475, 0.2
    %v2746 = vmul.f32 %v2477, 0.2
    %v2747 = vmul.f32 %v2561, 0.2
    %v2748 = vmul.f32 %v2563, 0.2
    %v2749 = vmul.f32 %v2647, 0.2
    %v2750 = vmul.f32 %v2649, 0.2
    %v2751 = vmul.f32 %v2733, 0.2
    %v2752 = vmul.f32 %v2735, 0.2
    %v2753 = vmax.f32 %v2471, %v2737
    %v2754 = vmax.f32 %v2473, %v2738
    %v2755 = vmax.f32 %v2557, %v2739
    %v2756 = vmax.f32 %v2559, %v2740
    %v2757 = vmax.f32 %v2643, %v2741
    %v2758 = vmax.f32 %v2645, %v2742
    %v2759 = vmax.f32 %v2729, %v2743
    %v2760 = vmax.f32 %v2731, %v2744
    %v2761 = vmax.f32 %v2475, %v2745
    %v2762 = vmax.f32 %v2477, %v2746
    %v2763 = vmax.f32 %v2561, %v2747
    %v2764 = vmax.f32 %v2563, %v2748
    %v2765 = vmax.f32 %v2647, %v2749
    %v2766 = vmax.f32 %v2649, %v2750
    %v2767 = vmax.f32 %v2733, %v2751
    %v2768 = vmax.f32 %v2735, %v2752
    %v2769 = vpack.c.bf16 %v2761, %v2753
    %v2770 = vpack.c.bf16 %v2762, %v2754
    %v2771 = vpack.c.bf16 %v2763, %v2755
    %v2772 = vpack.c.bf16 %v2764, %v2756
    %v2773 = vpack.c.bf16 %v2765, %v2757
    %v2774 = vpack.c.bf16 %v2766, %v2758
    %v2775 = vpack.c.bf16 %v2767, %v2759
    %v2776 = vpack.c.bf16 %v2768, %v2760
    %v2777 = vld [vmem:[#allocation12] sm:$0xff]
    %v2778 = vld [vmem:[#allocation12 + $0x8] sm:$0xff]
    %v2779 = vld [vmem:[#allocation12 + $0x10] sm:$0xff]
    %v2780 = vld [vmem:[#allocation12 + $0x18] sm:$0xf]
    %v2781 = vld [vmem:[#allocation12 + $0x1c] sm:$0xff]
    %v2782 = vld [vmem:[#allocation12 + $0x24] sm:$0xff]
    %v2783 = vld [vmem:[#allocation12 + $0x2c] sm:$0xff]
    %v2784 = vld [vmem:[#allocation12 + $0x34] sm:$0xf]
    %v2785 = vld [vmem:[#allocation12 + $0x38] sm:$0xff]
    %v2786 = vld [vmem:[#allocation12 + $0x40] sm:$0xff]
    %v2787 = vld [vmem:[#allocation12 + $0x48] sm:$0xff]
    %v2788 = vld [vmem:[#allocation12 + $0x50] sm:$0xf]
    %v2789 = vld [vmem:[#allocation12 + $0x54] sm:$0xff]
    %v2790 = vld [vmem:[#allocation12 + $0x5c] sm:$0xff]
    %v2791 = vld [vmem:[#allocation12 + $0x64] sm:$0xff]
    %v2792 = vld [vmem:[#allocation12 + $0x6c] sm:$0xf]
    %v2793 = vld [vmem:[#allocation12 + $0x70] sm:$0xff]
    %v2794 = vld [vmem:[#allocation12 + $0x78] sm:$0xff]
    %v2795 = vld [vmem:[#allocation12 + $0x80] sm:$0xff]
    %v2796 = vld [vmem:[#allocation12 + $0x88] sm:$0xf]
    %v2797 = vld [vmem:[#allocation12 + $0x8c] sm:$0xff]
    %v2798 = vld [vmem:[#allocation12 + $0x94] sm:$0xff]
    %v2799 = vld [vmem:[#allocation12 + $0x9c] sm:$0xff]
    %v2800 = vld [vmem:[#allocation12 + $0xa4] sm:$0xf]
    %v2801 = vld [vmem:[#allocation12 + $0xa8] sm:$0xff]
    %v2802 = vld [vmem:[#allocation12 + $0xb0] sm:$0xff]
    %v2803 = vld [vmem:[#allocation12 + $0xb8] sm:$0xff]
    %v2804 = vld [vmem:[#allocation12 + $0xc0] sm:$0xf]
    %v2805 = vld [vmem:[#allocation12 + $0xc4] sm:$0xff]
    %v2806 = vld [vmem:[#allocation12 + $0xcc] sm:$0xff]
    %v2807 = vld [vmem:[#allocation12 + $0xd4] sm:$0xff]
    %v2808 = vld [vmem:[#allocation12 + $0xdc] sm:$0xf]
    %v2809 = vld [vmem:[#allocation12 + $0xe0] sm:$0xff]
    %v2810 = vld [vmem:[#allocation12 + $0xe8] sm:$0xff]
    %v2811 = vld [vmem:[#allocation12 + $0xf0] sm:$0xff]
    %v2812 = vld [vmem:[#allocation12 + $0xf8] sm:$0xf]
    %v2813 = vld [vmem:[#allocation12 + $0xfc] sm:$0xff]
    %v2814 = vld [vmem:[#allocation12 + $0x104] sm:$0xff]
    %v2815 = vld [vmem:[#allocation12 + $0x10c] sm:$0xff]
    %v2816 = vld [vmem:[#allocation12 + $0x114] sm:$0xf]
    %v2817 = vld [vmem:[#allocation12 + $0x118] sm:$0xff]
    %v2818 = vld [vmem:[#allocation12 + $0x120] sm:$0xff]
    %v2819 = vld [vmem:[#allocation12 + $0x128] sm:$0xff]
    %v2820 = vld [vmem:[#allocation12 + $0x130] sm:$0xf]
    %v2821 = vld [vmem:[#allocation12 + $0x134] sm:$0xff]
    %v2822 = vld [vmem:[#allocation12 + $0x13c] sm:$0xff]
    %v2823 = vld [vmem:[#allocation12 + $0x144] sm:$0xff]
    %v2824 = vld [vmem:[#allocation12 + $0x14c] sm:$0xf]
    %v2825 = vld [vmem:[#allocation12 + $0x150] sm:$0xff]
    %v2826 = vld [vmem:[#allocation12 + $0x158] sm:$0xff]
    %v2827 = vld [vmem:[#allocation12 + $0x160] sm:$0xff]
    %v2828 = vld [vmem:[#allocation12 + $0x168] sm:$0xf]
    %v2829 = vld [vmem:[#allocation12 + $0x16c] sm:$0xff]
    %v2830 = vld [vmem:[#allocation12 + $0x174] sm:$0xff]
    %v2831 = vld [vmem:[#allocation12 + $0x17c] sm:$0xff]
    %v2832 = vld [vmem:[#allocation12 + $0x184] sm:$0xf]
    %v2833 = vld [vmem:[#allocation12 + $0x188] sm:$0xff]
    %v2834 = vld [vmem:[#allocation12 + $0x190] sm:$0xff]
    %v2835 = vld [vmem:[#allocation12 + $0x198] sm:$0xff]
    %v2836 = vld [vmem:[#allocation12 + $0x1a0] sm:$0xf]
    %v2837 = vld [vmem:[#allocation12 + $0x1a4] sm:$0xff]
    %v2838 = vld [vmem:[#allocation12 + $0x1ac] sm:$0xff]
    %v2839 = vld [vmem:[#allocation12 + $0x1b4] sm:$0xff]
    %v2840 = vld [vmem:[#allocation12 + $0x1bc] sm:$0xf]
    %v2841 = vld [vmem:[#allocation12 + $0x1c0] sm:$0xff]
    %v2842 = vld [vmem:[#allocation12 + $0x1c8] sm:$0xff]
    %v2843 = vld [vmem:[#allocation12 + $0x1d0] sm:$0xff]
    %v2844 = vld [vmem:[#allocation12 + $0x1d8] sm:$0xf]
    %v2845 = vld [vmem:[#allocation12 + $0x1dc] sm:$0xff]
    %v2846 = vld [vmem:[#allocation12 + $0x1e4] sm:$0xff]
    %v2847 = vld [vmem:[#allocation12 + $0x1ec] sm:$0xff]
    %v2848 = vld [vmem:[#allocation12 + $0x1f4] sm:$0xf]
    %v2849 = vld [vmem:[#allocation12 + $0x1f8] sm:$0xff]
    %v2850 = vld [vmem:[#allocation12 + $0x200] sm:$0xff]
    %v2851 = vld [vmem:[#allocation12 + $0x208] sm:$0xff]
    %v2852 = vld [vmem:[#allocation12 + $0x210] sm:$0xf]
    %v2853 = vld [vmem:[#allocation12 + $0x214] sm:$0xff]
    %v2854 = vld [vmem:[#allocation12 + $0x21c] sm:$0xff]
    %v2855 = vld [vmem:[#allocation12 + $0x224] sm:$0xff]
    %v2856 = vld [vmem:[#allocation12 + $0x22c] sm:$0xf]
    %v2857 = vld [vmem:[#allocation12 + $0x230] sm:$0xff]
    %v2858 = vld [vmem:[#allocation12 + $0x238] sm:$0xff]
    %v2859 = vld [vmem:[#allocation12 + $0x240] sm:$0xff]
    %v2860 = vld [vmem:[#allocation12 + $0x248] sm:$0xf]
    %v2861 = vld [vmem:[#allocation12 + $0x24c] sm:$0xff]
    %v2862 = vld [vmem:[#allocation12 + $0x254] sm:$0xff]
    %v2863 = vld [vmem:[#allocation12 + $0x25c] sm:$0xff]
    %v2864 = vld [vmem:[#allocation12 + $0x264] sm:$0xf]
    %v2865 = vld [vmem:[#allocation12 + $0x268] sm:$0xff]
    %v2866 = vld [vmem:[#allocation12 + $0x270] sm:$0xff]
    %v2867 = vld [vmem:[#allocation12 + $0x278] sm:$0xff]
    %v2868 = vld [vmem:[#allocation12 + $0x280] sm:$0xf]
    %v2869 = vld [vmem:[#allocation12 + $0x284] sm:$0xff]
    %v2870 = vld [vmem:[#allocation12 + $0x28c] sm:$0xff]
    %v2871 = vld [vmem:[#allocation12 + $0x294] sm:$0xff]
    %v2872 = vld [vmem:[#allocation12 + $0x29c] sm:$0xf]
    %v2873 = vld [vmem:[#allocation12 + $0x2a0] sm:$0xff]
    %v2874 = vld [vmem:[#allocation12 + $0x2a8] sm:$0xff]
    %v2875 = vld [vmem:[#allocation12 + $0x2b0] sm:$0xff]
    %v2876 = vld [vmem:[#allocation12 + $0x2b8] sm:$0xf]
    %v2877 = vld [vmem:[#allocation12 + $0x2bc] sm:$0xff]
    %v2878 = vld [vmem:[#allocation12 + $0x2c4] sm:$0xff]
    %v2879 = vld [vmem:[#allocation12 + $0x2cc] sm:$0xff]
    %v2880 = vld [vmem:[#allocation12 + $0x2d4] sm:$0xf]
    %v2881 = vld [vmem:[#allocation12 + $0x2d8] sm:$0xff]
    %v2882 = vld [vmem:[#allocation12 + $0x2e0] sm:$0xff]
    %v2883 = vld [vmem:[#allocation12 + $0x2e8] sm:$0xff]
    %v2884 = vld [vmem:[#allocation12 + $0x2f0] sm:$0xf]
    %v2885 = vld [vmem:[#allocation12 + $0x2f4] sm:$0xff]
    %v2886 = vld [vmem:[#allocation12 + $0x2fc] sm:$0xff]
    %v2887 = vld [vmem:[#allocation12 + $0x304] sm:$0xff]
    %v2888 = vld [vmem:[#allocation12 + $0x30c] sm:$0xf]
    %v2889 = vld [vmem:[#allocation12 + $0x310] sm:$0xff]
    %v2890 = vld [vmem:[#allocation12 + $0x318] sm:$0xff]
    %v2891 = vld [vmem:[#allocation12 + $0x320] sm:$0xff]
    %v2892 = vld [vmem:[#allocation12 + $0x328] sm:$0xf]
    %v2893 = vld [vmem:[#allocation12 + $0x32c] sm:$0xff]
    %v2894 = vld [vmem:[#allocation12 + $0x334] sm:$0xff]
    %v2895 = vld [vmem:[#allocation12 + $0x33c] sm:$0xff]
    %v2896 = vld [vmem:[#allocation12 + $0x344] sm:$0xf]
    %v2897 = vld [vmem:[#allocation12 + $0x348] sm:$0xff]
    %v2898 = vld [vmem:[#allocation12 + $0x350] sm:$0xff]
    %v2899 = vld [vmem:[#allocation12 + $0x358] sm:$0xff]
    %v2900 = vld [vmem:[#allocation12 + $0x360] sm:$0xf]
    %v2901 = vld [vmem:[#allocation12 + $0x364] sm:$0xff]
    %v2902 = vld [vmem:[#allocation12 + $0x36c] sm:$0xff]
    %v2903 = vld [vmem:[#allocation12 + $0x374] sm:$0xff]
    %v2904 = vld [vmem:[#allocation12 + $0x37c] sm:$0xf]
    %v2905 = vld [vmem:[#allocation12 + $0x380] sm:$0xff]
    %v2906 = vld [vmem:[#allocation12 + $0x388] sm:$0xff]
    %v2907 = vld [vmem:[#allocation12 + $0x390] sm:$0xff]
    %v2908 = vld [vmem:[#allocation12 + $0x398] sm:$0xf]
    %v2909 = vld [vmem:[#allocation12 + $0x39c] sm:$0xff]
    %v2910 = vld [vmem:[#allocation12 + $0x3a4] sm:$0xff]
    %v2911 = vld [vmem:[#allocation12 + $0x3ac] sm:$0xff]
    %v2912 = vld [vmem:[#allocation12 + $0x3b4] sm:$0xf]
    %v2913 = vld [vmem:[#allocation12 + $0x3b8] sm:$0xff]
    %v2914 = vld [vmem:[#allocation12 + $0x3c0] sm:$0xff]
    %v2915 = vld [vmem:[#allocation12 + $0x3c8] sm:$0xff]
    %v2916 = vld [vmem:[#allocation12 + $0x3d0] sm:$0xf]
    %v2917 = vld [vmem:[#allocation12 + $0x3d4] sm:$0xff]
    %v2918 = vld [vmem:[#allocation12 + $0x3dc] sm:$0xff]
    %v2919 = vld [vmem:[#allocation12 + $0x3e4] sm:$0xff]
    %v2920 = vld [vmem:[#allocation12 + $0x3ec] sm:$0xf]
    %v2921 = vld [vmem:[#allocation12 + $0x3f0] sm:$0xff]
    %v2922 = vld [vmem:[#allocation12 + $0x3f8] sm:$0xff]
    %v2923 = vld [vmem:[#allocation12 + $0x400] sm:$0xff]
    %v2924 = vld [vmem:[#allocation12 + $0x408] sm:$0xf]
    %v2925 = vld [vmem:[#allocation12 + $0x40c] sm:$0xff]
    %v2926 = vld [vmem:[#allocation12 + $0x414] sm:$0xff]
    %v2927 = vld [vmem:[#allocation12 + $0x41c] sm:$0xff]
    %v2928 = vld [vmem:[#allocation12 + $0x424] sm:$0xf]
    %v2929 = vld [vmem:[#allocation12 + $0x428] sm:$0xff]
    %v2930 = vld [vmem:[#allocation12 + $0x430] sm:$0xff]
    %v2931 = vld [vmem:[#allocation12 + $0x438] sm:$0xff]
    %v2932 = vld [vmem:[#allocation12 + $0x440] sm:$0xf]
    %v2933 = vld [vmem:[#allocation12 + $0x444] sm:$0xff]
    %v2934 = vld [vmem:[#allocation12 + $0x44c] sm:$0xff]
    %v2935 = vld [vmem:[#allocation12 + $0x454] sm:$0xff]
    %v2936 = vld [vmem:[#allocation12 + $0x45c] sm:$0xf]
    %v2937 = vld [vmem:[#allocation12 + $0x460] sm:$0xff]
    %v2938 = vld [vmem:[#allocation12 + $0x468] sm:$0xff]
    %v2939 = vld [vmem:[#allocation12 + $0x470] sm:$0xff]
    %v2940 = vld [vmem:[#allocation12 + $0x478] sm:$0xf]
    %v2941 = vld [vmem:[#allocation12 + $0x47c] sm:$0xff]
    %v2942 = vld [vmem:[#allocation12 + $0x484] sm:$0xff]
    %v2943 = vld [vmem:[#allocation12 + $0x48c] sm:$0xff]
    %v2944 = vld [vmem:[#allocation12 + $0x494] sm:$0xf]
    %v2945 = vld [vmem:[#allocation12 + $0x498] sm:$0xff]
    %v2946 = vld [vmem:[#allocation12 + $0x4a0] sm:$0xff]
    %v2947 = vld [vmem:[#allocation12 + $0x4a8] sm:$0xff]
    %v2948 = vld [vmem:[#allocation12 + $0x4b0] sm:$0xf]
    %v2949 = vld [vmem:[#allocation12 + $0x4b4] sm:$0xff]
    %v2950 = vld [vmem:[#allocation12 + $0x4bc] sm:$0xff]
    %v2951 = vld [vmem:[#allocation12 + $0x4c4] sm:$0xff]
    %v2952 = vld [vmem:[#allocation12 + $0x4cc] sm:$0xf]
    %v2953 = vld [vmem:[#allocation12 + $0x4d0] sm:$0xff]
    %v2954 = vld [vmem:[#allocation12 + $0x4d8] sm:$0xff]
    %v2955 = vld [vmem:[#allocation12 + $0x4e0] sm:$0xff]
    %v2956 = vld [vmem:[#allocation12 + $0x4e8] sm:$0xf]
    %v2957 = vld [vmem:[#allocation12 + $0x4ec] sm:$0xff]
    %v2958 = vld [vmem:[#allocation12 + $0x4f4] sm:$0xff]
    %v2959 = vld [vmem:[#allocation12 + $0x4fc] sm:$0xff]
    %v2960 = vld [vmem:[#allocation12 + $0x504] sm:$0xf]
    %v2961 = vld [vmem:[#allocation12 + $0x508] sm:$0xff]
    %v2962 = vld [vmem:[#allocation12 + $0x510] sm:$0xff]
    %v2963 = vld [vmem:[#allocation12 + $0x518] sm:$0xff]
    %v2964 = vld [vmem:[#allocation12 + $0x520] sm:$0xf]
    %v2965 = vld [vmem:[#allocation12 + $0x524] sm:$0xff]
    %v2966 = vld [vmem:[#allocation12 + $0x52c] sm:$0xff]
    %v2967 = vld [vmem:[#allocation12 + $0x534] sm:$0xff]
    %v2968 = vld [vmem:[#allocation12 + $0x53c] sm:$0xf]
    %v2969 = vld [vmem:[#allocation12 + $0x540] sm:$0xff]
    %v2970 = vld [vmem:[#allocation12 + $0x548] sm:$0xff]
    %v2971 = vld [vmem:[#allocation12 + $0x550] sm:$0xff]
    %v2972 = vld [vmem:[#allocation12 + $0x558] sm:$0xf]
    %v2973 = vld [vmem:[#allocation12 + $0x55c] sm:$0xff]
    %v2974 = vld [vmem:[#allocation12 + $0x564] sm:$0xff]
    %v2975 = vld [vmem:[#allocation12 + $0x56c] sm:$0xff]
    %v2976 = vld [vmem:[#allocation12 + $0x574] sm:$0xf]
    %v2977 = vld [vmem:[#allocation12 + $0x578] sm:$0xff]
    %v2978 = vld [vmem:[#allocation12 + $0x580] sm:$0xff]
    %v2979 = vld [vmem:[#allocation12 + $0x588] sm:$0xff]
    %v2980 = vld [vmem:[#allocation12 + $0x590] sm:$0xf]
    %v2981 = vld [vmem:[#allocation12 + $0x594] sm:$0xff]
    %v2982 = vld [vmem:[#allocation12 + $0x59c] sm:$0xff]
    %v2983 = vld [vmem:[#allocation12 + $0x5a4] sm:$0xff]
    %v2984 = vld [vmem:[#allocation12 + $0x5ac] sm:$0xf]
    %v2985 = vld [vmem:[#allocation12 + $0x5b0] sm:$0xff]
    %v2986 = vld [vmem:[#allocation12 + $0x5b8] sm:$0xff]
    %v2987 = vld [vmem:[#allocation12 + $0x5c0] sm:$0xff]
    %v2988 = vld [vmem:[#allocation12 + $0x5c8] sm:$0xf]
    %v2989 = vld [vmem:[#allocation12 + $0x5cc] sm:$0xff]
    %v2990 = vld [vmem:[#allocation12 + $0x5d4] sm:$0xff]
    %v2991 = vld [vmem:[#allocation12 + $0x5dc] sm:$0xff]
    %v2992 = vld [vmem:[#allocation12 + $0x5e4] sm:$0xf]
    %v2993 = vld [vmem:[#allocation12 + $0x5e8] sm:$0xff]
    %v2994 = vld [vmem:[#allocation12 + $0x5f0] sm:$0xff]
    %v2995 = vld [vmem:[#allocation12 + $0x5f8] sm:$0xff]
    %v2996 = vld [vmem:[#allocation12 + $0x600] sm:$0xf]
    %v2997 = vld [vmem:[#allocation12 + $0x604] sm:$0xff]
    %v2998 = vld [vmem:[#allocation12 + $0x60c] sm:$0xff]
    %v2999 = vld [vmem:[#allocation12 + $0x614] sm:$0xff]
    %v3000 = vld [vmem:[#allocation12 + $0x61c] sm:$0xf]
    %v3001 = vld [vmem:[#allocation12 + $0x620] sm:$0xff]
    %v3002 = vld [vmem:[#allocation12 + $0x628] sm:$0xff]
    %v3003 = vld [vmem:[#allocation12 + $0x630] sm:$0xff]
    %v3004 = vld [vmem:[#allocation12 + $0x638] sm:$0xf]
    %v3005 = vld [vmem:[#allocation12 + $0x63c] sm:$0xff]
    %v3006 = vld [vmem:[#allocation12 + $0x644] sm:$0xff]
    %v3007 = vld [vmem:[#allocation12 + $0x64c] sm:$0xff]
    %v3008 = vld [vmem:[#allocation12 + $0x654] sm:$0xf]
    %v3009 = vld [vmem:[#allocation12 + $0x658] sm:$0xff]
    %v3010 = vld [vmem:[#allocation12 + $0x660] sm:$0xff]
    %v3011 = vld [vmem:[#allocation12 + $0x668] sm:$0xff]
    %v3012 = vld [vmem:[#allocation12 + $0x670] sm:$0xf]
    %v3013 = vld [vmem:[#allocation12 + $0x674] sm:$0xff]
    %v3014 = vld [vmem:[#allocation12 + $0x67c] sm:$0xff]
    %v3015 = vld [vmem:[#allocation12 + $0x684] sm:$0xff]
    %v3016 = vld [vmem:[#allocation12 + $0x68c] sm:$0xf]
    %v3017 = vld [vmem:[#allocation12 + $0x690] sm:$0xff]
    %v3018 = vld [vmem:[#allocation12 + $0x698] sm:$0xff]
    %v3019 = vld [vmem:[#allocation12 + $0x6a0] sm:$0xff]
    %v3020 = vld [vmem:[#allocation12 + $0x6a8] sm:$0xf]
    %v3021 = vld [vmem:[#allocation12 + $0x6ac] sm:$0xff]
    %v3022 = vld [vmem:[#allocation12 + $0x6b4] sm:$0xff]
    %v3023 = vld [vmem:[#allocation12 + $0x6bc] sm:$0xff]
    %v3024 = vld [vmem:[#allocation12 + $0x6c4] sm:$0xf]
    %v3025 = vld [vmem:[#allocation12 + $0x6c8] sm:$0xff]
    %v3026 = vld [vmem:[#allocation12 + $0x6d0] sm:$0xff]
    %v3027 = vld [vmem:[#allocation12 + $0x6d8] sm:$0xff]
    %v3028 = vld [vmem:[#allocation12 + $0x6e0] sm:$0xf]
    %v3029 = vld [vmem:[#allocation12 + $0x6e4] sm:$0xff]
    %v3030 = vld [vmem:[#allocation12 + $0x6ec] sm:$0xff]
    %v3031 = vld [vmem:[#allocation12 + $0x6f4] sm:$0xff]
    %v3032 = vld [vmem:[#allocation12 + $0x6fc] sm:$0xf]
    %v3033 = vld [vmem:[#allocation12 + $0x700] sm:$0xff]
    %v3034 = vld [vmem:[#allocation12 + $0x708] sm:$0xff]
    %v3035 = vld [vmem:[#allocation12 + $0x710] sm:$0xff]
    %v3036 = vld [vmem:[#allocation12 + $0x718] sm:$0xf]
    %v3037 = vld [vmem:[#allocation12 + $0x71c] sm:$0xff]
    %v3038 = vld [vmem:[#allocation12 + $0x724] sm:$0xff]
    %v3039 = vld [vmem:[#allocation12 + $0x72c] sm:$0xff]
    %v3040 = vld [vmem:[#allocation12 + $0x734] sm:$0xf]
    %v3041 = vld [vmem:[#allocation12 + $0x738] sm:$0xff]
    %v3042 = vld [vmem:[#allocation12 + $0x740] sm:$0xff]
    %v3043 = vld [vmem:[#allocation12 + $0x748] sm:$0xff]
    %v3044 = vld [vmem:[#allocation12 + $0x750] sm:$0xf]
    %v3045 = vld [vmem:[#allocation12 + $0x754] sm:$0xff]
    %v3046 = vld [vmem:[#allocation12 + $0x75c] sm:$0xff]
    %v3047 = vld [vmem:[#allocation12 + $0x764] sm:$0xff]
    %v3048 = vld [vmem:[#allocation12 + $0x76c] sm:$0xf]
    %v3049 = vld [vmem:[#allocation12 + $0x770] sm:$0xff]
    %v3050 = vld [vmem:[#allocation12 + $0x778] sm:$0xff]
    %v3051 = vld [vmem:[#allocation12 + $0x780] sm:$0xff]
    %v3052 = vld [vmem:[#allocation12 + $0x788] sm:$0xf]
    %v3053 = vld [vmem:[#allocation12 + $0x78c] sm:$0xff]
    %v3054 = vld [vmem:[#allocation12 + $0x794] sm:$0xff]
    %v3055 = vld [vmem:[#allocation12 + $0x79c] sm:$0xff]
    %v3056 = vld [vmem:[#allocation12 + $0x7a4] sm:$0xf]
    %v3057 = vld [vmem:[#allocation12 + $0x7a8] sm:$0xff]
    %v3058 = vld [vmem:[#allocation12 + $0x7b0] sm:$0xff]
    %v3059 = vld [vmem:[#allocation12 + $0x7b8] sm:$0xff]
    %v3060 = vld [vmem:[#allocation12 + $0x7c0] sm:$0xf]
    %v3061 = vld [vmem:[#allocation12 + $0x7c4] sm:$0xff]
    %v3062 = vld [vmem:[#allocation12 + $0x7cc] sm:$0xff]
    %v3063 = vld [vmem:[#allocation12 + $0x7d4] sm:$0xff]
    %v3064 = vld [vmem:[#allocation12 + $0x7dc] sm:$0xf]
    %v3065 = vld [vmem:[#allocation12 + $0x7e0] sm:$0xff]
    %v3066 = vld [vmem:[#allocation12 + $0x7e8] sm:$0xff]
    %v3067 = vld [vmem:[#allocation12 + $0x7f0] sm:$0xff]
    %v3068 = vld [vmem:[#allocation12 + $0x7f8] sm:$0xf]
    %v3069 = vld [vmem:[#allocation12 + $0x7fc] sm:$0xff]
    %v3070 = vld [vmem:[#allocation12 + $0x804] sm:$0xff]
    %v3071 = vld [vmem:[#allocation12 + $0x80c] sm:$0xff]
    %v3072 = vld [vmem:[#allocation12 + $0x814] sm:$0xf]
    %v3073 = vld [vmem:[#allocation12 + $0x818] sm:$0xff]
    %v3074 = vld [vmem:[#allocation12 + $0x820] sm:$0xff]
    %v3075 = vld [vmem:[#allocation12 + $0x828] sm:$0xff]
    %v3076 = vld [vmem:[#allocation12 + $0x830] sm:$0xf]
    %v3077 = vld [vmem:[#allocation12 + $0x834] sm:$0xff]
    %v3078 = vld [vmem:[#allocation12 + $0x83c] sm:$0xff]
    %v3079 = vld [vmem:[#allocation12 + $0x844] sm:$0xff]
    %v3080 = vld [vmem:[#allocation12 + $0x84c] sm:$0xf]
    %v3081 = vld [vmem:[#allocation12 + $0x850] sm:$0xff]
    %v3082 = vld [vmem:[#allocation12 + $0x858] sm:$0xff]
    %v3083 = vld [vmem:[#allocation12 + $0x860] sm:$0xff]
    %v3084 = vld [vmem:[#allocation12 + $0x868] sm:$0xf]
    %v3085 = vld [vmem:[#allocation12 + $0x86c] sm:$0xff]
    %v3086 = vld [vmem:[#allocation12 + $0x874] sm:$0xff]
    %v3087 = vld [vmem:[#allocation12 + $0x87c] sm:$0xff]
    %v3088 = vld [vmem:[#allocation12 + $0x884] sm:$0xf]
    %v3089 = vld [vmem:[#allocation12 + $0x888] sm:$0xff]
    %v3090 = vld [vmem:[#allocation12 + $0x890] sm:$0xff]
    %v3091 = vld [vmem:[#allocation12 + $0x898] sm:$0xff]
    %v3092 = vld [vmem:[#allocation12 + $0x8a0] sm:$0xf]
    %v3093 = vld [vmem:[#allocation12 + $0x8a4] sm:$0xff]
    %v3094 = vld [vmem:[#allocation12 + $0x8ac] sm:$0xff]
    %v3095 = vld [vmem:[#allocation12 + $0x8b4] sm:$0xff]
    %v3096 = vld [vmem:[#allocation12 + $0x8bc] sm:$0xf]
    %v3097 = vld [vmem:[#allocation12 + $0x8c0] sm:$0xff]
    %v3098 = vld [vmem:[#allocation12 + $0x8c8] sm:$0xff]
    %v3099 = vld [vmem:[#allocation12 + $0x8d0] sm:$0xff]
    %v3100 = vld [vmem:[#allocation12 + $0x8d8] sm:$0xf]
    %v3101 = vld [vmem:[#allocation12 + $0x8dc] sm:$0xff]
    %v3102 = vld [vmem:[#allocation12 + $0x8e4] sm:$0xff]
    %v3103 = vld [vmem:[#allocation12 + $0x8ec] sm:$0xff]
    %v3104 = vld [vmem:[#allocation12 + $0x8f4] sm:$0xf]
    %v3105 = vld [vmem:[#allocation12 + $0x8f8] sm:$0xff]
    %v3106 = vld [vmem:[#allocation12 + $0x900] sm:$0xff]
    %v3107 = vld [vmem:[#allocation12 + $0x908] sm:$0xff]
    %v3108 = vld [vmem:[#allocation12 + $0x910] sm:$0xf]
    %v3109 = vld [vmem:[#allocation12 + $0x914] sm:$0xff]
    %v3110 = vld [vmem:[#allocation12 + $0x91c] sm:$0xff]
    %v3111 = vld [vmem:[#allocation12 + $0x924] sm:$0xff]
    %v3112 = vld [vmem:[#allocation12 + $0x92c] sm:$0xf]
    %v3113 = vld [vmem:[#allocation12 + $0x930] sm:$0xff]
    %v3114 = vld [vmem:[#allocation12 + $0x938] sm:$0xff]
    %v3115 = vld [vmem:[#allocation12 + $0x940] sm:$0xff]
    %v3116 = vld [vmem:[#allocation12 + $0x948] sm:$0xf]
    %v3117 = vld [vmem:[#allocation12 + $0x94c] sm:$0xff]
    %v3118 = vld [vmem:[#allocation12 + $0x954] sm:$0xff]
    %v3119 = vld [vmem:[#allocation12 + $0x95c] sm:$0xff]
    %v3120 = vld [vmem:[#allocation12 + $0x964] sm:$0xf]
    %v3121 = vld [vmem:[#allocation12 + $0x968] sm:$0xff]
    %v3122 = vld [vmem:[#allocation12 + $0x970] sm:$0xff]
    %v3123 = vld [vmem:[#allocation12 + $0x978] sm:$0xff]
    %v3124 = vld [vmem:[#allocation12 + $0x980] sm:$0xf]
    %v3125 = vld [vmem:[#allocation12 + $0x984] sm:$0xff]
    %v3126 = vld [vmem:[#allocation12 + $0x98c] sm:$0xff]
    %v3127 = vld [vmem:[#allocation12 + $0x994] sm:$0xff]
    %v3128 = vld [vmem:[#allocation12 + $0x99c] sm:$0xf]
    %v3129 = vld [vmem:[#allocation12 + $0x9a0] sm:$0xff]
    %v3130 = vld [vmem:[#allocation12 + $0x9a8] sm:$0xff]
    %v3131 = vld [vmem:[#allocation12 + $0x9b0] sm:$0xff]
    %v3132 = vld [vmem:[#allocation12 + $0x9b8] sm:$0xf]
    %v3133 = vld [vmem:[#allocation12 + $0x9bc] sm:$0xff]
    %v3134 = vld [vmem:[#allocation12 + $0x9c4] sm:$0xff]
    %v3135 = vld [vmem:[#allocation12 + $0x9cc] sm:$0xff]
    %v3136 = vld [vmem:[#allocation12 + $0x9d4] sm:$0xf]
    %v3137 = vld [vmem:[#allocation12 + $0x9d8] sm:$0xff]
    %v3138 = vld [vmem:[#allocation12 + $0x9e0] sm:$0xff]
    %v3139 = vld [vmem:[#allocation12 + $0x9e8] sm:$0xff]
    %v3140 = vld [vmem:[#allocation12 + $0x9f0] sm:$0xf]
    %v3141 = vld [vmem:[#allocation12 + $0x9f4] sm:$0xff]
    %v3142 = vld [vmem:[#allocation12 + $0x9fc] sm:$0xff]
    %v3143 = vld [vmem:[#allocation12 + $0xa04] sm:$0xff]
    %v3144 = vld [vmem:[#allocation12 + $0xa0c] sm:$0xf]
    %v3145 = vld [vmem:[#allocation12 + $0xa10] sm:$0xff]
    %v3146 = vld [vmem:[#allocation12 + $0xa18] sm:$0xff]
    %v3147 = vld [vmem:[#allocation12 + $0xa20] sm:$0xff]
    %v3148 = vld [vmem:[#allocation12 + $0xa28] sm:$0xf]
    %v3149 = vld [vmem:[#allocation12 + $0xa2c] sm:$0xff]
    %v3150 = vld [vmem:[#allocation12 + $0xa34] sm:$0xff]
    %v3151 = vld [vmem:[#allocation12 + $0xa3c] sm:$0xff]
    %v3152 = vld [vmem:[#allocation12 + $0xa44] sm:$0xf]
    %v3153 = vld [vmem:[#allocation12 + $0xa48] sm:$0xff]
    %v3154 = vld [vmem:[#allocation12 + $0xa50] sm:$0xff]
    %v3155 = vld [vmem:[#allocation12 + $0xa58] sm:$0xff]
    %v3156 = vld [vmem:[#allocation12 + $0xa60] sm:$0xf]
    %v3157 = vld [vmem:[#allocation12 + $0xa64] sm:$0xff]
    %v3158 = vld [vmem:[#allocation12 + $0xa6c] sm:$0xff]
    %v3159 = vld [vmem:[#allocation12 + $0xa74] sm:$0xff]
    %v3160 = vld [vmem:[#allocation12 + $0xa7c] sm:$0xf]
    %v3161 = vld [vmem:[#allocation12 + $0xa80] sm:$0xff]
    %v3162 = vld [vmem:[#allocation12 + $0xa88] sm:$0xff]
    %v3163 = vld [vmem:[#allocation12 + $0xa90] sm:$0xff]
    %v3164 = vld [vmem:[#allocation12 + $0xa98] sm:$0xf]
    %v3165 = vld [vmem:[#allocation12 + $0xa9c] sm:$0xff]
    %v3166 = vld [vmem:[#allocation12 + $0xaa4] sm:$0xff]
    %v3167 = vld [vmem:[#allocation12 + $0xaac] sm:$0xff]
    %v3168 = vld [vmem:[#allocation12 + $0xab4] sm:$0xf]
    %v3169 = vld [vmem:[#allocation12 + $0xab8] sm:$0xff]
    %v3170 = vld [vmem:[#allocation12 + $0xac0] sm:$0xff]
    %v3171 = vld [vmem:[#allocation12 + $0xac8] sm:$0xff]
    %v3172 = vld [vmem:[#allocation12 + $0xad0] sm:$0xf]
    %v3173 = vld [vmem:[#allocation12 + $0xad4] sm:$0xff]
    %v3174 = vld [vmem:[#allocation12 + $0xadc] sm:$0xff]
    %v3175 = vld [vmem:[#allocation12 + $0xae4] sm:$0xff]
    %v3176 = vld [vmem:[#allocation12 + $0xaec] sm:$0xf]
    %v3177 = vld [vmem:[#allocation12 + $0xaf0] sm:$0xff]
    %v3178 = vld [vmem:[#allocation12 + $0xaf8] sm:$0xff]
    %v3179 = vld [vmem:[#allocation12 + $0xb00] sm:$0xff]
    %v3180 = vld [vmem:[#allocation12 + $0xb08] sm:$0xf]
    %v3181 = vld [vmem:[#allocation12 + $0xb0c] sm:$0xff]
    %v3182 = vld [vmem:[#allocation12 + $0xb14] sm:$0xff]
    %v3183 = vld [vmem:[#allocation12 + $0xb1c] sm:$0xff]
    %v3184 = vld [vmem:[#allocation12 + $0xb24] sm:$0xf]
    %v3185 = vld [vmem:[#allocation12 + $0xb28] sm:$0xff]
    %v3186 = vld [vmem:[#allocation12 + $0xb30] sm:$0xff]
    %v3187 = vld [vmem:[#allocation12 + $0xb38] sm:$0xff]
    %v3188 = vld [vmem:[#allocation12 + $0xb40] sm:$0xf]
    %v3189 = vld [vmem:[#allocation12 + $0xb44] sm:$0xff]
    %v3190 = vld [vmem:[#allocation12 + $0xb4c] sm:$0xff]
    %v3191 = vld [vmem:[#allocation12 + $0xb54] sm:$0xff]
    %v3192 = vld [vmem:[#allocation12 + $0xb5c] sm:$0xf]
    %v3193 = vld [vmem:[#allocation12 + $0xb60] sm:$0xff]
    %v3194 = vld [vmem:[#allocation12 + $0xb68] sm:$0xff]
    %v3195 = vld [vmem:[#allocation12 + $0xb70] sm:$0xff]
    %v3196 = vld [vmem:[#allocation12 + $0xb78] sm:$0xf]
    %v3197 = vld [vmem:[#allocation12 + $0xb7c] sm:$0xff]
    %v3198 = vld [vmem:[#allocation12 + $0xb84] sm:$0xff]
    %v3199 = vld [vmem:[#allocation12 + $0xb8c] sm:$0xff]
    %v3200 = vld [vmem:[#allocation12 + $0xb94] sm:$0xf]
    %v3201 = vld [vmem:[#allocation12 + $0xb98] sm:$0xff]
    %v3202 = vld [vmem:[#allocation12 + $0xba0] sm:$0xff]
    %v3203 = vld [vmem:[#allocation12 + $0xba8] sm:$0xff]
    %v3204 = vld [vmem:[#allocation12 + $0xbb0] sm:$0xf]
    %v3205 = vld [vmem:[#allocation12 + $0xbb4] sm:$0xff]
    %v3206 = vld [vmem:[#allocation12 + $0xbbc] sm:$0xff]
    %v3207 = vld [vmem:[#allocation12 + $0xbc4] sm:$0xff]
    %v3208 = vld [vmem:[#allocation12 + $0xbcc] sm:$0xf]
    %v3209 = vld [vmem:[#allocation12 + $0xbd0] sm:$0xff]
    %v3210 = vld [vmem:[#allocation12 + $0xbd8] sm:$0xff]
    %v3211 = vld [vmem:[#allocation12 + $0xbe0] sm:$0xff]
    %v3212 = vld [vmem:[#allocation12 + $0xbe8] sm:$0xf]
    %v3213 = vld [vmem:[#allocation12 + $0xbec] sm:$0xff]
    %v3214 = vld [vmem:[#allocation12 + $0xbf4] sm:$0xff]
    %v3215 = vld [vmem:[#allocation12 + $0xbfc] sm:$0xff]
    %v3216 = vld [vmem:[#allocation12 + $0xc04] sm:$0xf]
    %v3217 = vld [vmem:[#allocation12 + $0xc08] sm:$0xff]
    %v3218 = vld [vmem:[#allocation12 + $0xc10] sm:$0xff]
    %v3219 = vld [vmem:[#allocation12 + $0xc18] sm:$0xff]
    %v3220 = vld [vmem:[#allocation12 + $0xc20] sm:$0xf]
    %v3221 = vld [vmem:[#allocation12 + $0xc24] sm:$0xff]
    %v3222 = vld [vmem:[#allocation12 + $0xc2c] sm:$0xff]
    %v3223 = vld [vmem:[#allocation12 + $0xc34] sm:$0xff]
    %v3224 = vld [vmem:[#allocation12 + $0xc3c] sm:$0xf]
    %v3225 = vld [vmem:[#allocation12 + $0xc40] sm:$0xff]
    %v3226 = vld [vmem:[#allocation12 + $0xc48] sm:$0xff]
    %v3227 = vld [vmem:[#allocation12 + $0xc50] sm:$0xff]
    %v3228 = vld [vmem:[#allocation12 + $0xc58] sm:$0xf]
    %v3229 = vld [vmem:[#allocation12 + $0xc5c] sm:$0xff]
    %v3230 = vld [vmem:[#allocation12 + $0xc64] sm:$0xff]
    %v3231 = vld [vmem:[#allocation12 + $0xc6c] sm:$0xff]
    %v3232 = vld [vmem:[#allocation12 + $0xc74] sm:$0xf]
    %v3233 = vld [vmem:[#allocation12 + $0xc78] sm:$0xff]
    %v3234 = vld [vmem:[#allocation12 + $0xc80] sm:$0xff]
    %v3235 = vld [vmem:[#allocation12 + $0xc88] sm:$0xff]
    %v3236 = vld [vmem:[#allocation12 + $0xc90] sm:$0xf]
    %v3237 = vld [vmem:[#allocation12 + $0xc94] sm:$0xff]
    %v3238 = vld [vmem:[#allocation12 + $0xc9c] sm:$0xff]
    %v3239 = vld [vmem:[#allocation12 + $0xca4] sm:$0xff]
    %v3240 = vld [vmem:[#allocation12 + $0xcac] sm:$0xf]
    %v3241 = vld [vmem:[#allocation12 + $0xcb0] sm:$0xff]
    %v3242 = vld [vmem:[#allocation12 + $0xcb8] sm:$0xff]
    %v3243 = vld [vmem:[#allocation12 + $0xcc0] sm:$0xff]
    %v3244 = vld [vmem:[#allocation12 + $0xcc8] sm:$0xf]
    %v3245 = vld [vmem:[#allocation12 + $0xccc] sm:$0xff]
    %v3246 = vld [vmem:[#allocation12 + $0xcd4] sm:$0xff]
    %v3247 = vld [vmem:[#allocation12 + $0xcdc] sm:$0xff]
    %v3248 = vld [vmem:[#allocation12 + $0xce4] sm:$0xf]
    %v3249 = vld [vmem:[#allocation12 + $0xce8] sm:$0xff]
    %v3250 = vld [vmem:[#allocation12 + $0xcf0] sm:$0xff]
    %v3251 = vld [vmem:[#allocation12 + $0xcf8] sm:$0xff]
    %v3252 = vld [vmem:[#allocation12 + $0xd00] sm:$0xf]
    %v3253 = vld [vmem:[#allocation12 + $0xd04] sm:$0xff]
    %v3254 = vld [vmem:[#allocation12 + $0xd0c] sm:$0xff]
    %v3255 = vld [vmem:[#allocation12 + $0xd14] sm:$0xff]
    %v3256 = vld [vmem:[#allocation12 + $0xd1c] sm:$0xf]
    %v3257 = vld [vmem:[#allocation12 + $0xd20] sm:$0xff]
    %v3258 = vld [vmem:[#allocation12 + $0xd28] sm:$0xff]
    %v3259 = vld [vmem:[#allocation12 + $0xd30] sm:$0xff]
    %v3260 = vld [vmem:[#allocation12 + $0xd38] sm:$0xf]
    %v3261 = vld [vmem:[#allocation12 + $0xd3c] sm:$0xff]
    %v3262 = vld [vmem:[#allocation12 + $0xd44] sm:$0xff]
    %v3263 = vld [vmem:[#allocation12 + $0xd4c] sm:$0xff]
    %v3264 = vld [vmem:[#allocation12 + $0xd54] sm:$0xf]
    %v3265 = vld [vmem:[#allocation12 + $0xd58] sm:$0xff]
    %v3266 = vld [vmem:[#allocation12 + $0xd60] sm:$0xff]
    %v3267 = vld [vmem:[#allocation12 + $0xd68] sm:$0xff]
    %v3268 = vld [vmem:[#allocation12 + $0xd70] sm:$0xf]
    %v3269 = vld [vmem:[#allocation12 + $0xd74] sm:$0xff]
    %v3270 = vld [vmem:[#allocation12 + $0xd7c] sm:$0xff]
    %v3271 = vld [vmem:[#allocation12 + $0xd84] sm:$0xff]
    %v3272 = vld [vmem:[#allocation12 + $0xd8c] sm:$0xf]
    %v3273 = vld [vmem:[#allocation12 + $0xd90] sm:$0xff]
    %v3274 = vld [vmem:[#allocation12 + $0xd98] sm:$0xff]
    %v3275 = vld [vmem:[#allocation12 + $0xda0] sm:$0xff]
    %v3276 = vld [vmem:[#allocation12 + $0xda8] sm:$0xf]
    %v3277 = vld [vmem:[#allocation12 + $0xdac] sm:$0xff]
    %v3278 = vld [vmem:[#allocation12 + $0xdb4] sm:$0xff]
    %v3279 = vld [vmem:[#allocation12 + $0xdbc] sm:$0xff]
    %v3280 = vld [vmem:[#allocation12 + $0xdc4] sm:$0xf]
    %v3281 = vld [vmem:[#allocation12 + $0xdc8] sm:$0xff]
    %v3282 = vld [vmem:[#allocation12 + $0xdd0] sm:$0xff]
    %v3283 = vld [vmem:[#allocation12 + $0xdd8] sm:$0xff]
    %v3284 = vld [vmem:[#allocation12 + $0xde0] sm:$0xf]
    %v3285 = vld [vmem:[#allocation12 + $0xde4] sm:$0xff]
    %v3286 = vld [vmem:[#allocation12 + $0xdec] sm:$0xff]
    %v3287 = vld [vmem:[#allocation12 + $0xdf4] sm:$0xff]
    %v3288 = vld [vmem:[#allocation12 + $0xdfc] sm:$0xf]
    %v3289 = vld [vmem:[#allocation13] sm:$0xff]
    %v3291 = vlaneseq
    %v3292 = vshrl.u32 %v3291, 7
    %v3293 = vsub.s32 0, %v3292
    %v3294 = vrot.slane %v3289, %v3293
    %v3295 = vlaneseq
    %v3296 = vshrl.u32 %v3295, 7
    %v3297 = vsub.s32 1, %v3296
    %v3298 = vrot.slane %v3289, %v3297
    %v3299 = vlaneseq
    %v3300 = vshrl.u32 %v3299, 7
    %v3301 = vsub.s32 2, %v3300
    %v3302 = vrot.slane %v3289, %v3301
    %v3303 = vlaneseq
    %v3304 = vshrl.u32 %v3303, 7
    %v3305 = vsub.s32 3, %v3304
    %v3306 = vrot.slane %v3289, %v3305
    %v3307 = vlaneseq
    %v3308 = vshrl.u32 %v3307, 7
    %v3309 = vsub.s32 4, %v3308
    %v3310 = vrot.slane %v3289, %v3309
    %v3311 = vlaneseq
    %v3312 = vshrl.u32 %v3311, 7
    %v3313 = vsub.s32 5, %v3312
    %v3314 = vrot.slane %v3289, %v3313
    %v3315 = vlaneseq
    %v3316 = vshrl.u32 %v3315, 7
    %v3317 = vsub.s32 6, %v3316
    %v3318 = vrot.slane %v3289, %v3317
    %v3838 = vunpack.c.l.b16 %v2777
    %v3839 = vunpack.c.h.b16 %v2777
    %v3840 = vunpack.c.l.b16 %v2778
    %v3841 = vunpack.c.h.b16 %v2778
    %v3842 = vunpack.c.l.b16 %v2779
    %v3843 = vunpack.c.h.b16 %v2779
    %v3844 = vunpack.c.l.b16 %v2780
    %v3845 = vunpack.c.l.b16 %v2781
    %v3846 = vunpack.c.h.b16 %v2781
    %v3847 = vunpack.c.l.b16 %v2782
    %v3848 = vunpack.c.h.b16 %v2782
    %v3849 = vunpack.c.l.b16 %v2783
    %v3850 = vunpack.c.h.b16 %v2783
    %v3851 = vunpack.c.l.b16 %v2784
    %v3852 = vunpack.c.l.b16 %v2785
    %v3853 = vunpack.c.h.b16 %v2785
    %v3854 = vunpack.c.l.b16 %v2786
    %v3855 = vunpack.c.h.b16 %v2786
    %v3856 = vunpack.c.l.b16 %v2787
    %v3857 = vunpack.c.h.b16 %v2787
    %v3858 = vunpack.c.l.b16 %v2788
    %v3859 = vunpack.c.l.b16 %v2789
    %v3860 = vunpack.c.h.b16 %v2789
    %v3861 = vunpack.c.l.b16 %v2790
    %v3862 = vunpack.c.h.b16 %v2790
    %v3863 = vunpack.c.l.b16 %v2791
    %v3864 = vunpack.c.h.b16 %v2791
    %v3865 = vunpack.c.l.b16 %v2792
    %v3866 = vunpack.c.l.b16 %v2793
    %v3867 = vunpack.c.h.b16 %v2793
    %v3868 = vunpack.c.l.b16 %v2794
    %v3869 = vunpack.c.h.b16 %v2794
    %v3870 = vunpack.c.l.b16 %v2795
    %v3871 = vunpack.c.h.b16 %v2795
    %v3872 = vunpack.c.l.b16 %v2796
    %v3873 = vunpack.c.l.b16 %v2797
    %v3874 = vunpack.c.h.b16 %v2797
    %v3875 = vunpack.c.l.b16 %v2798
    %v3876 = vunpack.c.h.b16 %v2798
    %v3877 = vunpack.c.l.b16 %v2799
    %v3878 = vunpack.c.h.b16 %v2799
    %v3879 = vunpack.c.l.b16 %v2800
    %v3880 = vunpack.c.l.b16 %v2801
    %v3881 = vunpack.c.h.b16 %v2801
    %v3882 = vunpack.c.l.b16 %v2802
    %v3883 = vunpack.c.h.b16 %v2802
    %v3884 = vunpack.c.l.b16 %v2803
    %v3885 = vunpack.c.h.b16 %v2803
    %v3886 = vunpack.c.l.b16 %v2804
    %v3887 = vunpack.c.l.b16 %v2805
    %v3888 = vunpack.c.h.b16 %v2805
    %v3889 = vunpack.c.l.b16 %v2806
    %v3890 = vunpack.c.h.b16 %v2806
    %v3891 = vunpack.c.l.b16 %v2807
    %v3892 = vunpack.c.h.b16 %v2807
    %v3893 = vunpack.c.l.b16 %v2808
    %v3894 = vunpack.c.l.b16 %v2809
    %v3895 = vunpack.c.h.b16 %v2809
    %v3896 = vunpack.c.l.b16 %v2810
    %v3897 = vunpack.c.h.b16 %v2810
    %v3898 = vunpack.c.l.b16 %v2811
    %v3899 = vunpack.c.h.b16 %v2811
    %v3900 = vunpack.c.l.b16 %v2812
    %v3901 = vunpack.c.l.b16 %v2813
    %v3902 = vunpack.c.h.b16 %v2813
    %v3903 = vunpack.c.l.b16 %v2814
    %v3904 = vunpack.c.h.b16 %v2814
    %v3905 = vunpack.c.l.b16 %v2815
    %v3906 = vunpack.c.h.b16 %v2815
    %v3907 = vunpack.c.l.b16 %v2816
    %v3908 = vunpack.c.l.b16 %v2817
    %v3909 = vunpack.c.h.b16 %v2817
    %v3910 = vunpack.c.l.b16 %v2818
    %v3911 = vunpack.c.h.b16 %v2818
    %v3912 = vunpack.c.l.b16 %v2819
    %v3913 = vunpack.c.h.b16 %v2819
    %v3914 = vunpack.c.l.b16 %v2820
    %v3915 = vunpack.c.l.b16 %v2821
    %v3916 = vunpack.c.h.b16 %v2821
    %v3917 = vunpack.c.l.b16 %v2822
    %v3918 = vunpack.c.h.b16 %v2822
    %v3919 = vunpack.c.l.b16 %v2823
    %v3920 = vunpack.c.h.b16 %v2823
    %v3921 = vunpack.c.l.b16 %v2824
    %v3922 = vunpack.c.l.b16 %v2825
    %v3923 = vunpack.c.h.b16 %v2825
    %v3924 = vunpack.c.l.b16 %v2826
    %v3925 = vunpack.c.h.b16 %v2826
    %v3926 = vunpack.c.l.b16 %v2827
    %v3927 = vunpack.c.h.b16 %v2827
    %v3928 = vunpack.c.l.b16 %v2828
    %v3929 = vunpack.c.l.b16 %v2829
    %v3930 = vunpack.c.h.b16 %v2829
    %v3931 = vunpack.c.l.b16 %v2830
    %v3932 = vunpack.c.h.b16 %v2830
    %v3933 = vunpack.c.l.b16 %v2831
    %v3934 = vunpack.c.h.b16 %v2831
    %v3935 = vunpack.c.l.b16 %v2832
    %v3936 = vunpack.c.l.b16 %v2833
    %v3937 = vunpack.c.h.b16 %v2833
    %v3938 = vunpack.c.l.b16 %v2834
    %v3939 = vunpack.c.h.b16 %v2834
    %v3940 = vunpack.c.l.b16 %v2835
    %v3941 = vunpack.c.h.b16 %v2835
    %v3942 = vunpack.c.l.b16 %v2836
    %v3943 = vunpack.c.l.b16 %v2837
    %v3944 = vunpack.c.h.b16 %v2837
    %v3945 = vunpack.c.l.b16 %v2838
    %v3946 = vunpack.c.h.b16 %v2838
    %v3947 = vunpack.c.l.b16 %v2839
    %v3948 = vunpack.c.h.b16 %v2839
    %v3949 = vunpack.c.l.b16 %v2840
    %v3950 = vunpack.c.l.b16 %v2841
    %v3951 = vunpack.c.h.b16 %v2841
    %v3952 = vunpack.c.l.b16 %v2842
    %v3953 = vunpack.c.h.b16 %v2842
    %v3954 = vunpack.c.l.b16 %v2843
    %v3955 = vunpack.c.h.b16 %v2843
    %v3956 = vunpack.c.l.b16 %v2844
    %v3957 = vunpack.c.l.b16 %v2845
    %v3958 = vunpack.c.h.b16 %v2845
    %v3959 = vunpack.c.l.b16 %v2846
    %v3960 = vunpack.c.h.b16 %v2846
    %v3961 = vunpack.c.l.b16 %v2847
    %v3962 = vunpack.c.h.b16 %v2847
    %v3963 = vunpack.c.l.b16 %v2848
    %v3964 = vunpack.c.l.b16 %v2849
    %v3965 = vunpack.c.h.b16 %v2849
    %v3966 = vunpack.c.l.b16 %v2850
    %v3967 = vunpack.c.h.b16 %v2850
    %v3968 = vunpack.c.l.b16 %v2851
    %v3969 = vunpack.c.h.b16 %v2851
    %v3970 = vunpack.c.l.b16 %v2852
    %v3971 = vunpack.c.l.b16 %v2853
    %v3972 = vunpack.c.h.b16 %v2853
    %v3973 = vunpack.c.l.b16 %v2854
    %v3974 = vunpack.c.h.b16 %v2854
    %v3975 = vunpack.c.l.b16 %v2855
    %v3976 = vunpack.c.h.b16 %v2855
    %v3977 = vunpack.c.l.b16 %v2856
    %v3978 = vunpack.c.l.b16 %v2857
    %v3979 = vunpack.c.h.b16 %v2857
    %v3980 = vunpack.c.l.b16 %v2858
    %v3981 = vunpack.c.h.b16 %v2858
    %v3982 = vunpack.c.l.b16 %v2859
    %v3983 = vunpack.c.h.b16 %v2859
    %v3984 = vunpack.c.l.b16 %v2860
    %v3985 = vunpack.c.l.b16 %v2861
    %v3986 = vunpack.c.h.b16 %v2861
    %v3987 = vunpack.c.l.b16 %v2862
    %v3988 = vunpack.c.h.b16 %v2862
    %v3989 = vunpack.c.l.b16 %v2863
    %v3990 = vunpack.c.h.b16 %v2863
    %v3991 = vunpack.c.l.b16 %v2864
    %v3992 = vunpack.c.l.b16 %v2865
    %v3993 = vunpack.c.h.b16 %v2865
    %v3994 = vunpack.c.l.b16 %v2866
    %v3995 = vunpack.c.h.b16 %v2866
    %v3996 = vunpack.c.l.b16 %v2867
    %v3997 = vunpack.c.h.b16 %v2867
    %v3998 = vunpack.c.l.b16 %v2868
    %v3999 = vunpack.c.l.b16 %v2869
    %v4000 = vunpack.c.h.b16 %v2869
    %v4001 = vunpack.c.l.b16 %v2870
    %v4002 = vunpack.c.h.b16 %v2870
    %v4003 = vunpack.c.l.b16 %v2871
    %v4004 = vunpack.c.h.b16 %v2871
    %v4005 = vunpack.c.l.b16 %v2872
    %v4006 = vunpack.c.l.b16 %v2873
    %v4007 = vunpack.c.h.b16 %v2873
    %v4008 = vunpack.c.l.b16 %v2874
    %v4009 = vunpack.c.h.b16 %v2874
    %v4010 = vunpack.c.l.b16 %v2875
    %v4011 = vunpack.c.h.b16 %v2875
    %v4012 = vunpack.c.l.b16 %v2876
    %v4013 = vunpack.c.l.b16 %v2877
    %v4014 = vunpack.c.h.b16 %v2877
    %v4015 = vunpack.c.l.b16 %v2878
    %v4016 = vunpack.c.h.b16 %v2878
    %v4017 = vunpack.c.l.b16 %v2879
    %v4018 = vunpack.c.h.b16 %v2879
    %v4019 = vunpack.c.l.b16 %v2880
    %v4020 = vunpack.c.l.b16 %v2881
    %v4021 = vunpack.c.h.b16 %v2881
    %v4022 = vunpack.c.l.b16 %v2882
    %v4023 = vunpack.c.h.b16 %v2882
    %v4024 = vunpack.c.l.b16 %v2883
    %v4025 = vunpack.c.h.b16 %v2883
    %v4026 = vunpack.c.l.b16 %v2884
    %v4027 = vunpack.c.l.b16 %v2885
    %v4028 = vunpack.c.h.b16 %v2885
    %v4029 = vunpack.c.l.b16 %v2886
    %v4030 = vunpack.c.h.b16 %v2886
    %v4031 = vunpack.c.l.b16 %v2887
    %v4032 = vunpack.c.h.b16 %v2887
    %v4033 = vunpack.c.l.b16 %v2888
    %v4034 = vunpack.c.l.b16 %v2889
    %v4035 = vunpack.c.h.b16 %v2889
    %v4036 = vunpack.c.l.b16 %v2890
    %v4037 = vunpack.c.h.b16 %v2890
    %v4038 = vunpack.c.l.b16 %v2891
    %v4039 = vunpack.c.h.b16 %v2891
    %v4040 = vunpack.c.l.b16 %v2892
    %v4041 = vunpack.c.l.b16 %v2893
    %v4042 = vunpack.c.h.b16 %v2893
    %v4043 = vunpack.c.l.b16 %v2894
    %v4044 = vunpack.c.h.b16 %v2894
    %v4045 = vunpack.c.l.b16 %v2895
    %v4046 = vunpack.c.h.b16 %v2895
    %v4047 = vunpack.c.l.b16 %v2896
    %v4048 = vunpack.c.l.b16 %v2897
    %v4049 = vunpack.c.h.b16 %v2897
    %v4050 = vunpack.c.l.b16 %v2898
    %v4051 = vunpack.c.h.b16 %v2898
    %v4052 = vunpack.c.l.b16 %v2899
    %v4053 = vunpack.c.h.b16 %v2899
    %v4054 = vunpack.c.l.b16 %v2900
    %v4055 = vunpack.c.l.b16 %v2901
    %v4056 = vunpack.c.h.b16 %v2901
    %v4057 = vunpack.c.l.b16 %v2902
    %v4058 = vunpack.c.h.b16 %v2902
    %v4059 = vunpack.c.l.b16 %v2903
    %v4060 = vunpack.c.h.b16 %v2903
    %v4061 = vunpack.c.l.b16 %v2904
    %v4062 = vunpack.c.l.b16 %v2905
    %v4063 = vunpack.c.h.b16 %v2905
    %v4064 = vunpack.c.l.b16 %v2906
    %v4065 = vunpack.c.h.b16 %v2906
    %v4066 = vunpack.c.l.b16 %v2907
    %v4067 = vunpack.c.h.b16 %v2907
    %v4068 = vunpack.c.l.b16 %v2908
    %v4069 = vunpack.c.l.b16 %v2909
    %v4070 = vunpack.c.h.b16 %v2909
    %v4071 = vunpack.c.l.b16 %v2910
    %v4072 = vunpack.c.h.b16 %v2910
    %v4073 = vunpack.c.l.b16 %v2911
    %v4074 = vunpack.c.h.b16 %v2911
    %v4075 = vunpack.c.l.b16 %v2912
    %v4076 = vunpack.c.l.b16 %v2913
    %v4077 = vunpack.c.h.b16 %v2913
    %v4078 = vunpack.c.l.b16 %v2914
    %v4079 = vunpack.c.h.b16 %v2914
    %v4080 = vunpack.c.l.b16 %v2915
    %v4081 = vunpack.c.h.b16 %v2915
    %v4082 = vunpack.c.l.b16 %v2916
    %v4083 = vunpack.c.l.b16 %v2917
    %v4084 = vunpack.c.h.b16 %v2917
    %v4085 = vunpack.c.l.b16 %v2918
    %v4086 = vunpack.c.h.b16 %v2918
    %v4087 = vunpack.c.l.b16 %v2919
    %v4088 = vunpack.c.h.b16 %v2919
    %v4089 = vunpack.c.l.b16 %v2920
    %v4090 = vunpack.c.l.b16 %v2921
    %v4091 = vunpack.c.h.b16 %v2921
    %v4092 = vunpack.c.l.b16 %v2922
    %v4093 = vunpack.c.h.b16 %v2922
    %v4094 = vunpack.c.l.b16 %v2923
    %v4095 = vunpack.c.h.b16 %v2923
    %v4096 = vunpack.c.l.b16 %v2924
    %v4097 = vunpack.c.l.b16 %v2925
    %v4098 = vunpack.c.h.b16 %v2925
    %v4099 = vunpack.c.l.b16 %v2926
    %v4100 = vunpack.c.h.b16 %v2926
    %v4101 = vunpack.c.l.b16 %v2927
    %v4102 = vunpack.c.h.b16 %v2927
    %v4103 = vunpack.c.l.b16 %v2928
    %v4104 = vunpack.c.l.b16 %v2929
    %v4105 = vunpack.c.h.b16 %v2929
    %v4106 = vunpack.c.l.b16 %v2930
    %v4107 = vunpack.c.h.b16 %v2930
    %v4108 = vunpack.c.l.b16 %v2931
    %v4109 = vunpack.c.h.b16 %v2931
    %v4110 = vunpack.c.l.b16 %v2932
    %v4111 = vunpack.c.l.b16 %v2933
    %v4112 = vunpack.c.h.b16 %v2933
    %v4113 = vunpack.c.l.b16 %v2934
    %v4114 = vunpack.c.h.b16 %v2934
    %v4115 = vunpack.c.l.b16 %v2935
    %v4116 = vunpack.c.h.b16 %v2935
    %v4117 = vunpack.c.l.b16 %v2936
    %v4118 = vunpack.c.l.b16 %v2937
    %v4119 = vunpack.c.h.b16 %v2937
    %v4120 = vunpack.c.l.b16 %v2938
    %v4121 = vunpack.c.h.b16 %v2938
    %v4122 = vunpack.c.l.b16 %v2939
    %v4123 = vunpack.c.h.b16 %v2939
    %v4124 = vunpack.c.l.b16 %v2940
    %v4125 = vunpack.c.l.b16 %v2941
    %v4126 = vunpack.c.h.b16 %v2941
    %v4127 = vunpack.c.l.b16 %v2942
    %v4128 = vunpack.c.h.b16 %v2942
    %v4129 = vunpack.c.l.b16 %v2943
    %v4130 = vunpack.c.h.b16 %v2943
    %v4131 = vunpack.c.l.b16 %v2944
    %v4132 = vunpack.c.l.b16 %v2945
    %v4133 = vunpack.c.h.b16 %v2945
    %v4134 = vunpack.c.l.b16 %v2946
    %v4135 = vunpack.c.h.b16 %v2946
    %v4136 = vunpack.c.l.b16 %v2947
    %v4137 = vunpack.c.h.b16 %v2947
    %v4138 = vunpack.c.l.b16 %v2948
    %v4139 = vunpack.c.l.b16 %v2949
    %v4140 = vunpack.c.h.b16 %v2949
    %v4141 = vunpack.c.l.b16 %v2950
    %v4142 = vunpack.c.h.b16 %v2950
    %v4143 = vunpack.c.l.b16 %v2951
    %v4144 = vunpack.c.h.b16 %v2951
    %v4145 = vunpack.c.l.b16 %v2952
    %v4146 = vunpack.c.l.b16 %v2953
    %v4147 = vunpack.c.h.b16 %v2953
    %v4148 = vunpack.c.l.b16 %v2954
    %v4149 = vunpack.c.h.b16 %v2954
    %v4150 = vunpack.c.l.b16 %v2955
    %v4151 = vunpack.c.h.b16 %v2955
    %v4152 = vunpack.c.l.b16 %v2956
    %v4153 = vunpack.c.l.b16 %v2957
    %v4154 = vunpack.c.h.b16 %v2957
    %v4155 = vunpack.c.l.b16 %v2958
    %v4156 = vunpack.c.h.b16 %v2958
    %v4157 = vunpack.c.l.b16 %v2959
    %v4158 = vunpack.c.h.b16 %v2959
    %v4159 = vunpack.c.l.b16 %v2960
    %v4160 = vunpack.c.l.b16 %v2961
    %v4161 = vunpack.c.h.b16 %v2961
    %v4162 = vunpack.c.l.b16 %v2962
    %v4163 = vunpack.c.h.b16 %v2962
    %v4164 = vunpack.c.l.b16 %v2963
    %v4165 = vunpack.c.h.b16 %v2963
    %v4166 = vunpack.c.l.b16 %v2964
    %v4167 = vunpack.c.l.b16 %v2965
    %v4168 = vunpack.c.h.b16 %v2965
    %v4169 = vunpack.c.l.b16 %v2966
    %v4170 = vunpack.c.h.b16 %v2966
    %v4171 = vunpack.c.l.b16 %v2967
    %v4172 = vunpack.c.h.b16 %v2967
    %v4173 = vunpack.c.l.b16 %v2968
    %v4174 = vunpack.c.l.b16 %v2969
    %v4175 = vunpack.c.h.b16 %v2969
    %v4176 = vunpack.c.l.b16 %v2970
    %v4177 = vunpack.c.h.b16 %v2970
    %v4178 = vunpack.c.l.b16 %v2971
    %v4179 = vunpack.c.h.b16 %v2971
    %v4180 = vunpack.c.l.b16 %v2972
    %v4181 = vunpack.c.l.b16 %v2973
    %v4182 = vunpack.c.h.b16 %v2973
    %v4183 = vunpack.c.l.b16 %v2974
    %v4184 = vunpack.c.h.b16 %v2974
    %v4185 = vunpack.c.l.b16 %v2975
    %v4186 = vunpack.c.h.b16 %v2975
    %v4187 = vunpack.c.l.b16 %v2976
    %v4188 = vunpack.c.l.b16 %v2977
    %v4189 = vunpack.c.h.b16 %v2977
    %v4190 = vunpack.c.l.b16 %v2978
    %v4191 = vunpack.c.h.b16 %v2978
    %v4192 = vunpack.c.l.b16 %v2979
    %v4193 = vunpack.c.h.b16 %v2979
    %v4194 = vunpack.c.l.b16 %v2980
    %v4195 = vunpack.c.l.b16 %v2981
    %v4196 = vunpack.c.h.b16 %v2981
    %v4197 = vunpack.c.l.b16 %v2982
    %v4198 = vunpack.c.h.b16 %v2982
    %v4199 = vunpack.c.l.b16 %v2983
    %v4200 = vunpack.c.h.b16 %v2983
    %v4201 = vunpack.c.l.b16 %v2984
    %v4202 = vunpack.c.l.b16 %v2985
    %v4203 = vunpack.c.h.b16 %v2985
    %v4204 = vunpack.c.l.b16 %v2986
    %v4205 = vunpack.c.h.b16 %v2986
    %v4206 = vunpack.c.l.b16 %v2987
    %v4207 = vunpack.c.h.b16 %v2987
    %v4208 = vunpack.c.l.b16 %v2988
    %v4209 = vunpack.c.l.b16 %v2989
    %v4210 = vunpack.c.h.b16 %v2989
    %v4211 = vunpack.c.l.b16 %v2990
    %v4212 = vunpack.c.h.b16 %v2990
    %v4213 = vunpack.c.l.b16 %v2991
    %v4214 = vunpack.c.h.b16 %v2991
    %v4215 = vunpack.c.l.b16 %v2992
    %v4216 = vunpack.c.l.b16 %v2993
    %v4217 = vunpack.c.h.b16 %v2993
    %v4218 = vunpack.c.l.b16 %v2994
    %v4219 = vunpack.c.h.b16 %v2994
    %v4220 = vunpack.c.l.b16 %v2995
    %v4221 = vunpack.c.h.b16 %v2995
    %v4222 = vunpack.c.l.b16 %v2996
    %v4223 = vunpack.c.l.b16 %v2997
    %v4224 = vunpack.c.h.b16 %v2997
    %v4225 = vunpack.c.l.b16 %v2998
    %v4226 = vunpack.c.h.b16 %v2998
    %v4227 = vunpack.c.l.b16 %v2999
    %v4228 = vunpack.c.h.b16 %v2999
    %v4229 = vunpack.c.l.b16 %v3000
    %v4230 = vunpack.c.l.b16 %v3001
    %v4231 = vunpack.c.h.b16 %v3001
    %v4232 = vunpack.c.l.b16 %v3002
    %v4233 = vunpack.c.h.b16 %v3002
    %v4234 = vunpack.c.l.b16 %v3003
    %v4235 = vunpack.c.h.b16 %v3003
    %v4236 = vunpack.c.l.b16 %v3004
    %v4237 = vunpack.c.l.b16 %v3005
    %v4238 = vunpack.c.h.b16 %v3005
    %v4239 = vunpack.c.l.b16 %v3006
    %v4240 = vunpack.c.h.b16 %v3006
    %v4241 = vunpack.c.l.b16 %v3007
    %v4242 = vunpack.c.h.b16 %v3007
    %v4243 = vunpack.c.l.b16 %v3008
    %v4244 = vunpack.c.l.b16 %v3009
    %v4245 = vunpack.c.h.b16 %v3009
    %v4246 = vunpack.c.l.b16 %v3010
    %v4247 = vunpack.c.h.b16 %v3010
    %v4248 = vunpack.c.l.b16 %v3011
    %v4249 = vunpack.c.h.b16 %v3011
    %v4250 = vunpack.c.l.b16 %v3012
    %v4251 = vunpack.c.l.b16 %v3013
    %v4252 = vunpack.c.h.b16 %v3013
    %v4253 = vunpack.c.l.b16 %v3014
    %v4254 = vunpack.c.h.b16 %v3014
    %v4255 = vunpack.c.l.b16 %v3015
    %v4256 = vunpack.c.h.b16 %v3015
    %v4257 = vunpack.c.l.b16 %v3016
    %v4258 = vunpack.c.l.b16 %v3017
    %v4259 = vunpack.c.h.b16 %v3017
    %v4260 = vunpack.c.l.b16 %v3018
    %v4261 = vunpack.c.h.b16 %v3018
    %v4262 = vunpack.c.l.b16 %v3019
    %v4263 = vunpack.c.h.b16 %v3019
    %v4264 = vunpack.c.l.b16 %v3020
    %v4265 = vunpack.c.l.b16 %v3021
    %v4266 = vunpack.c.h.b16 %v3021
    %v4267 = vunpack.c.l.b16 %v3022
    %v4268 = vunpack.c.h.b16 %v3022
    %v4269 = vunpack.c.l.b16 %v3023
    %v4270 = vunpack.c.h.b16 %v3023
    %v4271 = vunpack.c.l.b16 %v3024
    %v4272 = vunpack.c.l.b16 %v3025
    %v4273 = vunpack.c.h.b16 %v3025
    %v4274 = vunpack.c.l.b16 %v3026
    %v4275 = vunpack.c.h.b16 %v3026
    %v4276 = vunpack.c.l.b16 %v3027
    %v4277 = vunpack.c.h.b16 %v3027
    %v4278 = vunpack.c.l.b16 %v3028
    %v4279 = vunpack.c.l.b16 %v3029
    %v4280 = vunpack.c.h.b16 %v3029
    %v4281 = vunpack.c.l.b16 %v3030
    %v4282 = vunpack.c.h.b16 %v3030
    %v4283 = vunpack.c.l.b16 %v3031
    %v4284 = vunpack.c.h.b16 %v3031
    %v4285 = vunpack.c.l.b16 %v3032
    %v4286 = vunpack.c.l.b16 %v3033
    %v4287 = vunpack.c.h.b16 %v3033
    %v4288 = vunpack.c.l.b16 %v3034
    %v4289 = vunpack.c.h.b16 %v3034
    %v4290 = vunpack.c.l.b16 %v3035
    %v4291 = vunpack.c.h.b16 %v3035
    %v4292 = vunpack.c.l.b16 %v3036
    %v4293 = vunpack.c.l.b16 %v3037
    %v4294 = vunpack.c.h.b16 %v3037
    %v4295 = vunpack.c.l.b16 %v3038
    %v4296 = vunpack.c.h.b16 %v3038
    %v4297 = vunpack.c.l.b16 %v3039
    %v4298 = vunpack.c.h.b16 %v3039
    %v4299 = vunpack.c.l.b16 %v3040
    %v4300 = vunpack.c.l.b16 %v3041
    %v4301 = vunpack.c.h.b16 %v3041
    %v4302 = vunpack.c.l.b16 %v3042
    %v4303 = vunpack.c.h.b16 %v3042
    %v4304 = vunpack.c.l.b16 %v3043
    %v4305 = vunpack.c.h.b16 %v3043
    %v4306 = vunpack.c.l.b16 %v3044
    %v4307 = vunpack.c.l.b16 %v3045
    %v4308 = vunpack.c.h.b16 %v3045
    %v4309 = vunpack.c.l.b16 %v3046
    %v4310 = vunpack.c.h.b16 %v3046
    %v4311 = vunpack.c.l.b16 %v3047
    %v4312 = vunpack.c.h.b16 %v3047
    %v4313 = vunpack.c.l.b16 %v3048
    %v4314 = vunpack.c.l.b16 %v3049
    %v4315 = vunpack.c.h.b16 %v3049
    %v4316 = vunpack.c.l.b16 %v3050
    %v4317 = vunpack.c.h.b16 %v3050
    %v4318 = vunpack.c.l.b16 %v3051
    %v4319 = vunpack.c.h.b16 %v3051
    %v4320 = vunpack.c.l.b16 %v3052
    %v4321 = vunpack.c.l.b16 %v3053
    %v4322 = vunpack.c.h.b16 %v3053
    %v4323 = vunpack.c.l.b16 %v3054
    %v4324 = vunpack.c.h.b16 %v3054
    %v4325 = vunpack.c.l.b16 %v3055
    %v4326 = vunpack.c.h.b16 %v3055
    %v4327 = vunpack.c.l.b16 %v3056
    %v4328 = vunpack.c.l.b16 %v3057
    %v4329 = vunpack.c.h.b16 %v3057
    %v4330 = vunpack.c.l.b16 %v3058
    %v4331 = vunpack.c.h.b16 %v3058
    %v4332 = vunpack.c.l.b16 %v3059
    %v4333 = vunpack.c.h.b16 %v3059
    %v4334 = vunpack.c.l.b16 %v3060
    %v4335 = vunpack.c.l.b16 %v3061
    %v4336 = vunpack.c.h.b16 %v3061
    %v4337 = vunpack.c.l.b16 %v3062
    %v4338 = vunpack.c.h.b16 %v3062
    %v4339 = vunpack.c.l.b16 %v3063
    %v4340 = vunpack.c.h.b16 %v3063
    %v4341 = vunpack.c.l.b16 %v3064
    %v4342 = vunpack.c.l.b16 %v3065
    %v4343 = vunpack.c.h.b16 %v3065
    %v4344 = vunpack.c.l.b16 %v3066
    %v4345 = vunpack.c.h.b16 %v3066
    %v4346 = vunpack.c.l.b16 %v3067
    %v4347 = vunpack.c.h.b16 %v3067
    %v4348 = vunpack.c.l.b16 %v3068
    %v4349 = vunpack.c.l.b16 %v3069
    %v4350 = vunpack.c.h.b16 %v3069
    %v4351 = vunpack.c.l.b16 %v3070
    %v4352 = vunpack.c.h.b16 %v3070
    %v4353 = vunpack.c.l.b16 %v3071
    %v4354 = vunpack.c.h.b16 %v3071
    %v4355 = vunpack.c.l.b16 %v3072
    %v4356 = vunpack.c.l.b16 %v3073
    %v4357 = vunpack.c.h.b16 %v3073
    %v4358 = vunpack.c.l.b16 %v3074
    %v4359 = vunpack.c.h.b16 %v3074
    %v4360 = vunpack.c.l.b16 %v3075
    %v4361 = vunpack.c.h.b16 %v3075
    %v4362 = vunpack.c.l.b16 %v3076
    %v4363 = vunpack.c.l.b16 %v3077
    %v4364 = vunpack.c.h.b16 %v3077
    %v4365 = vunpack.c.l.b16 %v3078
    %v4366 = vunpack.c.h.b16 %v3078
    %v4367 = vunpack.c.l.b16 %v3079
    %v4368 = vunpack.c.h.b16 %v3079
    %v4369 = vunpack.c.l.b16 %v3080
    %v4370 = vunpack.c.l.b16 %v3081
    %v4371 = vunpack.c.h.b16 %v3081
    %v4372 = vunpack.c.l.b16 %v3082
    %v4373 = vunpack.c.h.b16 %v3082
    %v4374 = vunpack.c.l.b16 %v3083
    %v4375 = vunpack.c.h.b16 %v3083
    %v4376 = vunpack.c.l.b16 %v3084
    %v4377 = vunpack.c.l.b16 %v3085
    %v4378 = vunpack.c.h.b16 %v3085
    %v4379 = vunpack.c.l.b16 %v3086
    %v4380 = vunpack.c.h.b16 %v3086
    %v4381 = vunpack.c.l.b16 %v3087
    %v4382 = vunpack.c.h.b16 %v3087
    %v4383 = vunpack.c.l.b16 %v3088
    %v4384 = vunpack.c.l.b16 %v3089
    %v4385 = vunpack.c.h.b16 %v3089
    %v4386 = vunpack.c.l.b16 %v3090
    %v4387 = vunpack.c.h.b16 %v3090
    %v4388 = vunpack.c.l.b16 %v3091
    %v4389 = vunpack.c.h.b16 %v3091
    %v4390 = vunpack.c.l.b16 %v3092
    %v4391 = vunpack.c.l.b16 %v3093
    %v4392 = vunpack.c.h.b16 %v3093
    %v4393 = vunpack.c.l.b16 %v3094
    %v4394 = vunpack.c.h.b16 %v3094
    %v4395 = vunpack.c.l.b16 %v3095
    %v4396 = vunpack.c.h.b16 %v3095
    %v4397 = vunpack.c.l.b16 %v3096
    %v4398 = vunpack.c.l.b16 %v3097
    %v4399 = vunpack.c.h.b16 %v3097
    %v4400 = vunpack.c.l.b16 %v3098
    %v4401 = vunpack.c.h.b16 %v3098
    %v4402 = vunpack.c.l.b16 %v3099
    %v4403 = vunpack.c.h.b16 %v3099
    %v4404 = vunpack.c.l.b16 %v3100
    %v4405 = vunpack.c.l.b16 %v3101
    %v4406 = vunpack.c.h.b16 %v3101
    %v4407 = vunpack.c.l.b16 %v3102
    %v4408 = vunpack.c.h.b16 %v3102
    %v4409 = vunpack.c.l.b16 %v3103
    %v4410 = vunpack.c.h.b16 %v3103
    %v4411 = vunpack.c.l.b16 %v3104
    %v4412 = vunpack.c.l.b16 %v3105
    %v4413 = vunpack.c.h.b16 %v3105
    %v4414 = vunpack.c.l.b16 %v3106
    %v4415 = vunpack.c.h.b16 %v3106
    %v4416 = vunpack.c.l.b16 %v3107
    %v4417 = vunpack.c.h.b16 %v3107
    %v4418 = vunpack.c.l.b16 %v3108
    %v4419 = vunpack.c.l.b16 %v3109
    %v4420 = vunpack.c.h.b16 %v3109
    %v4421 = vunpack.c.l.b16 %v3110
    %v4422 = vunpack.c.h.b16 %v3110
    %v4423 = vunpack.c.l.b16 %v3111
    %v4424 = vunpack.c.h.b16 %v3111
    %v4425 = vunpack.c.l.b16 %v3112
    %v4426 = vunpack.c.l.b16 %v3113
    %v4427 = vunpack.c.h.b16 %v3113
    %v4428 = vunpack.c.l.b16 %v3114
    %v4429 = vunpack.c.h.b16 %v3114
    %v4430 = vunpack.c.l.b16 %v3115
    %v4431 = vunpack.c.h.b16 %v3115
    %v4432 = vunpack.c.l.b16 %v3116
    %v4433 = vunpack.c.l.b16 %v3117
    %v4434 = vunpack.c.h.b16 %v3117
    %v4435 = vunpack.c.l.b16 %v3118
    %v4436 = vunpack.c.h.b16 %v3118
    %v4437 = vunpack.c.l.b16 %v3119
    %v4438 = vunpack.c.h.b16 %v3119
    %v4439 = vunpack.c.l.b16 %v3120
    %v4440 = vunpack.c.l.b16 %v3121
    %v4441 = vunpack.c.h.b16 %v3121
    %v4442 = vunpack.c.l.b16 %v3122
    %v4443 = vunpack.c.h.b16 %v3122
    %v4444 = vunpack.c.l.b16 %v3123
    %v4445 = vunpack.c.h.b16 %v3123
    %v4446 = vunpack.c.l.b16 %v3124
    %v4447 = vunpack.c.l.b16 %v3125
    %v4448 = vunpack.c.h.b16 %v3125
    %v4449 = vunpack.c.l.b16 %v3126
    %v4450 = vunpack.c.h.b16 %v3126
    %v4451 = vunpack.c.l.b16 %v3127
    %v4452 = vunpack.c.h.b16 %v3127
    %v4453 = vunpack.c.l.b16 %v3128
    %v4454 = vunpack.c.l.b16 %v3129
    %v4455 = vunpack.c.h.b16 %v3129
    %v4456 = vunpack.c.l.b16 %v3130
    %v4457 = vunpack.c.h.b16 %v3130
    %v4458 = vunpack.c.l.b16 %v3131
    %v4459 = vunpack.c.h.b16 %v3131
    %v4460 = vunpack.c.l.b16 %v3132
    %v4461 = vunpack.c.l.b16 %v3133
    %v4462 = vunpack.c.h.b16 %v3133
    %v4463 = vunpack.c.l.b16 %v3134
    %v4464 = vunpack.c.h.b16 %v3134
    %v4465 = vunpack.c.l.b16 %v3135
    %v4466 = vunpack.c.h.b16 %v3135
    %v4467 = vunpack.c.l.b16 %v3136
    %v4468 = vunpack.c.l.b16 %v3137
    %v4469 = vunpack.c.h.b16 %v3137
    %v4470 = vunpack.c.l.b16 %v3138
    %v4471 = vunpack.c.h.b16 %v3138
    %v4472 = vunpack.c.l.b16 %v3139
    %v4473 = vunpack.c.h.b16 %v3139
    %v4474 = vunpack.c.l.b16 %v3140
    %v4475 = vunpack.c.l.b16 %v3141
    %v4476 = vunpack.c.h.b16 %v3141
    %v4477 = vunpack.c.l.b16 %v3142
    %v4478 = vunpack.c.h.b16 %v3142
    %v4479 = vunpack.c.l.b16 %v3143
    %v4480 = vunpack.c.h.b16 %v3143
    %v4481 = vunpack.c.l.b16 %v3144
    %v4482 = vunpack.c.l.b16 %v3145
    %v4483 = vunpack.c.h.b16 %v3145
    %v4484 = vunpack.c.l.b16 %v3146
    %v4485 = vunpack.c.h.b16 %v3146
    %v4486 = vunpack.c.l.b16 %v3147
    %v4487 = vunpack.c.h.b16 %v3147
    %v4488 = vunpack.c.l.b16 %v3148
    %v4489 = vunpack.c.l.b16 %v3149
    %v4490 = vunpack.c.h.b16 %v3149
    %v4491 = vunpack.c.l.b16 %v3150
    %v4492 = vunpack.c.h.b16 %v3150
    %v4493 = vunpack.c.l.b16 %v3151
    %v4494 = vunpack.c.h.b16 %v3151
    %v4495 = vunpack.c.l.b16 %v3152
    %v4496 = vunpack.c.l.b16 %v3153
    %v4497 = vunpack.c.h.b16 %v3153
    %v4498 = vunpack.c.l.b16 %v3154
    %v4499 = vunpack.c.h.b16 %v3154
    %v4500 = vunpack.c.l.b16 %v3155
    %v4501 = vunpack.c.h.b16 %v3155
    %v4502 = vunpack.c.l.b16 %v3156
    %v4503 = vunpack.c.l.b16 %v3157
    %v4504 = vunpack.c.h.b16 %v3157
    %v4505 = vunpack.c.l.b16 %v3158
    %v4506 = vunpack.c.h.b16 %v3158
    %v4507 = vunpack.c.l.b16 %v3159
    %v4508 = vunpack.c.h.b16 %v3159
    %v4509 = vunpack.c.l.b16 %v3160
    %v4510 = vunpack.c.l.b16 %v3161
    %v4511 = vunpack.c.h.b16 %v3161
    %v4512 = vunpack.c.l.b16 %v3162
    %v4513 = vunpack.c.h.b16 %v3162
    %v4514 = vunpack.c.l.b16 %v3163
    %v4515 = vunpack.c.h.b16 %v3163
    %v4516 = vunpack.c.l.b16 %v3164
    %v4517 = vunpack.c.l.b16 %v3165
    %v4518 = vunpack.c.h.b16 %v3165
    %v4519 = vunpack.c.l.b16 %v3166
    %v4520 = vunpack.c.h.b16 %v3166
    %v4521 = vunpack.c.l.b16 %v3167
    %v4522 = vunpack.c.h.b16 %v3167
    %v4523 = vunpack.c.l.b16 %v3168
    %v4524 = vunpack.c.l.b16 %v3169
    %v4525 = vunpack.c.h.b16 %v3169
    %v4526 = vunpack.c.l.b16 %v3170
    %v4527 = vunpack.c.h.b16 %v3170
    %v4528 = vunpack.c.l.b16 %v3171
    %v4529 = vunpack.c.h.b16 %v3171
    %v4530 = vunpack.c.l.b16 %v3172
    %v4531 = vunpack.c.l.b16 %v3173
    %v4532 = vunpack.c.h.b16 %v3173
    %v4533 = vunpack.c.l.b16 %v3174
    %v4534 = vunpack.c.h.b16 %v3174
    %v4535 = vunpack.c.l.b16 %v3175
    %v4536 = vunpack.c.h.b16 %v3175
    %v4537 = vunpack.c.l.b16 %v3176
    %v4538 = vunpack.c.l.b16 %v3177
    %v4539 = vunpack.c.h.b16 %v3177
    %v4540 = vunpack.c.l.b16 %v3178
    %v4541 = vunpack.c.h.b16 %v3178
    %v4542 = vunpack.c.l.b16 %v3179
    %v4543 = vunpack.c.h.b16 %v3179
    %v4544 = vunpack.c.l.b16 %v3180
    %v4545 = vunpack.c.l.b16 %v3181
    %v4546 = vunpack.c.h.b16 %v3181
    %v4547 = vunpack.c.l.b16 %v3182
    %v4548 = vunpack.c.h.b16 %v3182
    %v4549 = vunpack.c.l.b16 %v3183
    %v4550 = vunpack.c.h.b16 %v3183
    %v4551 = vunpack.c.l.b16 %v3184
    %v4552 = vunpack.c.l.b16 %v3185
    %v4553 = vunpack.c.h.b16 %v3185
    %v4554 = vunpack.c.l.b16 %v3186
    %v4555 = vunpack.c.h.b16 %v3186
    %v4556 = vunpack.c.l.b16 %v3187
    %v4557 = vunpack.c.h.b16 %v3187
    %v4558 = vunpack.c.l.b16 %v3188
    %v4559 = vunpack.c.l.b16 %v3189
    %v4560 = vunpack.c.h.b16 %v3189
    %v4561 = vunpack.c.l.b16 %v3190
    %v4562 = vunpack.c.h.b16 %v3190
    %v4563 = vunpack.c.l.b16 %v3191
    %v4564 = vunpack.c.h.b16 %v3191
    %v4565 = vunpack.c.l.b16 %v3192
    %v4566 = vunpack.c.l.b16 %v3193
    %v4567 = vunpack.c.h.b16 %v3193
    %v4568 = vunpack.c.l.b16 %v3194
    %v4569 = vunpack.c.h.b16 %v3194
    %v4570 = vunpack.c.l.b16 %v3195
    %v4571 = vunpack.c.h.b16 %v3195
    %v4572 = vunpack.c.l.b16 %v3196
    %v4573 = vunpack.c.l.b16 %v3197
    %v4574 = vunpack.c.h.b16 %v3197
    %v4575 = vunpack.c.l.b16 %v3198
    %v4576 = vunpack.c.h.b16 %v3198
    %v4577 = vunpack.c.l.b16 %v3199
    %v4578 = vunpack.c.h.b16 %v3199
    %v4579 = vunpack.c.l.b16 %v3200
    %v4580 = vunpack.c.l.b16 %v3201
    %v4581 = vunpack.c.h.b16 %v3201
    %v4582 = vunpack.c.l.b16 %v3202
    %v4583 = vunpack.c.h.b16 %v3202
    %v4584 = vunpack.c.l.b16 %v3203
    %v4585 = vunpack.c.h.b16 %v3203
    %v4586 = vunpack.c.l.b16 %v3204
    %v4587 = vunpack.c.l.b16 %v3205
    %v4588 = vunpack.c.h.b16 %v3205
    %v4589 = vunpack.c.l.b16 %v3206
    %v4590 = vunpack.c.h.b16 %v3206
    %v4591 = vunpack.c.l.b16 %v3207
    %v4592 = vunpack.c.h.b16 %v3207
    %v4593 = vunpack.c.l.b16 %v3208
    %v4594 = vunpack.c.l.b16 %v3209
    %v4595 = vunpack.c.h.b16 %v3209
    %v4596 = vunpack.c.l.b16 %v3210
    %v4597 = vunpack.c.h.b16 %v3210
    %v4598 = vunpack.c.l.b16 %v3211
    %v4599 = vunpack.c.h.b16 %v3211
    %v4600 = vunpack.c.l.b16 %v3212
    %v4601 = vunpack.c.l.b16 %v3213
    %v4602 = vunpack.c.h.b16 %v3213
    %v4603 = vunpack.c.l.b16 %v3214
    %v4604 = vunpack.c.h.b16 %v3214
    %v4605 = vunpack.c.l.b16 %v3215
    %v4606 = vunpack.c.h.b16 %v3215
    %v4607 = vunpack.c.l.b16 %v3216
    %v4608 = vunpack.c.l.b16 %v3217
    %v4609 = vunpack.c.h.b16 %v3217
    %v4610 = vunpack.c.l.b16 %v3218
    %v4611 = vunpack.c.h.b16 %v3218
    %v4612 = vunpack.c.l.b16 %v3219
    %v4613 = vunpack.c.h.b16 %v3219
    %v4614 = vunpack.c.l.b16 %v3220
    %v4615 = vunpack.c.l.b16 %v3221
    %v4616 = vunpack.c.h.b16 %v3221
    %v4617 = vunpack.c.l.b16 %v3222
    %v4618 = vunpack.c.h.b16 %v3222
    %v4619 = vunpack.c.l.b16 %v3223
    %v4620 = vunpack.c.h.b16 %v3223
    %v4621 = vunpack.c.l.b16 %v3224
    %v4622 = vunpack.c.l.b16 %v3225
    %v4623 = vunpack.c.h.b16 %v3225
    %v4624 = vunpack.c.l.b16 %v3226
    %v4625 = vunpack.c.h.b16 %v3226
    %v4626 = vunpack.c.l.b16 %v3227
    %v4627 = vunpack.c.h.b16 %v3227
    %v4628 = vunpack.c.l.b16 %v3228
    %v4629 = vunpack.c.l.b16 %v3229
    %v4630 = vunpack.c.h.b16 %v3229
    %v4631 = vunpack.c.l.b16 %v3230
    %v4632 = vunpack.c.h.b16 %v3230
    %v4633 = vunpack.c.l.b16 %v3231
    %v4634 = vunpack.c.h.b16 %v3231
    %v4635 = vunpack.c.l.b16 %v3232
    %v4636 = vunpack.c.l.b16 %v3233
    %v4637 = vunpack.c.h.b16 %v3233
    %v4638 = vunpack.c.l.b16 %v3234
    %v4639 = vunpack.c.h.b16 %v3234
    %v4640 = vunpack.c.l.b16 %v3235
    %v4641 = vunpack.c.h.b16 %v3235
    %v4642 = vunpack.c.l.b16 %v3236
    %v4643 = vunpack.c.l.b16 %v3237
    %v4644 = vunpack.c.h.b16 %v3237
    %v4645 = vunpack.c.l.b16 %v3238
    %v4646 = vunpack.c.h.b16 %v3238
    %v4647 = vunpack.c.l.b16 %v3239
    %v4648 = vunpack.c.h.b16 %v3239
    %v4649 = vunpack.c.l.b16 %v3240
    %v4650 = vunpack.c.l.b16 %v3241
    %v4651 = vunpack.c.h.b16 %v3241
    %v4652 = vunpack.c.l.b16 %v3242
    %v4653 = vunpack.c.h.b16 %v3242
    %v4654 = vunpack.c.l.b16 %v3243
    %v4655 = vunpack.c.h.b16 %v3243
    %v4656 = vunpack.c.l.b16 %v3244
    %v4657 = vunpack.c.l.b16 %v3245
    %v4658 = vunpack.c.h.b16 %v3245
    %v4659 = vunpack.c.l.b16 %v3246
    %v4660 = vunpack.c.h.b16 %v3246
    %v4661 = vunpack.c.l.b16 %v3247
    %v4662 = vunpack.c.h.b16 %v3247
    %v4663 = vunpack.c.l.b16 %v3248
    %v4664 = vunpack.c.l.b16 %v3249
    %v4665 = vunpack.c.h.b16 %v3249
    %v4666 = vunpack.c.l.b16 %v3250
    %v4667 = vunpack.c.h.b16 %v3250
    %v4668 = vunpack.c.l.b16 %v3251
    %v4669 = vunpack.c.h.b16 %v3251
    %v4670 = vunpack.c.l.b16 %v3252
    %v4671 = vunpack.c.l.b16 %v3253
    %v4672 = vunpack.c.h.b16 %v3253
    %v4673 = vunpack.c.l.b16 %v3254
    %v4674 = vunpack.c.h.b16 %v3254
    %v4675 = vunpack.c.l.b16 %v3255
    %v4676 = vunpack.c.h.b16 %v3255
    %v4677 = vunpack.c.l.b16 %v3256
    %v4678 = vunpack.c.l.b16 %v3257
    %v4679 = vunpack.c.h.b16 %v3257
    %v4680 = vunpack.c.l.b16 %v3258
    %v4681 = vunpack.c.h.b16 %v3258
    %v4682 = vunpack.c.l.b16 %v3259
    %v4683 = vunpack.c.h.b16 %v3259
    %v4684 = vunpack.c.l.b16 %v3260
    %v4685 = vunpack.c.l.b16 %v3261
    %v4686 = vunpack.c.h.b16 %v3261
    %v4687 = vunpack.c.l.b16 %v3262
    %v4688 = vunpack.c.h.b16 %v3262
    %v4689 = vunpack.c.l.b16 %v3263
    %v4690 = vunpack.c.h.b16 %v3263
    %v4691 = vunpack.c.l.b16 %v3264
    %v4692 = vunpack.c.l.b16 %v3265
    %v4693 = vunpack.c.h.b16 %v3265
    %v4694 = vunpack.c.l.b16 %v3266
    %v4695 = vunpack.c.h.b16 %v3266
    %v4696 = vunpack.c.l.b16 %v3267
    %v4697 = vunpack.c.h.b16 %v3267
    %v4698 = vunpack.c.l.b16 %v3268
    %v4699 = vunpack.c.l.b16 %v3269
    %v4700 = vunpack.c.h.b16 %v3269
    %v4701 = vunpack.c.l.b16 %v3270
    %v4702 = vunpack.c.h.b16 %v3270
    %v4703 = vunpack.c.l.b16 %v3271
    %v4704 = vunpack.c.h.b16 %v3271
    %v4705 = vunpack.c.l.b16 %v3272
    %v4706 = vunpack.c.l.b16 %v3273
    %v4707 = vunpack.c.h.b16 %v3273
    %v4708 = vunpack.c.l.b16 %v3274
    %v4709 = vunpack.c.h.b16 %v3274
    %v4710 = vunpack.c.l.b16 %v3275
    %v4711 = vunpack.c.h.b16 %v3275
    %v4712 = vunpack.c.l.b16 %v3276
    %v4713 = vunpack.c.l.b16 %v3277
    %v4714 = vunpack.c.h.b16 %v3277
    %v4715 = vunpack.c.l.b16 %v3278
    %v4716 = vunpack.c.h.b16 %v3278
    %v4717 = vunpack.c.l.b16 %v3279
    %v4718 = vunpack.c.h.b16 %v3279
    %v4719 = vunpack.c.l.b16 %v3280
    %v4720 = vunpack.c.l.b16 %v3281
    %v4721 = vunpack.c.h.b16 %v3281
    %v4722 = vunpack.c.l.b16 %v3282
    %v4723 = vunpack.c.h.b16 %v3282
    %v4724 = vunpack.c.l.b16 %v3283
    %v4725 = vunpack.c.h.b16 %v3283
    %v4726 = vunpack.c.l.b16 %v3284
    %v4727 = vunpack.c.l.b16 %v3285
    %v4728 = vunpack.c.h.b16 %v3285
    %v4729 = vunpack.c.l.b16 %v3286
    %v4730 = vunpack.c.h.b16 %v3286
    %v4731 = vunpack.c.l.b16 %v3287
    %v4732 = vunpack.c.h.b16 %v3287
    %v4733 = vunpack.c.l.b16 %v3288
    %v4734 = vpack.c.b16 %v3845, %v3838
    %v4735 = vpack.c.b16 %v3846, %v3839
    %v4736 = vpack.c.b16 %v3847, %v3840
    %v4737 = vpack.c.b16 %v3848, %v3841
    %v4738 = vpack.c.b16 %v3849, %v3842
    %v4739 = vpack.c.b16 %v3850, %v3843
    %v4740 = vpack.c.b16 %v3851, %v3844
    %v4741 = vpack.c.b16 %v3859, %v3852
    %v4742 = vpack.c.b16 %v3860, %v3853
    %v4743 = vpack.c.b16 %v3861, %v3854
    %v4744 = vpack.c.b16 %v3862, %v3855
    %v4745 = vpack.c.b16 %v3863, %v3856
    %v4746 = vpack.c.b16 %v3864, %v3857
    %v4747 = vpack.c.b16 %v3865, %v3858
    %v4748 = vpack.c.b16 %v3873, %v3866
    %v4749 = vpack.c.b16 %v3874, %v3867
    %v4750 = vpack.c.b16 %v3875, %v3868
    %v4751 = vpack.c.b16 %v3876, %v3869
    %v4752 = vpack.c.b16 %v3877, %v3870
    %v4753 = vpack.c.b16 %v3878, %v3871
    %v4754 = vpack.c.b16 %v3879, %v3872
    %v4755 = vpack.c.b16 %v3887, %v3880
    %v4756 = vpack.c.b16 %v3888, %v3881
    %v4757 = vpack.c.b16 %v3889, %v3882
    %v4758 = vpack.c.b16 %v3890, %v3883
    %v4759 = vpack.c.b16 %v3891, %v3884
    %v4760 = vpack.c.b16 %v3892, %v3885
    %v4761 = vpack.c.b16 %v3893, %v3886
    %v4762 = vpack.c.b16 %v3901, %v3894
    %v4763 = vpack.c.b16 %v3902, %v3895
    %v4764 = vpack.c.b16 %v3903, %v3896
    %v4765 = vpack.c.b16 %v3904, %v3897
    %v4766 = vpack.c.b16 %v3905, %v3898
    %v4767 = vpack.c.b16 %v3906, %v3899
    %v4768 = vpack.c.b16 %v3907, %v3900
    %v4769 = vpack.c.b16 %v3915, %v3908
    %v4770 = vpack.c.b16 %v3916, %v3909
    %v4771 = vpack.c.b16 %v3917, %v3910
    %v4772 = vpack.c.b16 %v3918, %v3911
    %v4773 = vpack.c.b16 %v3919, %v3912
    %v4774 = vpack.c.b16 %v3920, %v3913
    %v4775 = vpack.c.b16 %v3921, %v3914
    %v4776 = vpack.c.b16 %v3929, %v3922
    %v4777 = vpack.c.b16 %v3930, %v3923
    %v4778 = vpack.c.b16 %v3931, %v3924
    %v4779 = vpack.c.b16 %v3932, %v3925
    %v4780 = vpack.c.b16 %v3933, %v3926
    %v4781 = vpack.c.b16 %v3934, %v3927
    %v4782 = vpack.c.b16 %v3935, %v3928
    %v4783 = vpack.c.b16 %v3943, %v3936
    %v4784 = vpack.c.b16 %v3944, %v3937
    %v4785 = vpack.c.b16 %v3945, %v3938
    %v4786 = vpack.c.b16 %v3946, %v3939
    %v4787 = vpack.c.b16 %v3947, %v3940
    %v4788 = vpack.c.b16 %v3948, %v3941
    %v4789 = vpack.c.b16 %v3949, %v3942
    %v4790 = vpack.c.b16 %v3957, %v3950
    %v4791 = vpack.c.b16 %v3958, %v3951
    %v4792 = vpack.c.b16 %v3959, %v3952
    %v4793 = vpack.c.b16 %v3960, %v3953
    %v4794 = vpack.c.b16 %v3961, %v3954
    %v4795 = vpack.c.b16 %v3962, %v3955
    %v4796 = vpack.c.b16 %v3963, %v3956
    %v4797 = vpack.c.b16 %v3971, %v3964
    %v4798 = vpack.c.b16 %v3972, %v3965
    %v4799 = vpack.c.b16 %v3973, %v3966
    %v4800 = vpack.c.b16 %v3974, %v3967
    %v4801 = vpack.c.b16 %v3975, %v3968
    %v4802 = vpack.c.b16 %v3976, %v3969
    %v4803 = vpack.c.b16 %v3977, %v3970
    %v4804 = vpack.c.b16 %v3985, %v3978
    %v4805 = vpack.c.b16 %v3986, %v3979
    %v4806 = vpack.c.b16 %v3987, %v3980
    %v4807 = vpack.c.b16 %v3988, %v3981
    %v4808 = vpack.c.b16 %v3989, %v3982
    %v4809 = vpack.c.b16 %v3990, %v3983
    %v4810 = vpack.c.b16 %v3991, %v3984
    %v4811 = vpack.c.b16 %v3999, %v3992
    %v4812 = vpack.c.b16 %v4000, %v3993
    %v4813 = vpack.c.b16 %v4001, %v3994
    %v4814 = vpack.c.b16 %v4002, %v3995
    %v4815 = vpack.c.b16 %v4003, %v3996
    %v4816 = vpack.c.b16 %v4004, %v3997
    %v4817 = vpack.c.b16 %v4005, %v3998
    %v4818 = vpack.c.b16 %v4013, %v4006
    %v4819 = vpack.c.b16 %v4014, %v4007
    %v4820 = vpack.c.b16 %v4015, %v4008
    %v4821 = vpack.c.b16 %v4016, %v4009
    %v4822 = vpack.c.b16 %v4017, %v4010
    %v4823 = vpack.c.b16 %v4018, %v4011
    %v4824 = vpack.c.b16 %v4019, %v4012
    %v4825 = vpack.c.b16 %v4027, %v4020
    %v4826 = vpack.c.b16 %v4028, %v4021
    %v4827 = vpack.c.b16 %v4029, %v4022
    %v4828 = vpack.c.b16 %v4030, %v4023
    %v4829 = vpack.c.b16 %v4031, %v4024
    %v4830 = vpack.c.b16 %v4032, %v4025
    %v4831 = vpack.c.b16 %v4033, %v4026
    %v4832 = vpack.c.b16 %v4041, %v4034
    %v4833 = vpack.c.b16 %v4042, %v4035
    %v4834 = vpack.c.b16 %v4043, %v4036
    %v4835 = vpack.c.b16 %v4044, %v4037
    %v4836 = vpack.c.b16 %v4045, %v4038
    %v4837 = vpack.c.b16 %v4046, %v4039
    %v4838 = vpack.c.b16 %v4047, %v4040
    %v4839 = vpack.c.b16 %v4055, %v4048
    %v4840 = vpack.c.b16 %v4056, %v4049
    %v4841 = vpack.c.b16 %v4057, %v4050
    %v4842 = vpack.c.b16 %v4058, %v4051
    %v4843 = vpack.c.b16 %v4059, %v4052
    %v4844 = vpack.c.b16 %v4060, %v4053
    %v4845 = vpack.c.b16 %v4061, %v4054
    %v4846 = vpack.c.b16 %v4069, %v4062
    %v4847 = vpack.c.b16 %v4070, %v4063
    %v4848 = vpack.c.b16 %v4071, %v4064
    %v4849 = vpack.c.b16 %v4072, %v4065
    %v4850 = vpack.c.b16 %v4073, %v4066
    %v4851 = vpack.c.b16 %v4074, %v4067
    %v4852 = vpack.c.b16 %v4075, %v4068
    %v4853 = vpack.c.b16 %v4083, %v4076
    %v4854 = vpack.c.b16 %v4084, %v4077
    %v4855 = vpack.c.b16 %v4085, %v4078
    %v4856 = vpack.c.b16 %v4086, %v4079
    %v4857 = vpack.c.b16 %v4087, %v4080
    %v4858 = vpack.c.b16 %v4088, %v4081
    %v4859 = vpack.c.b16 %v4089, %v4082
    %v4860 = vpack.c.b16 %v4097, %v4090
    %v4861 = vpack.c.b16 %v4098, %v4091
    %v4862 = vpack.c.b16 %v4099, %v4092
    %v4863 = vpack.c.b16 %v4100, %v4093
    %v4864 = vpack.c.b16 %v4101, %v4094
    %v4865 = vpack.c.b16 %v4102, %v4095
    %v4866 = vpack.c.b16 %v4103, %v4096
    %v4867 = vpack.c.b16 %v4111, %v4104
    %v4868 = vpack.c.b16 %v4112, %v4105
    %v4869 = vpack.c.b16 %v4113, %v4106
    %v4870 = vpack.c.b16 %v4114, %v4107
    %v4871 = vpack.c.b16 %v4115, %v4108
    %v4872 = vpack.c.b16 %v4116, %v4109
    %v4873 = vpack.c.b16 %v4117, %v4110
    %v4874 = vpack.c.b16 %v4125, %v4118
    %v4875 = vpack.c.b16 %v4126, %v4119
    %v4876 = vpack.c.b16 %v4127, %v4120
    %v4877 = vpack.c.b16 %v4128, %v4121
    %v4878 = vpack.c.b16 %v4129, %v4122
    %v4879 = vpack.c.b16 %v4130, %v4123
    %v4880 = vpack.c.b16 %v4131, %v4124
    %v4881 = vpack.c.b16 %v4139, %v4132
    %v4882 = vpack.c.b16 %v4140, %v4133
    %v4883 = vpack.c.b16 %v4141, %v4134
    %v4884 = vpack.c.b16 %v4142, %v4135
    %v4885 = vpack.c.b16 %v4143, %v4136
    %v4886 = vpack.c.b16 %v4144, %v4137
    %v4887 = vpack.c.b16 %v4145, %v4138
    %v4888 = vpack.c.b16 %v4153, %v4146
    %v4889 = vpack.c.b16 %v4154, %v4147
    %v4890 = vpack.c.b16 %v4155, %v4148
    %v4891 = vpack.c.b16 %v4156, %v4149
    %v4892 = vpack.c.b16 %v4157, %v4150
    %v4893 = vpack.c.b16 %v4158, %v4151
    %v4894 = vpack.c.b16 %v4159, %v4152
    %v4895 = vpack.c.b16 %v4167, %v4160
    %v4896 = vpack.c.b16 %v4168, %v4161
    %v4897 = vpack.c.b16 %v4169, %v4162
    %v4898 = vpack.c.b16 %v4170, %v4163
    %v4899 = vpack.c.b16 %v4171, %v4164
    %v4900 = vpack.c.b16 %v4172, %v4165
    %v4901 = vpack.c.b16 %v4173, %v4166
    %v4902 = vpack.c.b16 %v4181, %v4174
    %v4903 = vpack.c.b16 %v4182, %v4175
    %v4904 = vpack.c.b16 %v4183, %v4176
    %v4905 = vpack.c.b16 %v4184, %v4177
    %v4906 = vpack.c.b16 %v4185, %v4178
    %v4907 = vpack.c.b16 %v4186, %v4179
    %v4908 = vpack.c.b16 %v4187, %v4180
    %v4909 = vpack.c.b16 %v4195, %v4188
    %v4910 = vpack.c.b16 %v4196, %v4189
    %v4911 = vpack.c.b16 %v4197, %v4190
    %v4912 = vpack.c.b16 %v4198, %v4191
    %v4913 = vpack.c.b16 %v4199, %v4192
    %v4914 = vpack.c.b16 %v4200, %v4193
    %v4915 = vpack.c.b16 %v4201, %v4194
    %v4916 = vpack.c.b16 %v4209, %v4202
    %v4917 = vpack.c.b16 %v4210, %v4203
    %v4918 = vpack.c.b16 %v4211, %v4204
    %v4919 = vpack.c.b16 %v4212, %v4205
    %v4920 = vpack.c.b16 %v4213, %v4206
    %v4921 = vpack.c.b16 %v4214, %v4207
    %v4922 = vpack.c.b16 %v4215, %v4208
    %v4923 = vpack.c.b16 %v4223, %v4216
    %v4924 = vpack.c.b16 %v4224, %v4217
    %v4925 = vpack.c.b16 %v4225, %v4218
    %v4926 = vpack.c.b16 %v4226, %v4219
    %v4927 = vpack.c.b16 %v4227, %v4220
    %v4928 = vpack.c.b16 %v4228, %v4221
    %v4929 = vpack.c.b16 %v4229, %v4222
    %v4930 = vpack.c.b16 %v4237, %v4230
    %v4931 = vpack.c.b16 %v4238, %v4231
    %v4932 = vpack.c.b16 %v4239, %v4232
    %v4933 = vpack.c.b16 %v4240, %v4233
    %v4934 = vpack.c.b16 %v4241, %v4234
    %v4935 = vpack.c.b16 %v4242, %v4235
    %v4936 = vpack.c.b16 %v4243, %v4236
    %v4937 = vpack.c.b16 %v4251, %v4244
    %v4938 = vpack.c.b16 %v4252, %v4245
    %v4939 = vpack.c.b16 %v4253, %v4246
    %v4940 = vpack.c.b16 %v4254, %v4247
    %v4941 = vpack.c.b16 %v4255, %v4248
    %v4942 = vpack.c.b16 %v4256, %v4249
    %v4943 = vpack.c.b16 %v4257, %v4250
    %v4944 = vpack.c.b16 %v4265, %v4258
    %v4945 = vpack.c.b16 %v4266, %v4259
    %v4946 = vpack.c.b16 %v4267, %v4260
    %v4947 = vpack.c.b16 %v4268, %v4261
    %v4948 = vpack.c.b16 %v4269, %v4262
    %v4949 = vpack.c.b16 %v4270, %v4263
    %v4950 = vpack.c.b16 %v4271, %v4264
    %v4951 = vpack.c.b16 %v4279, %v4272
    %v4952 = vpack.c.b16 %v4280, %v4273
    %v4953 = vpack.c.b16 %v4281, %v4274
    %v4954 = vpack.c.b16 %v4282, %v4275
    %v4955 = vpack.c.b16 %v4283, %v4276
    %v4956 = vpack.c.b16 %v4284, %v4277
    %v4957 = vpack.c.b16 %v4285, %v4278
    %v4958 = vpack.c.b16 %v4293, %v4286
    %v4959 = vpack.c.b16 %v4294, %v4287
    %v4960 = vpack.c.b16 %v4295, %v4288
    %v4961 = vpack.c.b16 %v4296, %v4289
    %v4962 = vpack.c.b16 %v4297, %v4290
    %v4963 = vpack.c.b16 %v4298, %v4291
    %v4964 = vpack.c.b16 %v4299, %v4292
    %v4965 = vpack.c.b16 %v4307, %v4300
    %v4966 = vpack.c.b16 %v4308, %v4301
    %v4967 = vpack.c.b16 %v4309, %v4302
    %v4968 = vpack.c.b16 %v4310, %v4303
    %v4969 = vpack.c.b16 %v4311, %v4304
    %v4970 = vpack.c.b16 %v4312, %v4305
    %v4971 = vpack.c.b16 %v4313, %v4306
    %v4972 = vpack.c.b16 %v4321, %v4314
    %v4973 = vpack.c.b16 %v4322, %v4315
    %v4974 = vpack.c.b16 %v4323, %v4316
    %v4975 = vpack.c.b16 %v4324, %v4317
    %v4976 = vpack.c.b16 %v4325, %v4318
    %v4977 = vpack.c.b16 %v4326, %v4319
    %v4978 = vpack.c.b16 %v4327, %v4320
    %v4979 = vpack.c.b16 %v4335, %v4328
    %v4980 = vpack.c.b16 %v4336, %v4329
    %v4981 = vpack.c.b16 %v4337, %v4330
    %v4982 = vpack.c.b16 %v4338, %v4331
    %v4983 = vpack.c.b16 %v4339, %v4332
    %v4984 = vpack.c.b16 %v4340, %v4333
    %v4985 = vpack.c.b16 %v4341, %v4334
    %v4986 = vpack.c.b16 %v4349, %v4342
    %v4987 = vpack.c.b16 %v4350, %v4343
    %v4988 = vpack.c.b16 %v4351, %v4344
    %v4989 = vpack.c.b16 %v4352, %v4345
    %v4990 = vpack.c.b16 %v4353, %v4346
    %v4991 = vpack.c.b16 %v4354, %v4347
    %v4992 = vpack.c.b16 %v4355, %v4348
    %v4993 = vpack.c.b16 %v4363, %v4356
    %v4994 = vpack.c.b16 %v4364, %v4357
    %v4995 = vpack.c.b16 %v4365, %v4358
    %v4996 = vpack.c.b16 %v4366, %v4359
    %v4997 = vpack.c.b16 %v4367, %v4360
    %v4998 = vpack.c.b16 %v4368, %v4361
    %v4999 = vpack.c.b16 %v4369, %v4362
    %v5000 = vpack.c.b16 %v4377, %v4370
    %v5001 = vpack.c.b16 %v4378, %v4371
    %v5002 = vpack.c.b16 %v4379, %v4372
    %v5003 = vpack.c.b16 %v4380, %v4373
    %v5004 = vpack.c.b16 %v4381, %v4374
    %v5005 = vpack.c.b16 %v4382, %v4375
    %v5006 = vpack.c.b16 %v4383, %v4376
    %v5007 = vpack.c.b16 %v4391, %v4384
    %v5008 = vpack.c.b16 %v4392, %v4385
    %v5009 = vpack.c.b16 %v4393, %v4386
    %v5010 = vpack.c.b16 %v4394, %v4387
    %v5011 = vpack.c.b16 %v4395, %v4388
    %v5012 = vpack.c.b16 %v4396, %v4389
    %v5013 = vpack.c.b16 %v4397, %v4390
    %v5014 = vpack.c.b16 %v4405, %v4398
    %v5015 = vpack.c.b16 %v4406, %v4399
    %v5016 = vpack.c.b16 %v4407, %v4400
    %v5017 = vpack.c.b16 %v4408, %v4401
    %v5018 = vpack.c.b16 %v4409, %v4402
    %v5019 = vpack.c.b16 %v4410, %v4403
    %v5020 = vpack.c.b16 %v4411, %v4404
    %v5021 = vpack.c.b16 %v4419, %v4412
    %v5022 = vpack.c.b16 %v4420, %v4413
    %v5023 = vpack.c.b16 %v4421, %v4414
    %v5024 = vpack.c.b16 %v4422, %v4415
    %v5025 = vpack.c.b16 %v4423, %v4416
    %v5026 = vpack.c.b16 %v4424, %v4417
    %v5027 = vpack.c.b16 %v4425, %v4418
    %v5028 = vpack.c.b16 %v4433, %v4426
    %v5029 = vpack.c.b16 %v4434, %v4427
    %v5030 = vpack.c.b16 %v4435, %v4428
    %v5031 = vpack.c.b16 %v4436, %v4429
    %v5032 = vpack.c.b16 %v4437, %v4430
    %v5033 = vpack.c.b16 %v4438, %v4431
    %v5034 = vpack.c.b16 %v4439, %v4432
    %v5035 = vpack.c.b16 %v4447, %v4440
    %v5036 = vpack.c.b16 %v4448, %v4441
    %v5037 = vpack.c.b16 %v4449, %v4442
    %v5038 = vpack.c.b16 %v4450, %v4443
    %v5039 = vpack.c.b16 %v4451, %v4444
    %v5040 = vpack.c.b16 %v4452, %v4445
    %v5041 = vpack.c.b16 %v4453, %v4446
    %v5042 = vpack.c.b16 %v4461, %v4454
    %v5043 = vpack.c.b16 %v4462, %v4455
    %v5044 = vpack.c.b16 %v4463, %v4456
    %v5045 = vpack.c.b16 %v4464, %v4457
    %v5046 = vpack.c.b16 %v4465, %v4458
    %v5047 = vpack.c.b16 %v4466, %v4459
    %v5048 = vpack.c.b16 %v4467, %v4460
    %v5049 = vpack.c.b16 %v4475, %v4468
    %v5050 = vpack.c.b16 %v4476, %v4469
    %v5051 = vpack.c.b16 %v4477, %v4470
    %v5052 = vpack.c.b16 %v4478, %v4471
    %v5053 = vpack.c.b16 %v4479, %v4472
    %v5054 = vpack.c.b16 %v4480, %v4473
    %v5055 = vpack.c.b16 %v4481, %v4474
    %v5056 = vpack.c.b16 %v4489, %v4482
    %v5057 = vpack.c.b16 %v4490, %v4483
    %v5058 = vpack.c.b16 %v4491, %v4484
    %v5059 = vpack.c.b16 %v4492, %v4485
    %v5060 = vpack.c.b16 %v4493, %v4486
    %v5061 = vpack.c.b16 %v4494, %v4487
    %v5062 = vpack.c.b16 %v4495, %v4488
    %v5063 = vpack.c.b16 %v4503, %v4496
    %v5064 = vpack.c.b16 %v4504, %v4497
    %v5065 = vpack.c.b16 %v4505, %v4498
    %v5066 = vpack.c.b16 %v4506, %v4499
    %v5067 = vpack.c.b16 %v4507, %v4500
    %v5068 = vpack.c.b16 %v4508, %v4501
    %v5069 = vpack.c.b16 %v4509, %v4502
    %v5070 = vpack.c.b16 %v4517, %v4510
    %v5071 = vpack.c.b16 %v4518, %v4511
    %v5072 = vpack.c.b16 %v4519, %v4512
    %v5073 = vpack.c.b16 %v4520, %v4513
    %v5074 = vpack.c.b16 %v4521, %v4514
    %v5075 = vpack.c.b16 %v4522, %v4515
    %v5076 = vpack.c.b16 %v4523, %v4516
    %v5077 = vpack.c.b16 %v4531, %v4524
    %v5078 = vpack.c.b16 %v4532, %v4525
    %v5079 = vpack.c.b16 %v4533, %v4526
    %v5080 = vpack.c.b16 %v4534, %v4527
    %v5081 = vpack.c.b16 %v4535, %v4528
    %v5082 = vpack.c.b16 %v4536, %v4529
    %v5083 = vpack.c.b16 %v4537, %v4530
    %v5084 = vpack.c.b16 %v4545, %v4538
    %v5085 = vpack.c.b16 %v4546, %v4539
    %v5086 = vpack.c.b16 %v4547, %v4540
    %v5087 = vpack.c.b16 %v4548, %v4541
    %v5088 = vpack.c.b16 %v4549, %v4542
    %v5089 = vpack.c.b16 %v4550, %v4543
    %v5090 = vpack.c.b16 %v4551, %v4544
    %v5091 = vpack.c.b16 %v4559, %v4552
    %v5092 = vpack.c.b16 %v4560, %v4553
    %v5093 = vpack.c.b16 %v4561, %v4554
    %v5094 = vpack.c.b16 %v4562, %v4555
    %v5095 = vpack.c.b16 %v4563, %v4556
    %v5096 = vpack.c.b16 %v4564, %v4557
    %v5097 = vpack.c.b16 %v4565, %v4558
    %v5098 = vpack.c.b16 %v4573, %v4566
    %v5099 = vpack.c.b16 %v4574, %v4567
    %v5100 = vpack.c.b16 %v4575, %v4568
    %v5101 = vpack.c.b16 %v4576, %v4569
    %v5102 = vpack.c.b16 %v4577, %v4570
    %v5103 = vpack.c.b16 %v4578, %v4571
    %v5104 = vpack.c.b16 %v4579, %v4572
    %v5105 = vpack.c.b16 %v4587, %v4580
    %v5106 = vpack.c.b16 %v4588, %v4581
    %v5107 = vpack.c.b16 %v4589, %v4582
    %v5108 = vpack.c.b16 %v4590, %v4583
    %v5109 = vpack.c.b16 %v4591, %v4584
    %v5110 = vpack.c.b16 %v4592, %v4585
    %v5111 = vpack.c.b16 %v4593, %v4586
    %v5112 = vpack.c.b16 %v4601, %v4594
    %v5113 = vpack.c.b16 %v4602, %v4595
    %v5114 = vpack.c.b16 %v4603, %v4596
    %v5115 = vpack.c.b16 %v4604, %v4597
    %v5116 = vpack.c.b16 %v4605, %v4598
    %v5117 = vpack.c.b16 %v4606, %v4599
    %v5118 = vpack.c.b16 %v4607, %v4600
    %v5119 = vpack.c.b16 %v4615, %v4608
    %v5120 = vpack.c.b16 %v4616, %v4609
    %v5121 = vpack.c.b16 %v4617, %v4610
    %v5122 = vpack.c.b16 %v4618, %v4611
    %v5123 = vpack.c.b16 %v4619, %v4612
    %v5124 = vpack.c.b16 %v4620, %v4613
    %v5125 = vpack.c.b16 %v4621, %v4614
    %v5126 = vpack.c.b16 %v4629, %v4622
    %v5127 = vpack.c.b16 %v4630, %v4623
    %v5128 = vpack.c.b16 %v4631, %v4624
    %v5129 = vpack.c.b16 %v4632, %v4625
    %v5130 = vpack.c.b16 %v4633, %v4626
    %v5131 = vpack.c.b16 %v4634, %v4627
    %v5132 = vpack.c.b16 %v4635, %v4628
    %v5133 = vpack.c.b16 %v4643, %v4636
    %v5134 = vpack.c.b16 %v4644, %v4637
    %v5135 = vpack.c.b16 %v4645, %v4638
    %v5136 = vpack.c.b16 %v4646, %v4639
    %v5137 = vpack.c.b16 %v4647, %v4640
    %v5138 = vpack.c.b16 %v4648, %v4641
    %v5139 = vpack.c.b16 %v4649, %v4642
    %v5140 = vpack.c.b16 %v4657, %v4650
    %v5141 = vpack.c.b16 %v4658, %v4651
    %v5142 = vpack.c.b16 %v4659, %v4652
    %v5143 = vpack.c.b16 %v4660, %v4653
    %v5144 = vpack.c.b16 %v4661, %v4654
    %v5145 = vpack.c.b16 %v4662, %v4655
    %v5146 = vpack.c.b16 %v4663, %v4656
    %v5147 = vpack.c.b16 %v4671, %v4664
    %v5148 = vpack.c.b16 %v4672, %v4665
    %v5149 = vpack.c.b16 %v4673, %v4666
    %v5150 = vpack.c.b16 %v4674, %v4667
    %v5151 = vpack.c.b16 %v4675, %v4668
    %v5152 = vpack.c.b16 %v4676, %v4669
    %v5153 = vpack.c.b16 %v4677, %v4670
    %v5154 = vpack.c.b16 %v4685, %v4678
    %v5155 = vpack.c.b16 %v4686, %v4679
    %v5156 = vpack.c.b16 %v4687, %v4680
    %v5157 = vpack.c.b16 %v4688, %v4681
    %v5158 = vpack.c.b16 %v4689, %v4682
    %v5159 = vpack.c.b16 %v4690, %v4683
    %v5160 = vpack.c.b16 %v4691, %v4684
    %v5161 = vpack.c.b16 %v4699, %v4692
    %v5162 = vpack.c.b16 %v4700, %v4693
    %v5163 = vpack.c.b16 %v4701, %v4694
    %v5164 = vpack.c.b16 %v4702, %v4695
    %v5165 = vpack.c.b16 %v4703, %v4696
    %v5166 = vpack.c.b16 %v4704, %v4697
    %v5167 = vpack.c.b16 %v4705, %v4698
    %v5168 = vpack.c.b16 %v4713, %v4706
    %v5169 = vpack.c.b16 %v4714, %v4707
    %v5170 = vpack.c.b16 %v4715, %v4708
    %v5171 = vpack.c.b16 %v4716, %v4709
    %v5172 = vpack.c.b16 %v4717, %v4710
    %v5173 = vpack.c.b16 %v4718, %v4711
    %v5174 = vpack.c.b16 %v4719, %v4712
    %v5175 = vpack.c.b16 %v4727, %v4720
    %v5176 = vpack.c.b16 %v4728, %v4721
    %v5177 = vpack.c.b16 %v4729, %v4722
    %v5178 = vpack.c.b16 %v4730, %v4723
    %v5179 = vpack.c.b16 %v4731, %v4724
    %v5180 = vpack.c.b16 %v4732, %v4725
    %v5181 = vpack.c.b16 %v4733, %v4726
    %5630 = vmatprep.subr.bf16.mxu0 %v4735
    %5631 = vmatpush1.bf16.msra.mxu0 %v4734
    %5632 = vmatprep.subr.bf16.mxu0 %v4742
    %5633 = vmatpush1.bf16.msra.mxu0 %v4741
    %5634 = vmatprep.subr.bf16.mxu0 %v4749
    %5635 = vmatpush1.bf16.msra.mxu0 %v4748
    %5636 = vmatprep.subr.bf16.mxu0 %v4756
    %5637 = vmatpush1.bf16.msra.mxu0 %v4755
    %5638 = vmatprep.subr.bf16.mxu0 %v4763
    %5639 = vmatpush1.bf16.msra.mxu0 %v4762
    %5640 = vmatprep.subr.bf16.mxu0 %v4770
    %5641 = vmatpush1.bf16.msra.mxu0 %v4769
    %5642 = vmatprep.subr.bf16.mxu0 %v4777
    %5643 = vmatpush1.bf16.msra.mxu0 %v4776
    %5644 = vmatprep.subr.bf16.mxu0 %v4784
    %5645 = vmatpush1.bf16.msra.mxu0 %v4783
    %5646 = vmatprep.subr.bf16.mxu0 %v4791
    %5647 = vmatpush1.bf16.msra.mxu0 %v4790
    %5648 = vmatprep.subr.bf16.mxu0 %v4798
    %5649 = vmatpush1.bf16.msra.mxu0 %v4797
    %5650 = vmatprep.subr.bf16.mxu0 %v4805
    %5651 = vmatpush1.bf16.msra.mxu0 %v4804
    %5652 = vmatprep.subr.bf16.mxu0 %v4812
    %5653 = vmatpush1.bf16.msra.mxu0 %v4811
    %5654 = vmatprep.subr.bf16.mxu0 %v4819
    %5655 = vmatpush1.bf16.msra.mxu0 %v4818
    %5656 = vmatprep.subr.bf16.mxu0 %v4826
    %5657 = vmatpush1.bf16.msra.mxu0 %v4825
    %5658 = vmatprep.subr.bf16.mxu0 %v4833
    %5659 = vmatpush1.bf16.msra.mxu0 %v4832
    %5660 = vmatprep.subr.bf16.mxu0 %v4840
    %5661 = vmatpush1.bf16.msra.mxu0 %v4839
    %5662 = vmatprep.mubr.bf16.mxu0 %v2770
    %5663 = vmatmul.mubr.bf16.gmra.mrb[0].mxu0 %v2769
    %v5664 = vpop.f32.mrb[0].mxu0
    %v5665 = vadd.f32 %v3294, %v5664
    %v5666 = vpop.f32.mrb[0].mxu0
    %v5667 = vadd.f32 %v3298, %v5666
    %v5668 = vpop.f32.mrb[0].mxu0
    %v5669 = vadd.f32 %v3294, %v5668
    %v5670 = vpop.f32.mrb[0].mxu0
    %v5671 = vadd.f32 %v3298, %v5670
    %5672 = vdwg.mxu0
    %5673 = vmatprep.subr.bf16.mxu0 %v4847
    %5674 = vmatpush1.bf16.msra.mxu0 %v4846
    %5675 = vmatprep.subr.bf16.mxu0 %v4854
    %5676 = vmatpush1.bf16.msra.mxu0 %v4853
    %5677 = vmatprep.subr.bf16.mxu0 %v4861
    %5678 = vmatpush1.bf16.msra.mxu0 %v4860
    %5679 = vmatprep.subr.bf16.mxu0 %v4868
    %5680 = vmatpush1.bf16.msra.mxu0 %v4867
    %5681 = vmatprep.subr.bf16.mxu0 %v4875
    %5682 = vmatpush1.bf16.msra.mxu0 %v4874
    %5683 = vmatprep.subr.bf16.mxu0 %v4882
    %5684 = vmatpush1.bf16.msra.mxu0 %v4881
    %5685 = vmatprep.subr.bf16.mxu0 %v4889
    %5686 = vmatpush1.bf16.msra.mxu0 %v4888
    %5687 = vmatprep.subr.bf16.mxu0 %v4896
    %5688 = vmatpush1.bf16.msra.mxu0 %v4895
    %5689 = vmatprep.subr.bf16.mxu0 %v4903
    %5690 = vmatpush1.bf16.msra.mxu0 %v4902
    %5691 = vmatprep.subr.bf16.mxu0 %v4910
    %5692 = vmatpush1.bf16.msra.mxu0 %v4909
    %5693 = vmatprep.subr.bf16.mxu0 %v4917
    %5694 = vmatpush1.bf16.msra.mxu0 %v4916
    %5695 = vmatprep.subr.bf16.mxu0 %v4924
    %5696 = vmatpush1.bf16.msra.mxu0 %v4923
    %5697 = vmatprep.subr.bf16.mxu0 %v4931
    %5698 = vmatpush1.bf16.msra.mxu0 %v4930
    %5699 = vmatprep.subr.bf16.mxu0 %v4938
    %5700 = vmatpush1.bf16.msra.mxu0 %v4937
    %5701 = vmatprep.subr.bf16.mxu0 %v4945
    %5702 = vmatpush1.bf16.msra.mxu0 %v4944
    %5703 = vmatprep.subr.bf16.mxu0 %v4952
    %5704 = vmatpush1.bf16.msra.mxu0 %v4951
    %5705 = vmatprep.mubr.bf16.mxu0 %v2772
    %5706 = vmatmul.mubr.bf16.gmra.mrb[0].mxu0 %v2771
    %v5707 = vpop.f32.mrb[0].mxu0
    %v5708 = vadd.f32 %v5665, %v5707
    %v5709 = vpop.f32.mrb[0].mxu0
    %v5710 = vadd.f32 %v5667, %v5709
    %v5711 = vpop.f32.mrb[0].mxu0
    %v5712 = vadd.f32 %v5669, %v5711
    %v5713 = vpop.f32.mrb[0].mxu0
    %v5714 = vadd.f32 %v5671, %v5713
    %5715 = vdwg.mxu0
    %5716 = vmatprep.subr.bf16.mxu0 %v4959
    %5717 = vmatpush1.bf16.msra.mxu0 %v4958
    %5718 = vmatprep.subr.bf16.mxu0 %v4966
    %5719 = vmatpush1.bf16.msra.mxu0 %v4965
    %5720 = vmatprep.subr.bf16.mxu0 %v4973
    %5721 = vmatpush1.bf16.msra.mxu0 %v4972
    %5722 = vmatprep.subr.bf16.mxu0 %v4980
    %5723 = vmatpush1.bf16.msra.mxu0 %v4979
    %5724 = vmatprep.subr.bf16.mxu0 %v4987
    %5725 = vmatpush1.bf16.msra.mxu0 %v4986
    %5726 = vmatprep.subr.bf16.mxu0 %v4994
    %5727 = vmatpush1.bf16.msra.mxu0 %v4993
    %5728 = vmatprep.subr.bf16.mxu0 %v5001
    %5729 = vmatpush1.bf16.msra.mxu0 %v5000
    %5730 = vmatprep.subr.bf16.mxu0 %v5008
    %5731 = vmatpush1.bf16.msra.mxu0 %v5007
    %5732 = vmatprep.subr.bf16.mxu0 %v5015
    %5733 = vmatpush1.bf16.msra.mxu0 %v5014
    %5734 = vmatprep.subr.bf16.mxu0 %v5022
    %5735 = vmatpush1.bf16.msra.mxu0 %v5021
    %5736 = vmatprep.subr.bf16.mxu0 %v5029
    %5737 = vmatpush1.bf16.msra.mxu0 %v5028
    %5738 = vmatprep.subr.bf16.mxu0 %v5036
    %5739 = vmatpush1.bf16.msra.mxu0 %v5035
    %5740 = vmatprep.subr.bf16.mxu0 %v5043
    %5741 = vmatpush1.bf16.msra.mxu0 %v5042
    %5742 = vmatprep.subr.bf16.mxu0 %v5050
    %5743 = vmatpush1.bf16.msra.mxu0 %v5049
    %5744 = vmatprep.subr.bf16.mxu0 %v5057
    %5745 = vmatpush1.bf16.msra.mxu0 %v5056
    %5746 = vmatprep.subr.bf16.mxu0 %v5064
    %5747 = vmatpush1.bf16.msra.mxu0 %v5063
    %5748 = vmatprep.mubr.bf16.mxu0 %v2774
    %5749 = vmatmul.mubr.bf16.gmra.mrb[0].mxu0 %v2773
    %v5750 = vpop.f32.mrb[0].mxu0
    %v5751 = vadd.f32 %v5708, %v5750
    %v5752 = vpop.f32.mrb[0].mxu0
    %v5753 = vadd.f32 %v5710, %v5752
    %v5754 = vpop.f32.mrb[0].mxu0
    %v5755 = vadd.f32 %v5712, %v5754
    %v5756 = vpop.f32.mrb[0].mxu0
    %v5757 = vadd.f32 %v5714, %v5756
    %5758 = vdwg.mxu0
    %5759 = vmatprep.subr.bf16.mxu0 %v5071
    %5760 = vmatpush1.bf16.msra.mxu0 %v5070
    %5761 = vmatprep.subr.bf16.mxu0 %v5078
    %5762 = vmatpush1.bf16.msra.mxu0 %v5077
    %5763 = vmatprep.subr.bf16.mxu0 %v5085
    %5764 = vmatpush1.bf16.msra.mxu0 %v5084
    %5765 = vmatprep.subr.bf16.mxu0 %v5092
    %5766 = vmatpush1.bf16.msra.mxu0 %v5091
    %5767 = vmatprep.subr.bf16.mxu0 %v5099
    %5768 = vmatpush1.bf16.msra.mxu0 %v5098
    %5769 = vmatprep.subr.bf16.mxu0 %v5106
    %5770 = vmatpush1.bf16.msra.mxu0 %v5105
    %5771 = vmatprep.subr.bf16.mxu0 %v5113
    %5772 = vmatpush1.bf16.msra.mxu0 %v5112
    %5773 = vmatprep.subr.bf16.mxu0 %v5120
    %5774 = vmatpush1.bf16.msra.mxu0 %v5119
    %5775 = vmatprep.subr.bf16.mxu0 %v5127
    %5776 = vmatpush1.bf16.msra.mxu0 %v5126
    %5777 = vmatprep.subr.bf16.mxu0 %v5134
    %5778 = vmatpush1.bf16.msra.mxu0 %v5133
    %5779 = vmatprep.subr.bf16.mxu0 %v5141
    %5780 = vmatpush1.bf16.msra.mxu0 %v5140
    %5781 = vmatprep.subr.bf16.mxu0 %v5148
    %5782 = vmatpush1.bf16.msra.mxu0 %v5147
    %5783 = vmatprep.subr.bf16.mxu0 %v5155
    %5784 = vmatpush1.bf16.msra.mxu0 %v5154
    %5785 = vmatprep.subr.bf16.mxu0 %v5162
    %5786 = vmatpush1.bf16.msra.mxu0 %v5161
    %5787 = vmatprep.subr.bf16.mxu0 %v5169
    %5788 = vmatpush1.bf16.msra.mxu0 %v5168
    %5789 = vmatprep.subr.bf16.mxu0 %v5176
    %5790 = vmatpush1.bf16.msra.mxu0 %v5175
    %5791 = vmatprep.mubr.bf16.mxu0 %v2776
    %5792 = vmatmul.mubr.bf16.gmra.mrb[0].mxu0 %v2775
    %v5793 = vpop.f32.mrb[0].mxu0
    %v5794 = vadd.f32 %v5751, %v5793
    %v5795 = vpop.f32.mrb[0].mxu0
    %v5796 = vadd.f32 %v5753, %v5795
    %v5797 = vpop.f32.mrb[0].mxu0
    %v5798 = vadd.f32 %v5755, %v5797
    %v5799 = vpop.f32.mrb[0].mxu0
    %v5800 = vadd.f32 %v5757, %v5799
    %5801 = vdwg.mxu0
    %5802 = vmatprep.subr.bf16.mxu0 %v4737
    %5803 = vmatpush1.bf16.msra.mxu0 %v4736
    %5804 = vmatprep.subr.bf16.mxu0 %v4744
    %5805 = vmatpush1.bf16.msra.mxu0 %v4743
    %5806 = vmatprep.subr.bf16.mxu0 %v4751
    %5807 = vmatpush1.bf16.msra.mxu0 %v4750
    %5808 = vmatprep.subr.bf16.mxu0 %v4758
    %5809 = vmatpush1.bf16.msra.mxu0 %v4757
    %5810 = vmatprep.subr.bf16.mxu0 %v4765
    %5811 = vmatpush1.bf16.msra.mxu0 %v4764
    %5812 = vmatprep.subr.bf16.mxu0 %v4772
    %5813 = vmatpush1.bf16.msra.mxu0 %v4771
    %5814 = vmatprep.subr.bf16.mxu0 %v4779
    %5815 = vmatpush1.bf16.msra.mxu0 %v4778
    %5816 = vmatprep.subr.bf16.mxu0 %v4786
    %5817 = vmatpush1.bf16.msra.mxu0 %v4785
    %5818 = vmatprep.subr.bf16.mxu0 %v4793
    %5819 = vmatpush1.bf16.msra.mxu0 %v4792
    %5820 = vmatprep.subr.bf16.mxu0 %v4800
    %5821 = vmatpush1.bf16.msra.mxu0 %v4799
    %5822 = vmatprep.subr.bf16.mxu0 %v4807
    %5823 = vmatpush1.bf16.msra.mxu0 %v4806
    %5824 = vmatprep.subr.bf16.mxu0 %v4814
    %5825 = vmatpush1.bf16.msra.mxu0 %v4813
    %5826 = vmatprep.subr.bf16.mxu0 %v4821
    %5827 = vmatpush1.bf16.msra.mxu0 %v4820
    %5828 = vmatprep.subr.bf16.mxu0 %v4828
    %5829 = vmatpush1.bf16.msra.mxu0 %v4827
    %5830 = vmatprep.subr.bf16.mxu0 %v4835
    %5831 = vmatpush1.bf16.msra.mxu0 %v4834
    %5832 = vmatprep.subr.bf16.mxu0 %v4842
    %5833 = vmatpush1.bf16.msra.mxu0 %v4841
    %5834 = vmatprep.mubr.bf16.mxu0 %v2770
    %5835 = vmatmul.mubr.bf16.gmra.mrb[0].mxu0 %v2769
    %v5836 = vpop.f32.mrb[0].mxu0
    %v5837 = vadd.f32 %v3302, %v5836
    %v5838 = vpop.f32.mrb[0].mxu0
    %v5839 = vadd.f32 %v3306, %v5838
    %v5840 = vpop.f32.mrb[0].mxu0
    %v5841 = vadd.f32 %v3302, %v5840
    %v5842 = vpop.f32.mrb[0].mxu0
    %v5843 = vadd.f32 %v3306, %v5842
    %5844 = vdwg.mxu0
    %5845 = vmatprep.subr.bf16.mxu0 %v4849
    %5846 = vmatpush1.bf16.msra.mxu0 %v4848
    %5847 = vmatprep.subr.bf16.mxu0 %v4856
    %5848 = vmatpush1.bf16.msra.mxu0 %v4855
    %5849 = vmatprep.subr.bf16.mxu0 %v4863
    %5850 = vmatpush1.bf16.msra.mxu0 %v4862
    %5851 = vmatprep.subr.bf16.mxu0 %v4870
    %5852 = vmatpush1.bf16.msra.mxu0 %v4869
    %5853 = vmatprep.subr.bf16.mxu0 %v4877
    %5854 = vmatpush1.bf16.msra.mxu0 %v4876
    %5855 = vmatprep.subr.bf16.mxu0 %v4884
    %5856 = vmatpush1.bf16.msra.mxu0 %v4883
    %5857 = vmatprep.subr.bf16.mxu0 %v4891
    %5858 = vmatpush1.bf16.msra.mxu0 %v4890
    %5859 = vmatprep.subr.bf16.mxu0 %v4898
    %5860 = vmatpush1.bf16.msra.mxu0 %v4897
    %5861 = vmatprep.subr.bf16.mxu0 %v4905
    %5862 = vmatpush1.bf16.msra.mxu0 %v4904
    %5863 = vmatprep.subr.bf16.mxu0 %v4912
    %5864 = vmatpush1.bf16.msra.mxu0 %v4911
    %5865 = vmatprep.subr.bf16.mxu0 %v4919
    %5866 = vmatpush1.bf16.msra.mxu0 %v4918
    %5867 = vmatprep.subr.bf16.mxu0 %v4926
    %5868 = vmatpush1.bf16.msra.mxu0 %v4925
    %5869 = vmatprep.subr.bf16.mxu0 %v4933
    %5870 = vmatpush1.bf16.msra.mxu0 %v4932
    %5871 = vmatprep.subr.bf16.mxu0 %v4940
    %5872 = vmatpush1.bf16.msra.mxu0 %v4939
    %5873 = vmatprep.subr.bf16.mxu0 %v4947
    %5874 = vmatpush1.bf16.msra.mxu0 %v4946
    %5875 = vmatprep.subr.bf16.mxu0 %v4954
    %5876 = vmatpush1.bf16.msra.mxu0 %v4953
    %5877 = vmatprep.mubr.bf16.mxu0 %v2772
    %5878 = vmatmul.mubr.bf16.gmra.mrb[0].mxu0 %v2771
    %v5879 = vpop.f32.mrb[0].mxu0
    %v5880 = vadd.f32 %v5837, %v5879
    %v5881 = vpop.f32.mrb[0].mxu0
    %v5882 = vadd.f32 %v5839, %v5881
    %v5883 = vpop.f32.mrb[0].mxu0
    %v5884 = vadd.f32 %v5841, %v5883
    %v5885 = vpop.f32.mrb[0].mxu0
    %v5886 = vadd.f32 %v5843, %v5885
    %5887 = vdwg.mxu0
    %5888 = vmatprep.subr.bf16.mxu0 %v4961
    %5889 = vmatpush1.bf16.msra.mxu0 %v4960
    %5890 = vmatprep.subr.bf16.mxu0 %v4968
    %5891 = vmatpush1.bf16.msra.mxu0 %v4967
    %5892 = vmatprep.subr.bf16.mxu0 %v4975
    %5893 = vmatpush1.bf16.msra.mxu0 %v4974
    %5894 = vmatprep.subr.bf16.mxu0 %v4982
    %5895 = vmatpush1.bf16.msra.mxu0 %v4981
    %5896 = vmatprep.subr.bf16.mxu0 %v4989
    %5897 = vmatpush1.bf16.msra.mxu0 %v4988
    %5898 = vmatprep.subr.bf16.mxu0 %v4996
    %5899 = vmatpush1.bf16.msra.mxu0 %v4995
    %5900 = vmatprep.subr.bf16.mxu0 %v5003
    %5901 = vmatpush1.bf16.msra.mxu0 %v5002
    %5902 = vmatprep.subr.bf16.mxu0 %v5010
    %5903 = vmatpush1.bf16.msra.mxu0 %v5009
    %5904 = vmatprep.subr.bf16.mxu0 %v5017
    %5905 = vmatpush1.bf16.msra.mxu0 %v5016
    %5906 = vmatprep.subr.bf16.mxu0 %v5024
    %5907 = vmatpush1.bf16.msra.mxu0 %v5023
    %5908 = vmatprep.subr.bf16.mxu0 %v5031
    %5909 = vmatpush1.bf16.msra.mxu0 %v5030
    %5910 = vmatprep.subr.bf16.mxu0 %v5038
    %5911 = vmatpush1.bf16.msra.mxu0 %v5037
    %5912 = vmatprep.subr.bf16.mxu0 %v5045
    %5913 = vmatpush1.bf16.msra.mxu0 %v5044
    %5914 = vmatprep.subr.bf16.mxu0 %v5052
    %5915 = vmatpush1.bf16.msra.mxu0 %v5051
    %5916 = vmatprep.subr.bf16.mxu0 %v5059
    %5917 = vmatpush1.bf16.msra.mxu0 %v5058
    %5918 = vmatprep.subr.bf16.mxu0 %v5066
    %5919 = vmatpush1.bf16.msra.mxu0 %v5065
    %5920 = vmatprep.mubr.bf16.mxu0 %v2774
    %5921 = vmatmul.mubr.bf16.gmra.mrb[0].mxu0 %v2773
    %v5922 = vpop.f32.mrb[0].mxu0
    %v5923 = vadd.f32 %v5880, %v5922
    %v5924 = vpop.f32.mrb[0].mxu0
    %v5925 = vadd.f32 %v5882, %v5924
    %v5926 = vpop.f32.mrb[0].mxu0
    %v5927 = vadd.f32 %v5884, %v5926
    %v5928 = vpop.f32.mrb[0].mxu0
    %v5929 = vadd.f32 %v5886, %v5928
    %5930 = vdwg.mxu0
    %5931 = vmatprep.subr.bf16.mxu0 %v5073
    %5932 = vmatpush1.bf16.msra.mxu0 %v5072
    %5933 = vmatprep.subr.bf16.mxu0 %v5080
    %5934 = vmatpush1.bf16.msra.mxu0 %v5079
    %5935 = vmatprep.subr.bf16.mxu0 %v5087
    %5936 = vmatpush1.bf16.msra.mxu0 %v5086
    %5937 = vmatprep.subr.bf16.mxu0 %v5094
    %5938 = vmatpush1.bf16.msra.mxu0 %v5093
    %5939 = vmatprep.subr.bf16.mxu0 %v5101
    %5940 = vmatpush1.bf16.msra.mxu0 %v5100
    %5941 = vmatprep.subr.bf16.mxu0 %v5108
    %5942 = vmatpush1.bf16.msra.mxu0 %v5107
    %5943 = vmatprep.subr.bf16.mxu0 %v5115
    %5944 = vmatpush1.bf16.msra.mxu0 %v5114
    %5945 = vmatprep.subr.bf16.mxu0 %v5122
    %5946 = vmatpush1.bf16.msra.mxu0 %v5121
    %5947 = vmatprep.subr.bf16.mxu0 %v5129
    %5948 = vmatpush1.bf16.msra.mxu0 %v5128
    %5949 = vmatprep.subr.bf16.mxu0 %v5136
    %5950 = vmatpush1.bf16.msra.mxu0 %v5135
    %5951 = vmatprep.subr.bf16.mxu0 %v5143
    %5952 = vmatpush1.bf16.msra.mxu0 %v5142
    %5953 = vmatprep.subr.bf16.mxu0 %v5150
    %5954 = vmatpush1.bf16.msra.mxu0 %v5149
    %5955 = vmatprep.subr.bf16.mxu0 %v5157
    %5956 = vmatpush1.bf16.msra.mxu0 %v5156
    %5957 = vmatprep.subr.bf16.mxu0 %v5164
    %5958 = vmatpush1.bf16.msra.mxu0 %v5163
    %5959 = vmatprep.subr.bf16.mxu0 %v5171
    %5960 = vmatpush1.bf16.msra.mxu0 %v5170
    %5961 = vmatprep.subr.bf16.mxu0 %v5178
    %5962 = vmatpush1.bf16.msra.mxu0 %v5177
    %5963 = vmatprep.mubr.bf16.mxu0 %v2776
    %5964 = vmatmul.mubr.bf16.gmra.mrb[0].mxu0 %v2775
    %v5965 = vpop.f32.mrb[0].mxu0
    %v5966 = vadd.f32 %v5923, %v5965
    %v5967 = vpop.f32.mrb[0].mxu0
    %v5968 = vadd.f32 %v5925, %v5967
    %v5969 = vpop.f32.mrb[0].mxu0
    %v5970 = vadd.f32 %v5927, %v5969
    %v5971 = vpop.f32.mrb[0].mxu0
    %v5972 = vadd.f32 %v5929, %v5971
    %5973 = vdwg.mxu0
    %5974 = vmatprep.subr.bf16.mxu0 %v4739
    %5975 = vmatpush1.bf16.msra.mxu0 %v4738
    %5976 = vmatprep.subr.bf16.mxu0 %v4746
    %5977 = vmatpush1.bf16.msra.mxu0 %v4745
    %5978 = vmatprep.subr.bf16.mxu0 %v4753
    %5979 = vmatpush1.bf16.msra.mxu0 %v4752
    %5980 = vmatprep.subr.bf16.mxu0 %v4760
    %5981 = vmatpush1.bf16.msra.mxu0 %v4759
    %5982 = vmatprep.subr.bf16.mxu0 %v4767
    %5983 = vmatpush1.bf16.msra.mxu0 %v4766
    %5984 = vmatprep.subr.bf16.mxu0 %v4774
    %5985 = vmatpush1.bf16.msra.mxu0 %v4773
    %5986 = vmatprep.subr.bf16.mxu0 %v4781
    %5987 = vmatpush1.bf16.msra.mxu0 %v4780
    %5988 = vmatprep.subr.bf16.mxu0 %v4788
    %5989 = vmatpush1.bf16.msra.mxu0 %v4787
    %5990 = vmatprep.subr.bf16.mxu0 %v4795
    %5991 = vmatpush1.bf16.msra.mxu0 %v4794
    %5992 = vmatprep.subr.bf16.mxu0 %v4802
    %5993 = vmatpush1.bf16.msra.mxu0 %v4801
    %5994 = vmatprep.subr.bf16.mxu0 %v4809
    %5995 = vmatpush1.bf16.msra.mxu0 %v4808
    %5996 = vmatprep.subr.bf16.mxu0 %v4816
    %5997 = vmatpush1.bf16.msra.mxu0 %v4815
    %5998 = vmatprep.subr.bf16.mxu0 %v4823
    %5999 = vmatpush1.bf16.msra.mxu0 %v4822
    %6000 = vmatprep.subr.bf16.mxu0 %v4830
    %6001 = vmatpush1.bf16.msra.mxu0 %v4829
    %6002 = vmatprep.subr.bf16.mxu0 %v4837
    %6003 = vmatpush1.bf16.msra.mxu0 %v4836
    %6004 = vmatprep.subr.bf16.mxu0 %v4844
    %6005 = vmatpush1.bf16.msra.mxu0 %v4843
    %6006 = vmatprep.mubr.bf16.mxu0 %v2770
    %6007 = vmatmul.mubr.bf16.gmra.mrb[0].mxu0 %v2769
    %v6008 = vpop.f32.mrb[0].mxu0
    %v6009 = vadd.f32 %v3310, %v6008
    %v6010 = vpop.f32.mrb[0].mxu0
    %v6011 = vadd.f32 %v3314, %v6010
    %v6012 = vpop.f32.mrb[0].mxu0
    %v6013 = vadd.f32 %v3310, %v6012
    %v6014 = vpop.f32.mrb[0].mxu0
    %v6015 = vadd.f32 %v3314, %v6014
    %6016 = vdwg.mxu0
    %6017 = vmatprep.subr.bf16.mxu0 %v4851
    %6018 = vmatpush1.bf16.msra.mxu0 %v4850
    %6019 = vmatprep.subr.bf16.mxu0 %v4858
    %6020 = vmatpush1.bf16.msra.mxu0 %v4857
    %6021 = vmatprep.subr.bf16.mxu0 %v4865
    %6022 = vmatpush1.bf16.msra.mxu0 %v4864
    %6023 = vmatprep.subr.bf16.mxu0 %v4872
    %6024 = vmatpush1.bf16.msra.mxu0 %v4871
    %6025 = vmatprep.subr.bf16.mxu0 %v4879
    %6026 = vmatpush1.bf16.msra.mxu0 %v4878
    %6027 = vmatprep.subr.bf16.mxu0 %v4886
    %6028 = vmatpush1.bf16.msra.mxu0 %v4885
    %6029 = vmatprep.subr.bf16.mxu0 %v4893
    %6030 = vmatpush1.bf16.msra.mxu0 %v4892
    %6031 = vmatprep.subr.bf16.mxu0 %v4900
    %6032 = vmatpush1.bf16.msra.mxu0 %v4899
    %6033 = vmatprep.subr.bf16.mxu0 %v4907
    %6034 = vmatpush1.bf16.msra.mxu0 %v4906
    %6035 = vmatprep.subr.bf16.mxu0 %v4914
    %6036 = vmatpush1.bf16.msra.mxu0 %v4913
    %6037 = vmatprep.subr.bf16.mxu0 %v4921
    %6038 = vmatpush1.bf16.msra.mxu0 %v4920
    %6039 = vmatprep.subr.bf16.mxu0 %v4928
    %6040 = vmatpush1.bf16.msra.mxu0 %v4927
    %6041 = vmatprep.subr.bf16.mxu0 %v4935
    %6042 = vmatpush1.bf16.msra.mxu0 %v4934
    %6043 = vmatprep.subr.bf16.mxu0 %v4942
    %6044 = vmatpush1.bf16.msra.mxu0 %v4941
    %6045 = vmatprep.subr.bf16.mxu0 %v4949
    %6046 = vmatpush1.bf16.msra.mxu0 %v4948
    %6047 = vmatprep.subr.bf16.mxu0 %v4956
    %6048 = vmatpush1.bf16.msra.mxu0 %v4955
    %6049 = vmatprep.mubr.bf16.mxu0 %v2772
    %6050 = vmatmul.mubr.bf16.gmra.mrb[0].mxu0 %v2771
    %v6051 = vpop.f32.mrb[0].mxu0
    %v6052 = vadd.f32 %v6009, %v6051
    %v6053 = vpop.f32.mrb[0].mxu0
    %v6054 = vadd.f32 %v6011, %v6053
    %v6055 = vpop.f32.mrb[0].mxu0
    %v6056 = vadd.f32 %v6013, %v6055
    %v6057 = vpop.f32.mrb[0].mxu0
    %v6058 = vadd.f32 %v6015, %v6057
    %6059 = vdwg.mxu0
    %6060 = vmatprep.subr.bf16.mxu0 %v4963
    %6061 = vmatpush1.bf16.msra.mxu0 %v4962
    %6062 = vmatprep.subr.bf16.mxu0 %v4970
    %6063 = vmatpush1.bf16.msra.mxu0 %v4969
    %6064 = vmatprep.subr.bf16.mxu0 %v4977
    %6065 = vmatpush1.bf16.msra.mxu0 %v4976
    %6066 = vmatprep.subr.bf16.mxu0 %v4984
    %6067 = vmatpush1.bf16.msra.mxu0 %v4983
    %6068 = vmatprep.subr.bf16.mxu0 %v4991
    %6069 = vmatpush1.bf16.msra.mxu0 %v4990
    %6070 = vmatprep.subr.bf16.mxu0 %v4998
    %6071 = vmatpush1.bf16.msra.mxu0 %v4997
    %6072 = vmatprep.subr.bf16.mxu0 %v5005
    %6073 = vmatpush1.bf16.msra.mxu0 %v5004
    %6074 = vmatprep.subr.bf16.mxu0 %v5012
    %6075 = vmatpush1.bf16.msra.mxu0 %v5011
    %6076 = vmatprep.subr.bf16.mxu0 %v5019
    %6077 = vmatpush1.bf16.msra.mxu0 %v5018
    %6078 = vmatprep.subr.bf16.mxu0 %v5026
    %6079 = vmatpush1.bf16.msra.mxu0 %v5025
    %6080 = vmatprep.subr.bf16.mxu0 %v5033
    %6081 = vmatpush1.bf16.msra.mxu0 %v5032
    %6082 = vmatprep.subr.bf16.mxu0 %v5040
    %6083 = vmatpush1.bf16.msra.mxu0 %v5039
    %6084 = vmatprep.subr.bf16.mxu0 %v5047
    %6085 = vmatpush1.bf16.msra.mxu0 %v5046
    %6086 = vmatprep.subr.bf16.mxu0 %v5054
    %6087 = vmatpush1.bf16.msra.mxu0 %v5053
    %6088 = vmatprep.subr.bf16.mxu0 %v5061
    %6089 = vmatpush1.bf16.msra.mxu0 %v5060
    %6090 = vmatprep.subr.bf16.mxu0 %v5068
    %6091 = vmatpush1.bf16.msra.mxu0 %v5067
    %6092 = vmatprep.mubr.bf16.mxu0 %v2774
    %6093 = vmatmul.mubr.bf16.gmra.mrb[0].mxu0 %v2773
    %v6094 = vpop.f32.mrb[0].mxu0
    %v6095 = vadd.f32 %v6052, %v6094
    %v6096 = vpop.f32.mrb[0].mxu0
    %v6097 = vadd.f32 %v6054, %v6096
    %v6098 = vpop.f32.mrb[0].mxu0
    %v6099 = vadd.f32 %v6056, %v6098
    %v6100 = vpop.f32.mrb[0].mxu0
    %v6101 = vadd.f32 %v6058, %v6100
    %6102 = vdwg.mxu0
    %6103 = vmatprep.subr.bf16.mxu0 %v5075
    %6104 = vmatpush1.bf16.msra.mxu0 %v5074
    %6105 = vmatprep.subr.bf16.mxu0 %v5082
    %6106 = vmatpush1.bf16.msra.mxu0 %v5081
    %6107 = vmatprep.subr.bf16.mxu0 %v5089
    %6108 = vmatpush1.bf16.msra.mxu0 %v5088
    %6109 = vmatprep.subr.bf16.mxu0 %v5096
    %6110 = vmatpush1.bf16.msra.mxu0 %v5095
    %6111 = vmatprep.subr.bf16.mxu0 %v5103
    %6112 = vmatpush1.bf16.msra.mxu0 %v5102
    %6113 = vmatprep.subr.bf16.mxu0 %v5110
    %6114 = vmatpush1.bf16.msra.mxu0 %v5109
    %6115 = vmatprep.subr.bf16.mxu0 %v5117
    %6116 = vmatpush1.bf16.msra.mxu0 %v5116
    %6117 = vmatprep.subr.bf16.mxu0 %v5124
    %6118 = vmatpush1.bf16.msra.mxu0 %v5123
    %6119 = vmatprep.subr.bf16.mxu0 %v5131
    %6120 = vmatpush1.bf16.msra.mxu0 %v5130
    %6121 = vmatprep.subr.bf16.mxu0 %v5138
    %6122 = vmatpush1.bf16.msra.mxu0 %v5137
    %6123 = vmatprep.subr.bf16.mxu0 %v5145
    %6124 = vmatpush1.bf16.msra.mxu0 %v5144
    %6125 = vmatprep.subr.bf16.mxu0 %v5152
    %6126 = vmatpush1.bf16.msra.mxu0 %v5151
    %6127 = vmatprep.subr.bf16.mxu0 %v5159
    %6128 = vmatpush1.bf16.msra.mxu0 %v5158
    %6129 = vmatprep.subr.bf16.mxu0 %v5166
    %6130 = vmatpush1.bf16.msra.mxu0 %v5165
    %6131 = vmatprep.subr.bf16.mxu0 %v5173
    %6132 = vmatpush1.bf16.msra.mxu0 %v5172
    %6133 = vmatprep.subr.bf16.mxu0 %v5180
    %6134 = vmatpush1.bf16.msra.mxu0 %v5179
    %6135 = vmatprep.mubr.bf16.mxu0 %v2776
    %6136 = vmatmul.mubr.bf16.gmra.mrb[0].mxu0 %v2775
    %v6137 = vpop.f32.mrb[0].mxu0
    %v6138 = vadd.f32 %v6095, %v6137
    %v6139 = vpop.f32.mrb[0].mxu0
    %v6140 = vadd.f32 %v6097, %v6139
    %v6141 = vpop.f32.mrb[0].mxu0
    %v6142 = vadd.f32 %v6099, %v6141
    %v6143 = vpop.f32.mrb[0].mxu0
    %v6144 = vadd.f32 %v6101, %v6143
    %6145 = vdwg.mxu0
    %6146 = vmatprep.subr.bf16.mxu0 0
    %6147 = vmatpush1.bf16.msra.mxu0 %v4740
    %6148 = vmatprep.subr.bf16.mxu0 0
    %6149 = vmatpush1.bf16.msra.mxu0 %v4747
    %6150 = vmatprep.subr.bf16.mxu0 0
    %6151 = vmatpush1.bf16.msra.mxu0 %v4754
    %6152 = vmatprep.subr.bf16.mxu0 0
    %6153 = vmatpush1.bf16.msra.mxu0 %v4761
    %6154 = vmatprep.subr.bf16.mxu0 0
    %6155 = vmatpush1.bf16.msra.mxu0 %v4768
    %6156 = vmatprep.subr.bf16.mxu0 0
    %6157 = vmatpush1.bf16.msra.mxu0 %v4775
    %6158 = vmatprep.subr.bf16.mxu0 0
    %6159 = vmatpush1.bf16.msra.mxu0 %v4782
    %6160 = vmatprep.subr.bf16.mxu0 0
    %6161 = vmatpush1.bf16.msra.mxu0 %v4789
    %6162 = vmatprep.subr.bf16.mxu0 0
    %6163 = vmatpush1.bf16.msra.mxu0 %v4796
    %6164 = vmatprep.subr.bf16.mxu0 0
    %6165 = vmatpush1.bf16.msra.mxu0 %v4803
    %6166 = vmatprep.subr.bf16.mxu0 0
    %6167 = vmatpush1.bf16.msra.mxu0 %v4810
    %6168 = vmatprep.subr.bf16.mxu0 0
    %6169 = vmatpush1.bf16.msra.mxu0 %v4817
    %6170 = vmatprep.subr.bf16.mxu0 0
    %6171 = vmatpush1.bf16.msra.mxu0 %v4824
    %6172 = vmatprep.subr.bf16.mxu0 0
    %6173 = vmatpush1.bf16.msra.mxu0 %v4831
    %6174 = vmatprep.subr.bf16.mxu0 0
    %6175 = vmatpush1.bf16.msra.mxu0 %v4838
    %6176 = vmatprep.subr.bf16.mxu0 0
    %6177 = vmatpush1.bf16.msra.mxu0 %v4845
    %6178 = vmatprep.mubr.bf16.mxu0 %v2770
    %6179 = vmatmul.mubr.bf16.gmra.mrb[0].mxu0 %v2769
    %v6180 = vpop.f32.mrb[0].mxu0
    %v6181 = vadd.f32 %v3318, %v6180
    %v6182 = vpop.f32.mrb[0].mxu0
    %v6183 = vpop.f32.mrb[0].mxu0
    %v6184 = vadd.f32 %v3318, %v6183
    %v6185 = vpop.f32.mrb[0].mxu0
    %6186 = vdwg.mxu0
    %6187 = vmatprep.subr.bf16.mxu0 0
    %6188 = vmatpush1.bf16.msra.mxu0 %v4852
    %6189 = vmatprep.subr.bf16.mxu0 0
    %6190 = vmatpush1.bf16.msra.mxu0 %v4859
    %6191 = vmatprep.subr.bf16.mxu0 0
    %6192 = vmatpush1.bf16.msra.mxu0 %v4866
    %6193 = vmatprep.subr.bf16.mxu0 0
    %6194 = vmatpush1.bf16.msra.mxu0 %v4873
    %6195 = vmatprep.subr.bf16.mxu0 0
    %6196 = vmatpush1.bf16.msra.mxu0 %v4880
    %6197 = vmatprep.subr.bf16.mxu0 0
    %6198 = vmatpush1.bf16.msra.mxu0 %v4887
    %6199 = vmatprep.subr.bf16.mxu0 0
    %6200 = vmatpush1.bf16.msra.mxu0 %v4894
    %6201 = vmatprep.subr.bf16.mxu0 0
    %6202 = vmatpush1.bf16.msra.mxu0 %v4901
    %6203 = vmatprep.subr.bf16.mxu0 0
    %6204 = vmatpush1.bf16.msra.mxu0 %v4908
    %6205 = vmatprep.subr.bf16.mxu0 0
    %6206 = vmatpush1.bf16.msra.mxu0 %v4915
    %6207 = vmatprep.subr.bf16.mxu0 0
    %6208 = vmatpush1.bf16.msra.mxu0 %v4922
    %6209 = vmatprep.subr.bf16.mxu0 0
    %6210 = vmatpush1.bf16.msra.mxu0 %v4929
    %6211 = vmatprep.subr.bf16.mxu0 0
    %6212 = vmatpush1.bf16.msra.mxu0 %v4936
    %6213 = vmatprep.subr.bf16.mxu0 0
    %6214 = vmatpush1.bf16.msra.mxu0 %v4943
    %6215 = vmatprep.subr.bf16.mxu0 0
    %6216 = vmatpush1.bf16.msra.mxu0 %v4950
    %6217 = vmatprep.subr.bf16.mxu0 0
    %6218 = vmatpush1.bf16.msra.mxu0 %v4957
    %6219 = vmatprep.mubr.bf16.mxu0 %v2772
    %6220 = vmatmul.mubr.bf16.gmra.mrb[0].mxu0 %v2771
    %v6221 = vpop.f32.mrb[0].mxu0
    %v6222 = vadd.f32 %v6181, %v6221
    %v6223 = vpop.f32.mrb[0].mxu0
    %v6224 = vpop.f32.mrb[0].mxu0
    %v6225 = vadd.f32 %v6184, %v6224
    %v6226 = vpop.f32.mrb[0].mxu0
    %6227 = vdwg.mxu0
    %6228 = vmatprep.subr.bf16.mxu0 0
    %6229 = vmatpush1.bf16.msra.mxu0 %v4964
    %6230 = vmatprep.subr.bf16.mxu0 0
    %6231 = vmatpush1.bf16.msra.mxu0 %v4971
    %6232 = vmatprep.subr.bf16.mxu0 0
    %6233 = vmatpush1.bf16.msra.mxu0 %v4978
    %6234 = vmatprep.subr.bf16.mxu0 0
    %6235 = vmatpush1.bf16.msra.mxu0 %v4985
    %6236 = vmatprep.subr.bf16.mxu0 0
    %6237 = vmatpush1.bf16.msra.mxu0 %v4992
    %6238 = vmatprep.subr.bf16.mxu0 0
    %6239 = vmatpush1.bf16.msra.mxu0 %v4999
    %6240 = vmatprep.subr.bf16.mxu0 0
    %6241 = vmatpush1.bf16.msra.mxu0 %v5006
    %6242 = vmatprep.subr.bf16.mxu0 0
    %6243 = vmatpush1.bf16.msra.mxu0 %v5013
    %6244 = vmatprep.subr.bf16.mxu0 0
    %6245 = vmatpush1.bf16.msra.mxu0 %v5020
    %6246 = vmatprep.subr.bf16.mxu0 0
    %6247 = vmatpush1.bf16.msra.mxu0 %v5027
    %6248 = vmatprep.subr.bf16.mxu0 0
    %6249 = vmatpush1.bf16.msra.mxu0 %v5034
    %6250 = vmatprep.subr.bf16.mxu0 0
    %6251 = vmatpush1.bf16.msra.mxu0 %v5041
    %6252 = vmatprep.subr.bf16.mxu0 0
    %6253 = vmatpush1.bf16.msra.mxu0 %v5048
    %6254 = vmatprep.subr.bf16.mxu0 0
    %6255 = vmatpush1.bf16.msra.mxu0 %v5055
    %6256 = vmatprep.subr.bf16.mxu0 0
    %6257 = vmatpush1.bf16.msra.mxu0 %v5062
    %6258 = vmatprep.subr.bf16.mxu0 0
    %6259 = vmatpush1.bf16.msra.mxu0 %v5069
    %6260 = vmatprep.mubr.bf16.mxu0 %v2774
    %6261 = vmatmul.mubr.bf16.gmra.mrb[0].mxu0 %v2773
    %v6262 = vpop.f32.mrb[0].mxu0
    %v6263 = vadd.f32 %v6222, %v6262
    %v6264 = vpop.f32.mrb[0].mxu0
    %v6265 = vpop.f32.mrb[0].mxu0
    %v6266 = vadd.f32 %v6225, %v6265
    %v6267 = vpop.f32.mrb[0].mxu0
    %6268 = vdwg.mxu0
    %6269 = vmatprep.subr.bf16.mxu0 0
    %6270 = vmatpush1.bf16.msra.mxu0 %v5076
    %6271 = vmatprep.subr.bf16.mxu0 0
    %6272 = vmatpush1.bf16.msra.mxu0 %v5083
    %6273 = vmatprep.subr.bf16.mxu0 0
    %6274 = vmatpush1.bf16.msra.mxu0 %v5090
    %6275 = vmatprep.subr.bf16.mxu0 0
    %6276 = vmatpush1.bf16.msra.mxu0 %v5097
    %6277 = vmatprep.subr.bf16.mxu0 0
    %6278 = vmatpush1.bf16.msra.mxu0 %v5104
    %6279 = vmatprep.subr.bf16.mxu0 0
    %6280 = vmatpush1.bf16.msra.mxu0 %v5111
    %6281 = vmatprep.subr.bf16.mxu0 0
    %6282 = vmatpush1.bf16.msra.mxu0 %v5118
    %6283 = vmatprep.subr.bf16.mxu0 0
    %6284 = vmatpush1.bf16.msra.mxu0 %v5125
    %6285 = vmatprep.subr.bf16.mxu0 0
    %6286 = vmatpush1.bf16.msra.mxu0 %v5132
    %6287 = vmatprep.subr.bf16.mxu0 0
    %6288 = vmatpush1.bf16.msra.mxu0 %v5139
    %6289 = vmatprep.subr.bf16.mxu0 0
    %6290 = vmatpush1.bf16.msra.mxu0 %v5146
    %6291 = vmatprep.subr.bf16.mxu0 0
    %6292 = vmatpush1.bf16.msra.mxu0 %v5153
    %6293 = vmatprep.subr.bf16.mxu0 0
    %6294 = vmatpush1.bf16.msra.mxu0 %v5160
    %6295 = vmatprep.subr.bf16.mxu0 0
    %6296 = vmatpush1.bf16.msra.mxu0 %v5167
    %6297 = vmatprep.subr.bf16.mxu0 0
    %6298 = vmatpush1.bf16.msra.mxu0 %v5174
    %6299 = vmatprep.subr.bf16.mxu0 0
    %6300 = vmatpush1.bf16.msra.mxu0 %v5181
    %6301 = vmatprep.mubr.bf16.mxu0 %v2776
    %6302 = vmatmul.mubr.bf16.gmra.mrb[0].mxu0 %v2775
    %v6303 = vpop.f32.mrb[0].mxu0
    %v6304 = vadd.f32 %v6263, %v6303
    %v6305 = vpop.f32.mrb[0].mxu0
    %v6306 = vpop.f32.mrb[0].mxu0
    %v6307 = vadd.f32 %v6266, %v6306
    %v6308 = vpop.f32.mrb[0].mxu0
    %6309 = vdwg.mxu0
    %v6310 = vtanh.pop %v5794
    %v6311 = vtanh.pop %v5796
    %v6312 = vtanh.pop %v5966
    %v6313 = vtanh.pop %v5968
    %v6314 = vtanh.pop %v6138
    %v6315 = vtanh.pop %v6140
    %v6316 = vtanh.pop %v6304
    %v6317 = vtanh.pop %v5798
    %v6318 = vtanh.pop %v5800
    %v6319 = vtanh.pop %v5970
    %v6320 = vtanh.pop %v5972
    %v6321 = vtanh.pop %v6142
    %v6322 = vtanh.pop %v6144
    %v6323 = vtanh.pop %v6307
    %v6324 = vpack.c.bf16 %v6317, %v6310
    %v6325 = vpack.c.bf16 %v6318, %v6311
    %v6326 = vpack.c.bf16 %v6319, %v6312
    %v6327 = vpack.c.bf16 %v6320, %v6313
    %v6328 = vpack.c.bf16 %v6321, %v6314
    %v6329 = vpack.c.bf16 %v6322, %v6315
    %v6330 = vpack.c.bf16 %v6323, %v6316
    %v6338 = vunpack.c.l.b16 %v6324
    %v6339 = vunpack.c.l.b16 %v6325
    %v6340 = vunpack.c.l.b16 %v6326
    %v6341 = vunpack.c.l.b16 %v6327
    %v6342 = vunpack.c.l.b16 %v6328
    %v6343 = vunpack.c.l.b16 %v6329
    %v6344 = vunpack.c.l.b16 %v6330
    %v6345 = vunpack.c.h.b16 %v6324
    %v6346 = vunpack.c.h.b16 %v6325
    %v6347 = vunpack.c.h.b16 %v6326
    %v6348 = vunpack.c.h.b16 %v6327
    %v6349 = vunpack.c.h.b16 %v6328
    %v6350 = vunpack.c.h.b16 %v6329
    %v6351 = vunpack.c.h.b16 %v6330
    %v6352 = vpack.c.b16 %v6339, %v6338
    %v6353 = vpack.c.b16 %v6341, %v6340
    %v6354 = vpack.c.b16 %v6343, %v6342
    %v6355 = vpack.c.b16 %v6344, %v6344
    %v6356 = vpack.c.b16 %v6346, %v6345
    %v6357 = vpack.c.b16 %v6348, %v6347
    %v6358 = vpack.c.b16 %v6350, %v6349
    %v6359 = vpack.c.b16 %v6351, %v6351
    %6368 = vst [vmem:[%s9] sm:$0xff] %v6352
    %6369 = vst [vmem:[%s9 + $0x8] sm:$0xff] %v6353
    %6370 = vst [vmem:[%s9 + $0x10] sm:$0xff] %v6354
    %6371 = vst [vmem:[%s9 + $0x18] sm:$0xf] %v6355
    %6372 = vst [vmem:[%s9 + $0x1c] sm:$0xff] %v6356
    %6373 = vst [vmem:[%s9 + $0x24] sm:$0xff] %v6357
    %6374 = vst [vmem:[%s9 + $0x2c] sm:$0xff] %v6358
    %6375 = vst [vmem:[%s9 + $0x34] sm:$0xf] %v6359
    // Predicated region
    $region70: #{generator_forward.1} parent=1 // pred_check
      _
    $region71: #{generator_forward.1} parent=1 // pred_check_branch
      %6377 = sbr.rel (0) target = $region73
    $region72: #{generator_forward.1} parent=1 // pred_region
      _
    $region73: #{generator_forward.1} parent=1 // pred_fallthru
      _
    // Predicated region
    $region74: #{generator_forward.1} parent=1 // pred_check
      _
    $region75: #{generator_forward.1} parent=1 // pred_check_branch
      %6379 = sbr.rel (0) target = $region77
    $region76: #{generator_forward.1} parent=1 // pred_region
      _
    $region77: #{generator_forward.1} parent=1 // pred_fallthru
      _
    %6380 = vsyncpa [#allocation3], 1
    %6381 = vsyncpa [#allocation5], 1
    %6382 = vsyncpa [#allocation8], 1
    %6383 = vsyncpa [#allocation11], 1
    %6384 = vsyncpa [#allocation14], 1

</llo_original>
